<compile_context>
chip_gen: v5e
topology: v5e:2x2
jax: 0.10.0
libtpu: 0.0.40
codegen_flags: <defaults>
</compile_context>

<pallas_src>
import functools

import jax
import jax.numpy as jnp
from jax.experimental import pallas as pl
from jax.experimental.pallas import tpu as pltpu


def _round_up(x, m):
    return (x + m - 1) // m * m


# --------------------------------------------------------------------------
# Kernel
# --------------------------------------------------------------------------
def _vae_fused_kernel(
    x_ref, eps_ref,
    w_e0, b_e0, w_e1, b_e1,
    w_mulv, b_mulv,          # fused mu/logvar head, lane-padded to 2*npad
    w_z, b_z,                # fc1 folded into dec_0, rows padded to npad
    w_d1, b_d1,
    xr_ref, mu_ref, lv_ref,
):
    npad = mu_ref.shape[-1]                      # lane-padded n_topic (128)

    x = x_ref[...].astype(jnp.bfloat16)          # (tb, bow_dim)
    eps = eps_ref[...]                           # (tb, npad) f32

    # ---- encoder ----
    h = jnp.dot(x, w_e0[...], preferred_element_type=jnp.float32) + b_e0[...]
    h = jnp.maximum(h, 0.0).astype(jnp.bfloat16)
    h = jnp.dot(h, w_e1[...], preferred_element_type=jnp.float32) + b_e1[...]
    h = jnp.maximum(h, 0.0).astype(jnp.bfloat16)

    # ---- fused mu / log_var head (single matmul, slice at lane boundary) ----
    mulv = jnp.dot(h, w_mulv[...], preferred_element_type=jnp.float32) + b_mulv[...]
    mu = mulv[:, :npad]
    lv = mulv[:, npad:]

    # ---- reparameterize ----
    z = mu + eps * jnp.exp(lv * 0.5)

    # ---- fc1 + dec_0 (folded offline) + relu ----
    hd = jnp.dot(z.astype(jnp.bfloat16), w_z[...],
                 preferred_element_type=jnp.float32) + b_z[...]
    hd = jnp.maximum(hd, 0.0).astype(jnp.bfloat16)

    # ---- final decoder layer ----
    xr = jnp.dot(hd, w_d1[...], preferred_element_type=jnp.float32) + b_d1[...]

    xr_ref[...] = xr
    mu_ref[...] = mu
    lv_ref[...] = lv


# --------------------------------------------------------------------------
# Wrapper
# --------------------------------------------------------------------------
def vae_pallas_call(x, eps_pad, pp):
    """x: (B, bow_dim) f32; eps_pad: (B, npad) f32; pp: preprocessed params."""
    B, bow_dim = x.shape
    npad = pp["w_z"].shape[0]

    # batch tiling: single step at small B; tiles of 256 rows for large B.
    tile_b = min(_round_up(B, 8), 256)
    Bp = _round_up(B, tile_b)
    if Bp != B:
        x = jnp.pad(x, ((0, Bp - B), (0, 0)))
        eps_pad = jnp.pad(eps_pad, ((0, Bp - B), (0, 0)))
    grid = (Bp // tile_b,)

    def row_spec(cols):
        return pl.BlockSpec((tile_b, cols), lambda i: (i, 0))

    def full_spec(arr):
        return pl.BlockSpec(arr.shape, lambda i: (0, 0))

    weights = [
        pp["w_e0"], pp["b_e0"], pp["w_e1"], pp["b_e1"],
        pp["w_mulv"], pp["b_mulv"], pp["w_z"], pp["b_z"],
        pp["w_d1"], pp["b_d1"],
    ]

    xr, mu, lv = pl.pallas_call(
        _vae_fused_kernel,
        out_shape=(
            jax.ShapeDtypeStruct((Bp, bow_dim), jnp.float32),  # x_reconst
            jax.ShapeDtypeStruct((Bp, npad), jnp.float32),     # mu  (padded)
            jax.ShapeDtypeStruct((Bp, npad), jnp.float32),     # lv  (padded)
        ),
        grid=grid,
        in_specs=[row_spec(bow_dim), row_spec(npad)]
        + [full_spec(w) for w in weights],
        out_specs=(row_spec(bow_dim), row_spec(npad), row_spec(npad)),
        compiler_params=pltpu.CompilerParams(
            dimension_semantics=("parallel",),
            vmem_limit_bytes=32 << 20,   # <= v7x 64 MiB physical; plenty here
        ),
    )(x, eps_pad, *weights)
    return xr, mu, lv


def vae_apply(x, eps, pp, *, n_topic):
    """Pad eps to the lane-padded latent width, run kernel, slice outputs."""
    B = x.shape[0]
    npad = pp["w_z"].shape[0]
    eps_pad = jnp.zeros((B, npad), jnp.float32).at[:, :n_topic].set(eps)
    xr, mu, lv = vae_pallas_call(x, eps_pad, pp)
    return xr[:B], mu[:B, :n_topic], lv[:B, :n_topic]


# --------------------------------------------------------------------------
# Parameter handling
# --------------------------------------------------------------------------
def init_params(key, bow_dim, n_topic):
    """Deterministic init. Weights stored as (in, out); bias as (1, out). f32."""
    dims = [
        ("e0", bow_dim, 1024),
        ("e1", 1024, 512),
        ("mu", 512, n_topic),
        ("lv", 512, n_topic),
        ("fc1", n_topic, n_topic),
        ("d0", n_topic, 512),
        ("d1", 512, bow_dim),
    ]
    params = {}
    for name, fan_in, fan_out in dims:
        key, kw, kb = jax.random.split(key, 3)
        bound = 1.0 / jnp.sqrt(jnp.float32(fan_in))
        params[f"w_{name}"] = jax.random.uniform(
            kw, (fan_in, fan_out), jnp.float32, -bound, bound
        )
        params[f"b_{name}"] = jax.random.uniform(
            kb, (1, fan_out), jnp.float32, -bound, bound
        )
    return params


def preprocess_params(params, bow_dim, n_topic):
    """Offline: fuse mu/lv head, fold fc1 into dec_0, lane-pad, cast to bf16."""
    f32, bf16 = jnp.float32, jnp.bfloat16
    npad = _round_up(n_topic, 128)
    hid = params["w_mu"].shape[0]                 # 512

    # fused, lane-padded mu/logvar head
    w_mulv = jnp.zeros((hid, 2 * npad), f32)
    w_mulv = w_mulv.at[:, :n_topic].set(params["w_mu"])
    w_mulv = w_mulv.at[:, npad:npad + n_topic].set(params["w_lv"])
    b_mulv = jnp.zeros((1, 2 * npad), f32)
    b_mulv = b_mulv.at[:, :n_topic].set(params["b_mu"])
    b_mulv = b_mulv.at[:, npad:npad + n_topic].set(params["b_lv"])

    # fold fc1 into dec_0 (theta never output, no nonlinearity in between)
    w_z = params["w_fc1"] @ params["w_d0"]                       # (n_topic, 512)
    b_z = params["b_fc1"] @ params["w_d0"] + params["b_d0"]      # (1, 512)
    w_z_pad = jnp.zeros((npad, w_z.shape[1]), f32).at[:n_topic, :].set(w_z)

    return dict(
        w_e0=params["w_e0"].astype(bf16), b_e0=params["b_e0"],
        w_e1=params["w_e1"].astype(bf16), b_e1=params["b_e1"],
        w_mulv=w_mulv.astype(bf16), b_mulv=b_mulv,
        w_z=w_z_pad.astype(bf16), b_z=b_z,
        w_d1=params["w_d1"].astype(bf16), b_d1=params["b_d1"],
    )


# --------------------------------------------------------------------------
# References
# --------------------------------------------------------------------------
def vae_forward_pp_ref(x, eps, pp, n_topic):
    """Pure-JAX reference using the SAME preprocessed (bf16/fused) params."""
    f32, bf16 = jnp.float32, jnp.bfloat16
    npad = pp["w_z"].shape[0]
    eps_pad = jnp.zeros((x.shape[0], npad), f32).at[:, :n_topic].set(eps)

    h = jnp.dot(x.astype(bf16), pp["w_e0"], preferred_element_type=f32) + pp["b_e0"]
    h = jnp.maximum(h, 0.0).astype(bf16)
    h = jnp.dot(h, pp["w_e1"], preferred_element_type=f32) + pp["b_e1"]
    h = jnp.maximum(h, 0.0).astype(bf16)
    mulv = jnp.dot(h, pp["w_mulv"], preferred_element_type=f32) + pp["b_mulv"]
    mu, lv = mulv[:, :npad], mulv[:, npad:]
    z = mu + eps_pad * jnp.exp(lv * 0.5)
    hd = jnp.dot(z.astype(bf16), pp["w_z"], preferred_element_type=f32) + pp["b_z"]
    hd = jnp.maximum(hd, 0.0).astype(bf16)
    xr = jnp.dot(hd, pp["w_d1"], preferred_element_type=f32) + pp["b_d1"]
    return xr, mu[:, :n_topic], lv[:, :n_topic]


def vae_forward_ref(x, eps, p):
    """Full-precision reference matching the original PyTorch semantics."""
    h = jax.nn.relu(x @ p["w_e0"] + p["b_e0"])
    h = jax.nn.relu(h @ p["w_e1"] + p["b_e1"])
    mu = h @ p["w_mu"] + p["b_mu"]
    lv = h @ p["w_lv"] + p["b_lv"]
    z = mu + eps * jnp.exp(lv * 0.5)
    theta = z @ p["w_fc1"] + p["b_fc1"]
    hd = jax.nn.relu(theta @ p["w_d0"] + p["b_d0"])
    xr = hd @ p["w_d1"] + p["b_d1"]
    return xr, mu, lv


# --------------------------------------------------------------------------
# Main
# --------------------------------------------------------------------------
if __name__ == "__main__":
    B = 8
    BOW_DIM = 256
    N_TOPIC = 20

    key = jax.random.PRNGKey(0)
    k_params, k_x, k_eps = jax.random.split(key, 3)

    params = init_params(k_params, BOW_DIM, N_TOPIC)
    pp = preprocess_params(params, BOW_DIM, N_TOPIC)

    # bag-of-words style non-negative input; eps is the reparameterization noise
    # (torch.randn_like inside the module -> passed explicitly here).
    x = jax.random.uniform(k_x, (B, BOW_DIM), jnp.float32, 0.0, 3.0)
    eps = jax.random.normal(k_eps, (B, N_TOPIC), jnp.float32)

    fwd = jax.jit(functools.partial(vae_apply, n_topic=N_TOPIC))
    x_reconst, mu, log_var = fwd(x, eps, pp)
    jax.block_until_ready((x_reconst, mu, log_var))

    # strict check: identical math (bf16 weights, fused/folded heads) in plain JAX
    xr_pp, mu_pp, lv_pp = vae_forward_pp_ref(x, eps, pp, N_TOPIC)
    assert jnp.allclose(x_reconst, xr_pp, atol=1e-2, rtol=1e-2)
    assert jnp.allclose(mu, mu_pp, atol=1e-2, rtol=1e-2)
    assert jnp.allclose(log_var, lv_pp, atol=1e-2, rtol=1e-2)

    # loose semantic check against the full-precision (f32, unfused) reference
    xr_f32, mu_f32, lv_f32 = vae_forward_ref(x, eps, params)
    assert jnp.allclose(x_reconst, xr_f32, atol=1e-1, rtol=1e-1)
    assert jnp.allclose(mu, mu_f32, atol=1e-1, rtol=1e-1)
    assert jnp.allclose(log_var, lv_f32, atol=1e-1, rtol=1e-1)

    print("KERNEL_OK")
</pallas_src>

<mosaic_0001>
module attributes {stable_mosaic.version = 11 : i64} {
  func.func @_vae_fused_kernel(%arg0: i32, %arg1: memref<8x256xf32, #tpu.memory_space<vmem>>, %arg2: memref<8x128xf32, #tpu.memory_space<vmem>>, %arg3: memref<256x1024xbf16, #tpu.memory_space<vmem>>, %arg4: memref<1x1024xf32, #tpu.memory_space<vmem>>, %arg5: memref<1024x512xbf16, #tpu.memory_space<vmem>>, %arg6: memref<1x512xf32, #tpu.memory_space<vmem>>, %arg7: memref<512x256xbf16, #tpu.memory_space<vmem>>, %arg8: memref<1x256xf32, #tpu.memory_space<vmem>>, %arg9: memref<128x512xbf16, #tpu.memory_space<vmem>>, %arg10: memref<1x512xf32, #tpu.memory_space<vmem>>, %arg11: memref<512x256xbf16, #tpu.memory_space<vmem>>, %arg12: memref<1x256xf32, #tpu.memory_space<vmem>>, %arg13: memref<8x256xf32, #tpu.memory_space<vmem>>, %arg14: memref<8x128xf32, #tpu.memory_space<vmem>>, %arg15: memref<8x128xf32, #tpu.memory_space<vmem>>) attributes {dimension_semantics = [#tpu.dimension_semantics<parallel>], iteration_bounds = array<i64: 1>, scalar_prefetch = 0 : i64, scratch_operands = 0 : i64, tpu.core_type = #tpu.core_type<tc>, window_params = [{transform_indices = @transform_0, window_bounds = array<i64: 8, 256>}, {transform_indices = @transform_1, window_bounds = array<i64: 8, 128>}, {pipeline_mode = #tpu.pipeline_mode<synchronous>, transform_indices = @transform_2, window_bounds = array<i64: 256, 1024>}, {pipeline_mode = #tpu.pipeline_mode<synchronous>, transform_indices = @transform_3, window_bounds = array<i64: 1, 1024>}, {pipeline_mode = #tpu.pipeline_mode<synchronous>, transform_indices = @transform_4, window_bounds = array<i64: 1024, 512>}, {pipeline_mode = #tpu.pipeline_mode<synchronous>, transform_indices = @transform_5, window_bounds = array<i64: 1, 512>}, {pipeline_mode = #tpu.pipeline_mode<synchronous>, transform_indices = @transform_6, window_bounds = array<i64: 512, 256>}, {pipeline_mode = #tpu.pipeline_mode<synchronous>, transform_indices = @transform_7, window_bounds = array<i64: 1, 256>}, {pipeline_mode = #tpu.pipeline_mode<synchronous>, transform_indices = @transform_8, window_bounds = array<i64: 128, 512>}, {pipeline_mode = #tpu.pipeline_mode<synchronous>, transform_indices = @transform_9, window_bounds = array<i64: 1, 512>}, {pipeline_mode = #tpu.pipeline_mode<synchronous>, transform_indices = @transform_10, window_bounds = array<i64: 512, 256>}, {pipeline_mode = #tpu.pipeline_mode<synchronous>, transform_indices = @transform_11, window_bounds = array<i64: 1, 256>}, {transform_indices = @transform_12, window_bounds = array<i64: 8, 256>}, {transform_indices = @transform_13, window_bounds = array<i64: 8, 128>}, {transform_indices = @transform_14, window_bounds = array<i64: 8, 128>}]} {
    %c0 = arith.constant 0 : index
    %c0_0 = arith.constant 0 : index
    %0 = vector.load %arg1[%c0, %c0_0] : memref<8x256xf32, #tpu.memory_space<vmem>>, vector<8x256xf32>
    %1 = arith.truncf %0 : vector<8x256xf32> to vector<8x256xbf16>
    %c0_1 = arith.constant 0 : index
    %c0_2 = arith.constant 0 : index
    %2 = vector.load %arg2[%c0_1, %c0_2] : memref<8x128xf32, #tpu.memory_space<vmem>>, vector<8x128xf32>
    %c0_3 = arith.constant 0 : index
    %c0_4 = arith.constant 0 : index
    %3 = vector.load %arg3[%c0_3, %c0_4] : memref<256x1024xbf16, #tpu.memory_space<vmem>>, vector<256x1024xbf16>
    %cst = arith.constant dense<0.000000e+00> : vector<8x1024xf32>
    %4 = tpu.matmul %1, %3, %cst {dimension_numbers = #tpu.dot_dimension_numbers<[1], [0], [0], [1], [0, 0, 1, 1], [], []>} : vector<8x256xbf16>, vector<256x1024xbf16>, vector<8x1024xf32> -> vector<8x1024xf32>
    %c0_5 = arith.constant 0 : index
    %c0_6 = arith.constant 0 : index
    %5 = vector.load %arg4[%c0_5, %c0_6] : memref<1x1024xf32, #tpu.memory_space<vmem>>, vector<1x1024xf32>
    %6 = vector.broadcast %5 : vector<1x1024xf32> to vector<8x1024xf32>
    %7 = arith.addf %4, %6 : vector<8x1024xf32>
    %cst_7 = arith.constant 0.000000e+00 : f32
    %8 = vector.broadcast %cst_7 : f32 to vector<8x1024xf32>
    %9 = arith.maximumf %7, %8 : vector<8x1024xf32>
    %10 = arith.truncf %9 : vector<8x1024xf32> to vector<8x1024xbf16>
    %c0_8 = arith.constant 0 : index
    %c0_9 = arith.constant 0 : index
    %11 = vector.load %arg5[%c0_8, %c0_9] : memref<1024x512xbf16, #tpu.memory_space<vmem>>, vector<1024x512xbf16>
    %cst_10 = arith.constant dense<0.000000e+00> : vector<8x512xf32>
    %12 = tpu.matmul %10, %11, %cst_10 {dimension_numbers = #tpu.dot_dimension_numbers<[1], [0], [0], [1], [0, 0, 1, 1], [], []>} : vector<8x1024xbf16>, vector<1024x512xbf16>, vector<8x512xf32> -> vector<8x512xf32>
    %c0_11 = arith.constant 0 : index
    %c0_12 = arith.constant 0 : index
    %13 = vector.load %arg6[%c0_11, %c0_12] : memref<1x512xf32, #tpu.memory_space<vmem>>, vector<1x512xf32>
    %14 = vector.broadcast %13 : vector<1x512xf32> to vector<8x512xf32>
    %15 = arith.addf %12, %14 : vector<8x512xf32>
    %cst_13 = arith.constant 0.000000e+00 : f32
    %16 = vector.broadcast %cst_13 : f32 to vector<8x512xf32>
    %17 = arith.maximumf %15, %16 : vector<8x512xf32>
    %18 = arith.truncf %17 : vector<8x512xf32> to vector<8x512xbf16>
    %c0_14 = arith.constant 0 : index
    %c0_15 = arith.constant 0 : index
    %19 = vector.load %arg7[%c0_14, %c0_15] : memref<512x256xbf16, #tpu.memory_space<vmem>>, vector<512x256xbf16>
    %cst_16 = arith.constant dense<0.000000e+00> : vector<8x256xf32>
    %20 = tpu.matmul %18, %19, %cst_16 {dimension_numbers = #tpu.dot_dimension_numbers<[1], [0], [0], [1], [0, 0, 1, 1], [], []>} : vector<8x512xbf16>, vector<512x256xbf16>, vector<8x256xf32> -> vector<8x256xf32>
    %c0_17 = arith.constant 0 : index
    %c0_18 = arith.constant 0 : index
    %21 = vector.load %arg8[%c0_17, %c0_18] : memref<1x256xf32, #tpu.memory_space<vmem>>, vector<1x256xf32>
    %22 = vector.broadcast %21 : vector<1x256xf32> to vector<8x256xf32>
    %23 = arith.addf %20, %22 : vector<8x256xf32>
    %24 = vector.extract_strided_slice %23 {offsets = [0, 0], sizes = [8, 128], strides = [1, 1]} : vector<8x256xf32> to vector<8x128xf32>
    %25 = vector.extract_strided_slice %23 {offsets = [0, 128], sizes = [8, 128], strides = [1, 1]} : vector<8x256xf32> to vector<8x128xf32>
    %cst_19 = arith.constant 5.000000e-01 : f32
    %26 = vector.broadcast %cst_19 : f32 to vector<8x128xf32>
    %27 = arith.mulf %25, %26 : vector<8x128xf32>
    %28 = math.exp %27 : vector<8x128xf32>
    %29 = arith.mulf %2, %28 : vector<8x128xf32>
    %30 = arith.addf %24, %29 : vector<8x128xf32>
    %31 = arith.truncf %30 : vector<8x128xf32> to vector<8x128xbf16>
    %c0_20 = arith.constant 0 : index
    %c0_21 = arith.constant 0 : index
    %32 = vector.load %arg9[%c0_20, %c0_21] : memref<128x512xbf16, #tpu.memory_space<vmem>>, vector<128x512xbf16>
    %cst_22 = arith.constant dense<0.000000e+00> : vector<8x512xf32>
    %33 = tpu.matmul %31, %32, %cst_22 {dimension_numbers = #tpu.dot_dimension_numbers<[1], [0], [0], [1], [0, 0, 1, 1], [], []>} : vector<8x128xbf16>, vector<128x512xbf16>, vector<8x512xf32> -> vector<8x512xf32>
    %c0_23 = arith.constant 0 : index
    %c0_24 = arith.constant 0 : index
    %34 = vector.load %arg10[%c0_23, %c0_24] : memref<1x512xf32, #tpu.memory_space<vmem>>, vector<1x512xf32>
    %35 = vector.broadcast %34 : vector<1x512xf32> to vector<8x512xf32>
    %36 = arith.addf %33, %35 : vector<8x512xf32>
    %cst_25 = arith.constant 0.000000e+00 : f32
    %37 = vector.broadcast %cst_25 : f32 to vector<8x512xf32>
    %38 = arith.maximumf %36, %37 : vector<8x512xf32>
    %39 = arith.truncf %38 : vector<8x512xf32> to vector<8x512xbf16>
    %c0_26 = arith.constant 0 : index
    %c0_27 = arith.constant 0 : index
    %40 = vector.load %arg11[%c0_26, %c0_27] : memref<512x256xbf16, #tpu.memory_space<vmem>>, vector<512x256xbf16>
    %cst_28 = arith.constant dense<0.000000e+00> : vector<8x256xf32>
    %41 = tpu.matmul %39, %40, %cst_28 {dimension_numbers = #tpu.dot_dimension_numbers<[1], [0], [0], [1], [0, 0, 1, 1], [], []>} : vector<8x512xbf16>, vector<512x256xbf16>, vector<8x256xf32> -> vector<8x256xf32>
    %c0_29 = arith.constant 0 : index
    %c0_30 = arith.constant 0 : index
    %42 = vector.load %arg12[%c0_29, %c0_30] : memref<1x256xf32, #tpu.memory_space<vmem>>, vector<1x256xf32>
    %43 = vector.broadcast %42 : vector<1x256xf32> to vector<8x256xf32>
    %44 = arith.addf %41, %43 : vector<8x256xf32>
    %c0_31 = arith.constant 0 : index
    %c0_32 = arith.constant 0 : index
    %45 = vector.load %arg13[%c0_31, %c0_32] : memref<8x256xf32, #tpu.memory_space<vmem>>, vector<8x256xf32>
    tpu.vector_store %arg13[%c0_31, %c0_32], %44 {strides = array<i32>} : memref<8x256xf32, #tpu.memory_space<vmem>>, vector<8x256xf32>,
    %c0_33 = arith.constant 0 : index
    %c0_34 = arith.constant 0 : index
    %46 = vector.load %arg14[%c0_33, %c0_34] : memref<8x128xf32, #tpu.memory_space<vmem>>, vector<8x128xf32>
    tpu.vector_store %arg14[%c0_33, %c0_34], %24 {strides = array<i32>} : memref<8x128xf32, #tpu.memory_space<vmem>>, vector<8x128xf32>,
    %c0_35 = arith.constant 0 : index
    %c0_36 = arith.constant 0 : index
    %47 = vector.load %arg15[%c0_35, %c0_36] : memref<8x128xf32, #tpu.memory_space<vmem>>, vector<8x128xf32>
    tpu.vector_store %arg15[%c0_35, %c0_36], %25 {strides = array<i32>} : memref<8x128xf32, #tpu.memory_space<vmem>>, vector<8x128xf32>,
    return
  }
  func.func @transform_0(%arg0: i32) -> (i32, i32) {
    %c0_i32 = arith.constant 0 : i32
    %c0_i32_0 = arith.constant 0 : i32
    return %arg0, %c0_i32 : i32, i32
  }
  func.func @transform_1(%arg0: i32) -> (i32, i32) {
    %c0_i32 = arith.constant 0 : i32
    %c0_i32_0 = arith.constant 0 : i32
    return %arg0, %c0_i32 : i32, i32
  }
  func.func @transform_2(%arg0: i32) -> (i32, i32) {
    %c0_i32 = arith.constant 0 : i32
    %c0_i32_0 = arith.constant 0 : i32
    %c0_i32_1 = arith.constant 0 : i32
    return %c0_i32, %c0_i32_0 : i32, i32
  }
  func.func @transform_3(%arg0: i32) -> (i32, i32) {
    %c0_i32 = arith.constant 0 : i32
    %c0_i32_0 = arith.constant 0 : i32
    %c0_i32_1 = arith.constant 0 : i32
    return %c0_i32, %c0_i32_0 : i32, i32
  }
  func.func @transform_4(%arg0: i32) -> (i32, i32) {
    %c0_i32 = arith.constant 0 : i32
    %c0_i32_0 = arith.constant 0 : i32
    %c0_i32_1 = arith.constant 0 : i32
    return %c0_i32, %c0_i32_0 : i32, i32
  }
  func.func @transform_5(%arg0: i32) -> (i32, i32) {
    %c0_i32 = arith.constant 0 : i32
    %c0_i32_0 = arith.constant 0 : i32
    %c0_i32_1 = arith.constant 0 : i32
    return %c0_i32, %c0_i32_0 : i32, i32
  }
  func.func @transform_6(%arg0: i32) -> (i32, i32) {
    %c0_i32 = arith.constant 0 : i32
    %c0_i32_0 = arith.constant 0 : i32
    %c0_i32_1 = arith.constant 0 : i32
    return %c0_i32, %c0_i32_0 : i32, i32
  }
  func.func @transform_7(%arg0: i32) -> (i32, i32) {
    %c0_i32 = arith.constant 0 : i32
    %c0_i32_0 = arith.constant 0 : i32
    %c0_i32_1 = arith.constant 0 : i32
    return %c0_i32, %c0_i32_0 : i32, i32
  }
  func.func @transform_8(%arg0: i32) -> (i32, i32) {
    %c0_i32 = arith.constant 0 : i32
    %c0_i32_0 = arith.constant 0 : i32
    %c0_i32_1 = arith.constant 0 : i32
    return %c0_i32, %c0_i32_0 : i32, i32
  }
  func.func @transform_9(%arg0: i32) -> (i32, i32) {
    %c0_i32 = arith.constant 0 : i32
    %c0_i32_0 = arith.constant 0 : i32
    %c0_i32_1 = arith.constant 0 : i32
    return %c0_i32, %c0_i32_0 : i32, i32
  }
  func.func @transform_10(%arg0: i32) -> (i32, i32) {
    %c0_i32 = arith.constant 0 : i32
    %c0_i32_0 = arith.constant 0 : i32
    %c0_i32_1 = arith.constant 0 : i32
    return %c0_i32, %c0_i32_0 : i32, i32
  }
  func.func @transform_11(%arg0: i32) -> (i32, i32) {
    %c0_i32 = arith.constant 0 : i32
    %c0_i32_0 = arith.constant 0 : i32
    %c0_i32_1 = arith.constant 0 : i32
    return %c0_i32, %c0_i32_0 : i32, i32
  }
  func.func @transform_12(%arg0: i32) -> (i32, i32) {
    %c0_i32 = arith.constant 0 : i32
    %c0_i32_0 = arith.constant 0 : i32
    return %arg0, %c0_i32 : i32, i32
  }
  func.func @transform_13(%arg0: i32) -> (i32, i32) {
    %c0_i32 = arith.constant 0 : i32
    %c0_i32_0 = arith.constant 0 : i32
    return %arg0, %c0_i32 : i32, i32
  }
  func.func @transform_14(%arg0: i32) -> (i32, i32) {
    %c0_i32 = arith.constant 0 : i32
    %c0_i32_0 = arith.constant 0 : i32
    return %arg0, %c0_i32 : i32, i32
  }
}

</mosaic_0001>

<llo_original>
// kernel: vae_apply.1
$region0: #{vae_apply.1}
  #allocation0 [shape = 'u32[]', space=smem, size = 0x4, offset = 0x4, fixed_abs, tag = 'smem constant byte address 0x4 - core index']
  #allocation1 [shape = 'u32[72,128]{1,0:T(1,128)}', space=vmem, size = 0x9000, scoped, tag = 'internal scratch']
  %s0 = inlined_call_operand.vmem [shape: f32[8,256], index: 0, kind: input, shape index: {}]
  %s1 = inlined_call_operand.vmem [shape: f32[8,128], index: 1, kind: input, shape index: {}]
  %s2 = inlined_call_operand.hbm [shape: bf16[256,1024], index: 2, kind: input, shape index: {}]
  %s3 = inlined_call_operand.vmem [shape: f32[1,1024], index: 3, kind: input, shape index: {}]
  %s4 = inlined_call_operand.hbm [shape: bf16[1024,512], index: 4, kind: input, shape index: {}]
  %s5 = inlined_call_operand.vmem [shape: f32[1,512], index: 5, kind: input, shape index: {}]
  %s6 = inlined_call_operand.hbm [shape: bf16[512,256], index: 6, kind: input, shape index: {}]
  %s7 = inlined_call_operand.vmem [shape: f32[1,256], index: 7, kind: input, shape index: {}]
  %s8 = inlined_call_operand.hbm [shape: bf16[128,512], index: 8, kind: input, shape index: {}]
  %s9 = inlined_call_operand.vmem [shape: f32[1,512], index: 9, kind: input, shape index: {}]
  %s10 = inlined_call_operand.hbm [shape: bf16[512,256], index: 10, kind: input, shape index: {}]
  %s11 = inlined_call_operand.vmem [shape: f32[1,256], index: 11, kind: input, shape index: {}]
  %s12 = inlined_call_operand.hbm [shape: f32[8,256], index: 12, kind: output, shape index: {0}]
  %s13 = inlined_call_operand.hbm [shape: f32[8,128], index: 13, kind: output, shape index: {1}]
  %s14 = inlined_call_operand.hbm [shape: f32[8,128], index: 14, kind: output, shape index: {2}]
  %15 = xla_tuple %s12, %s13, %s14
  %s16 = sld [smem:[#allocation0]]
  $region94: #{vae_apply.1} parent=0
    _
  %s18 = ssub.s32 1, %s16
  %s19 = scalar_select 0, %s18, %s16
  $region1: #{vae_apply.1} parent=0
    #allocation2 [shape = 'u8[524288]{0}', space=vmem, size = 0x80000, scoped, tag = 'input window, operand 2, single buffered']
    #allocation3 [shape = 's32[1]{0}', space=sflag, size = 0x4, scoped, tag = 'scoped memory for vae_apply.1']
    #allocation4 [shape = 's32[1]{0}', space=sflag, size = 0x4, scoped, tag = 'scoped memory for vae_apply.1']
    #allocation5 [shape = 'u8[1048576]{0}', space=vmem, size = 0x100000, scoped, tag = 'input window, operand 4, single buffered']
    #allocation6 [shape = 's32[1]{0}', space=sflag, size = 0x4, scoped, tag = 'scoped memory for vae_apply.1']
    #allocation7 [shape = 'u8[262144]{0}', space=vmem, size = 0x40000, scoped, tag = 'input window, operand 6, single buffered']
    #allocation8 [shape = 'u8[131072]{0}', space=vmem, size = 0x20000, scoped, tag = 'input window, operand 8, single buffered']
    #allocation9 [shape = 's32[1]{0}', space=sflag, size = 0x4, scoped, tag = 'scoped memory for vae_apply.1']
    #allocation10 [shape = 'u8[262144]{0}', space=vmem, size = 0x40000, scoped, tag = 'input window, operand 10, single buffered']
    #allocation11 [shape = 'u8[8192]{0}', space=vmem, size = 0x2000, scoped, tag = 'output window, operand 0, single buffered']
    #allocation12 [shape = 'u8[4096]{0}', space=vmem, size = 0x1000, scoped, tag = 'output window, operand 1, single buffered']
    #allocation13 [shape = 's32[1]{0}', space=sflag, size = 0x4, scoped, tag = 'scoped memory for vae_apply.1']
    #allocation14 [shape = 'u8[4096]{0}', space=vmem, size = 0x1000, scoped, tag = 'output window, operand 2, single buffered']
    %20 = vsyncpa [#allocation3], 0
    %21 = vsyncpa [#allocation6], 0
    %22 = vsyncpa [#allocation9], 0
    %23 = vsyncpa [#allocation4], 0
    %24 = vsyncpa [#allocation13], 0
    // Predicated region
    $region2: #{vae_apply.1} parent=1 // pred_check
      _
    $region3: #{vae_apply.1} parent=1 // pred_check_branch
      %26 = sbr.rel (0) target = $region5
    $region4: #{vae_apply.1} parent=1 // pred_region
      _
    $region5: #{vae_apply.1} parent=1 // pred_fallthru
      _
    // Predicated region
    $region6: #{vae_apply.1} parent=1 // pred_check
      _
    $region7: #{vae_apply.1} parent=1 // pred_check_branch
      %28 = sbr.rel (0) target = $region9
    $region8: #{vae_apply.1} parent=1 // pred_region
      _
    $region9: #{vae_apply.1} parent=1 // pred_fallthru
      _
    // Predicated region
    $region10: #{vae_apply.1} parent=1 // pred_check
      _
    $region11: #{vae_apply.1} parent=1 // pred_check_branch
      %30 = sbr.rel (0) target = $region13
    $region12: #{vae_apply.1} parent=1 // pred_region
      %32 = vsyncadd [#allocation3], 0
      %s33 = sshll.u32 %s2, 4
      %s34 = int_to_ptr.hbm [resolvable:$true] %s33
      %s35 = sshll.u32 [#allocation2], 4
      %s36 = int_to_ptr.vmem [resolvable:$true] %s35
      %41 = dma.hbm_to_vmem [thread:$0]  %s34, 16384, %s36, [#allocation3], 512, 512, 32
    $region13: #{vae_apply.1} parent=1 // pred_fallthru
      _
    // Predicated region
    $region14: #{vae_apply.1} parent=1 // pred_check
      _
    $region15: #{vae_apply.1} parent=1 // pred_check_branch
      %43 = sbr.rel (0) target = $region17
    $region16: #{vae_apply.1} parent=1 // pred_region
      _
    $region17: #{vae_apply.1} parent=1 // pred_fallthru
      _
    // Predicated region
    $region18: #{vae_apply.1} parent=1 // pred_check
      _
    $region19: #{vae_apply.1} parent=1 // pred_check_branch
      %45 = sbr.rel (0) target = $region21
    $region20: #{vae_apply.1} parent=1 // pred_region
      %47 = vsyncadd [#allocation6], 0
      %s48 = sshll.u32 %s4, 4
      %s49 = int_to_ptr.hbm [resolvable:$true] %s48
      %s50 = sshll.u32 [#allocation5], 4
      %s51 = int_to_ptr.vmem [resolvable:$true] %s50
      %56 = dma.hbm_to_vmem [thread:$0]  %s49, 32768, %s51, [#allocation6], 256, 256, 16
    $region21: #{vae_apply.1} parent=1 // pred_fallthru
      _
    // Predicated region
    $region22: #{vae_apply.1} parent=1 // pred_check
      _
    $region23: #{vae_apply.1} parent=1 // pred_check_branch
      %58 = sbr.rel (0) target = $region25
    $region24: #{vae_apply.1} parent=1 // pred_region
      _
    $region25: #{vae_apply.1} parent=1 // pred_fallthru
      _
    // Predicated region
    $region26: #{vae_apply.1} parent=1 // pred_check
      _
    $region27: #{vae_apply.1} parent=1 // pred_check_branch
      %60 = sbr.rel (0) target = $region29
    $region28: #{vae_apply.1} parent=1 // pred_region
      %62 = vsyncadd [#allocation6], 0
      %s63 = sshll.u32 %s6, 4
      %s64 = int_to_ptr.hbm [resolvable:$true] %s63
      %s65 = sshll.u32 [#allocation7], 4
      %s66 = int_to_ptr.vmem [resolvable:$true] %s65
      %71 = dma.hbm_to_vmem [thread:$0]  %s64, 8192, %s66, [#allocation6], 128, 128, 8
    $region29: #{vae_apply.1} parent=1 // pred_fallthru
      _
    // Predicated region
    $region30: #{vae_apply.1} parent=1 // pred_check
      _
    $region31: #{vae_apply.1} parent=1 // pred_check_branch
      %73 = sbr.rel (0) target = $region33
    $region32: #{vae_apply.1} parent=1 // pred_region
      _
    $region33: #{vae_apply.1} parent=1 // pred_fallthru
      _
    // Predicated region
    $region34: #{vae_apply.1} parent=1 // pred_check
      _
    $region35: #{vae_apply.1} parent=1 // pred_check_branch
      %75 = sbr.rel (0) target = $region37
    $region36: #{vae_apply.1} parent=1 // pred_region
      %77 = vsyncadd [#allocation9], 0
      %s78 = sshll.u32 %s8, 4
      %s79 = int_to_ptr.hbm [resolvable:$true] %s78
      %s80 = sshll.u32 [#allocation8], 4
      %s81 = int_to_ptr.vmem [resolvable:$true] %s80
      %86 = dma.hbm_to_vmem [thread:$0]  %s79, 4096, %s81, [#allocation9], 256, 256, 16
    $region37: #{vae_apply.1} parent=1 // pred_fallthru
      _
    // Predicated region
    $region38: #{vae_apply.1} parent=1 // pred_check
      _
    $region39: #{vae_apply.1} parent=1 // pred_check_branch
      %88 = sbr.rel (0) target = $region41
    $region40: #{vae_apply.1} parent=1 // pred_region
      _
    $region41: #{vae_apply.1} parent=1 // pred_fallthru
      _
    // Predicated region
    $region42: #{vae_apply.1} parent=1 // pred_check
      _
    $region43: #{vae_apply.1} parent=1 // pred_check_branch
      %90 = sbr.rel (0) target = $region45
    $region44: #{vae_apply.1} parent=1 // pred_region
      %92 = vsyncadd [#allocation9], 0
      %s93 = sshll.u32 %s10, 4
      %s94 = int_to_ptr.hbm [resolvable:$true] %s93
      %s95 = sshll.u32 [#allocation10], 4
      %s96 = int_to_ptr.vmem [resolvable:$true] %s95
      %101 = dma.hbm_to_vmem [thread:$0]  %s94, 8192, %s96, [#allocation9], 128, 128, 8
    $region45: #{vae_apply.1} parent=1 // pred_fallthru
      _
    // Predicated region
    $region46: #{vae_apply.1} parent=1 // pred_check
      _
    $region47: #{vae_apply.1} parent=1 // pred_check_branch
      %103 = sbr.rel (0) target = $region49
    $region48: #{vae_apply.1} parent=1 // pred_region
      _
    $region49: #{vae_apply.1} parent=1 // pred_fallthru
      _
    // Predicated region
    $region50: #{vae_apply.1} parent=1 // pred_check
      _
    $region51: #{vae_apply.1} parent=1 // pred_check_branch
      %105 = sbr.rel (0) target = $region53
    $region52: #{vae_apply.1} parent=1 // pred_region
      %107 = dma.done [#allocation3], 16384
    $region53: #{vae_apply.1} parent=1 // pred_fallthru
      _
    // Predicated region
    $region54: #{vae_apply.1} parent=1 // pred_check
      _
    $region55: #{vae_apply.1} parent=1 // pred_check_branch
      %109 = sbr.rel (0) target = $region57
    $region56: #{vae_apply.1} parent=1 // pred_region
      %111 = dma.done [#allocation6], 32768
    $region57: #{vae_apply.1} parent=1 // pred_fallthru
      _
    // Predicated region
    $region58: #{vae_apply.1} parent=1 // pred_check
      _
    $region59: #{vae_apply.1} parent=1 // pred_check_branch
      %113 = sbr.rel (0) target = $region61
    $region60: #{vae_apply.1} parent=1 // pred_region
      %115 = dma.done [#allocation6], 8192
    $region61: #{vae_apply.1} parent=1 // pred_fallthru
      _
    // Predicated region
    $region62: #{vae_apply.1} parent=1 // pred_check
      _
    $region63: #{vae_apply.1} parent=1 // pred_check_branch
      %117 = sbr.rel (0) target = $region65
    $region64: #{vae_apply.1} parent=1 // pred_region
      %119 = dma.done [#allocation9], 4096
    $region65: #{vae_apply.1} parent=1 // pred_fallthru
      _
    // Predicated region
    $region66: #{vae_apply.1} parent=1 // pred_check
      _
    $region67: #{vae_apply.1} parent=1 // pred_check_branch
      %121 = sbr.rel (0) target = $region69
    $region68: #{vae_apply.1} parent=1 // pred_region
      %123 = dma.done [#allocation9], 8192
    $region69: #{vae_apply.1} parent=1 // pred_fallthru
      _
    %v124 = vld [vmem:[%s0] sm:$0xff]
    %v125 = vld [vmem:[%s0 + $0x8] sm:$0xff]
    %v126 = vpack.c.bf16 %v124, %v124
    %v127 = vpack.c.bf16 %v125, %v125
    %v128 = vld [vmem:[%s1] sm:$0xff]
    %v129 = vld [vmem:[#allocation2] sm:$0xff]
    %v130 = vld [vmem:[#allocation2 + $0x8] sm:$0xff]
    %v131 = vld [vmem:[#allocation2 + $0x10] sm:$0xff]
    %v132 = vld [vmem:[#allocation2 + $0x18] sm:$0xff]
    %v133 = vld [vmem:[#allocation2 + $0x20] sm:$0xff]
    %v134 = vld [vmem:[#allocation2 + $0x28] sm:$0xff]
    %v135 = vld [vmem:[#allocation2 + $0x30] sm:$0xff]
    %v136 = vld [vmem:[#allocation2 + $0x38] sm:$0xff]
    %v137 = vld [vmem:[#allocation2 + $0x40] sm:$0xff]
    %v138 = vld [vmem:[#allocation2 + $0x48] sm:$0xff]
    %v139 = vld [vmem:[#allocation2 + $0x50] sm:$0xff]
    %v140 = vld [vmem:[#allocation2 + $0x58] sm:$0xff]
    %v141 = vld [vmem:[#allocation2 + $0x60] sm:$0xff]
    %v142 = vld [vmem:[#allocation2 + $0x68] sm:$0xff]
    %v143 = vld [vmem:[#allocation2 + $0x70] sm:$0xff]
    %v144 = vld [vmem:[#allocation2 + $0x78] sm:$0xff]
    %v145 = vld [vmem:[#allocation2 + $0x80] sm:$0xff]
    %v146 = vld [vmem:[#allocation2 + $0x88] sm:$0xff]
    %v147 = vld [vmem:[#allocation2 + $0x90] sm:$0xff]
    %v148 = vld [vmem:[#allocation2 + $0x98] sm:$0xff]
    %v149 = vld [vmem:[#allocation2 + $0xa0] sm:$0xff]
    %v150 = vld [vmem:[#allocation2 + $0xa8] sm:$0xff]
    %v151 = vld [vmem:[#allocation2 + $0xb0] sm:$0xff]
    %v152 = vld [vmem:[#allocation2 + $0xb8] sm:$0xff]
    %v153 = vld [vmem:[#allocation2 + $0xc0] sm:$0xff]
    %v154 = vld [vmem:[#allocation2 + $0xc8] sm:$0xff]
    %v155 = vld [vmem:[#allocation2 + $0xd0] sm:$0xff]
    %v156 = vld [vmem:[#allocation2 + $0xd8] sm:$0xff]
    %v157 = vld [vmem:[#allocation2 + $0xe0] sm:$0xff]
    %v158 = vld [vmem:[#allocation2 + $0xe8] sm:$0xff]
    %v159 = vld [vmem:[#allocation2 + $0xf0] sm:$0xff]
    %v160 = vld [vmem:[#allocation2 + $0xf8] sm:$0xff]
    %v161 = vld [vmem:[#allocation2 + $0x100] sm:$0xff]
    %v162 = vld [vmem:[#allocation2 + $0x108] sm:$0xff]
    %v163 = vld [vmem:[#allocation2 + $0x110] sm:$0xff]
    %v164 = vld [vmem:[#allocation2 + $0x118] sm:$0xff]
    %v165 = vld [vmem:[#allocation2 + $0x120] sm:$0xff]
    %v166 = vld [vmem:[#allocation2 + $0x128] sm:$0xff]
    %v167 = vld [vmem:[#allocation2 + $0x130] sm:$0xff]
    %v168 = vld [vmem:[#allocation2 + $0x138] sm:$0xff]
    %v169 = vld [vmem:[#allocation2 + $0x140] sm:$0xff]
    %v170 = vld [vmem:[#allocation2 + $0x148] sm:$0xff]
    %v171 = vld [vmem:[#allocation2 + $0x150] sm:$0xff]
    %v172 = vld [vmem:[#allocation2 + $0x158] sm:$0xff]
    %v173 = vld [vmem:[#allocation2 + $0x160] sm:$0xff]
    %v174 = vld [vmem:[#allocation2 + $0x168] sm:$0xff]
    %v175 = vld [vmem:[#allocation2 + $0x170] sm:$0xff]
    %v176 = vld [vmem:[#allocation2 + $0x178] sm:$0xff]
    %v177 = vld [vmem:[#allocation2 + $0x180] sm:$0xff]
    %v178 = vld [vmem:[#allocation2 + $0x188] sm:$0xff]
    %v179 = vld [vmem:[#allocation2 + $0x190] sm:$0xff]
    %v180 = vld [vmem:[#allocation2 + $0x198] sm:$0xff]
    %v181 = vld [vmem:[#allocation2 + $0x1a0] sm:$0xff]
    %v182 = vld [vmem:[#allocation2 + $0x1a8] sm:$0xff]
    %v183 = vld [vmem:[#allocation2 + $0x1b0] sm:$0xff]
    %v184 = vld [vmem:[#allocation2 + $0x1b8] sm:$0xff]
    %v185 = vld [vmem:[#allocation2 + $0x1c0] sm:$0xff]
    %v186 = vld [vmem:[#allocation2 + $0x1c8] sm:$0xff]
    %v187 = vld [vmem:[#allocation2 + $0x1d0] sm:$0xff]
    %v188 = vld [vmem:[#allocation2 + $0x1d8] sm:$0xff]
    %v189 = vld [vmem:[#allocation2 + $0x1e0] sm:$0xff]
    %v190 = vld [vmem:[#allocation2 + $0x1e8] sm:$0xff]
    %v191 = vld [vmem:[#allocation2 + $0x1f0] sm:$0xff]
    %v192 = vld [vmem:[#allocation2 + $0x1f8] sm:$0xff]
    %v193 = vld [vmem:[#allocation2 + $0x200] sm:$0xff]
    %v194 = vld [vmem:[#allocation2 + $0x208] sm:$0xff]
    %v195 = vld [vmem:[#allocation2 + $0x210] sm:$0xff]
    %v196 = vld [vmem:[#allocation2 + $0x218] sm:$0xff]
    %v197 = vld [vmem:[#allocation2 + $0x220] sm:$0xff]
    %v198 = vld [vmem:[#allocation2 + $0x228] sm:$0xff]
    %v199 = vld [vmem:[#allocation2 + $0x230] sm:$0xff]
    %v200 = vld [vmem:[#allocation2 + $0x238] sm:$0xff]
    %v201 = vld [vmem:[#allocation2 + $0x240] sm:$0xff]
    %v202 = vld [vmem:[#allocation2 + $0x248] sm:$0xff]
    %v203 = vld [vmem:[#allocation2 + $0x250] sm:$0xff]
    %v204 = vld [vmem:[#allocation2 + $0x258] sm:$0xff]
    %v205 = vld [vmem:[#allocation2 + $0x260] sm:$0xff]
    %v206 = vld [vmem:[#allocation2 + $0x268] sm:$0xff]
    %v207 = vld [vmem:[#allocation2 + $0x270] sm:$0xff]
    %v208 = vld [vmem:[#allocation2 + $0x278] sm:$0xff]
    %v209 = vld [vmem:[#allocation2 + $0x280] sm:$0xff]
    %v210 = vld [vmem:[#allocation2 + $0x288] sm:$0xff]
    %v211 = vld [vmem:[#allocation2 + $0x290] sm:$0xff]
    %v212 = vld [vmem:[#allocation2 + $0x298] sm:$0xff]
    %v213 = vld [vmem:[#allocation2 + $0x2a0] sm:$0xff]
    %v214 = vld [vmem:[#allocation2 + $0x2a8] sm:$0xff]
    %v215 = vld [vmem:[#allocation2 + $0x2b0] sm:$0xff]
    %v216 = vld [vmem:[#allocation2 + $0x2b8] sm:$0xff]
    %v217 = vld [vmem:[#allocation2 + $0x2c0] sm:$0xff]
    %v218 = vld [vmem:[#allocation2 + $0x2c8] sm:$0xff]
    %v219 = vld [vmem:[#allocation2 + $0x2d0] sm:$0xff]
    %v220 = vld [vmem:[#allocation2 + $0x2d8] sm:$0xff]
    %v221 = vld [vmem:[#allocation2 + $0x2e0] sm:$0xff]
    %v222 = vld [vmem:[#allocation2 + $0x2e8] sm:$0xff]
    %v223 = vld [vmem:[#allocation2 + $0x2f0] sm:$0xff]
    %v224 = vld [vmem:[#allocation2 + $0x2f8] sm:$0xff]
    %v225 = vld [vmem:[#allocation2 + $0x300] sm:$0xff]
    %v226 = vld [vmem:[#allocation2 + $0x308] sm:$0xff]
    %v227 = vld [vmem:[#allocation2 + $0x310] sm:$0xff]
    %v228 = vld [vmem:[#allocation2 + $0x318] sm:$0xff]
    %v229 = vld [vmem:[#allocation2 + $0x320] sm:$0xff]
    %v230 = vld [vmem:[#allocation2 + $0x328] sm:$0xff]
    %v231 = vld [vmem:[#allocation2 + $0x330] sm:$0xff]
    %v232 = vld [vmem:[#allocation2 + $0x338] sm:$0xff]
    %v233 = vld [vmem:[#allocation2 + $0x340] sm:$0xff]
    %v234 = vld [vmem:[#allocation2 + $0x348] sm:$0xff]
    %v235 = vld [vmem:[#allocation2 + $0x350] sm:$0xff]
    %v236 = vld [vmem:[#allocation2 + $0x358] sm:$0xff]
    %v237 = vld [vmem:[#allocation2 + $0x360] sm:$0xff]
    %v238 = vld [vmem:[#allocation2 + $0x368] sm:$0xff]
    %v239 = vld [vmem:[#allocation2 + $0x370] sm:$0xff]
    %v240 = vld [vmem:[#allocation2 + $0x378] sm:$0xff]
    %v241 = vld [vmem:[#allocation2 + $0x380] sm:$0xff]
    %v242 = vld [vmem:[#allocation2 + $0x388] sm:$0xff]
    %v243 = vld [vmem:[#allocation2 + $0x390] sm:$0xff]
    %v244 = vld [vmem:[#allocation2 + $0x398] sm:$0xff]
    %v245 = vld [vmem:[#allocation2 + $0x3a0] sm:$0xff]
    %v246 = vld [vmem:[#allocation2 + $0x3a8] sm:$0xff]
    %v247 = vld [vmem:[#allocation2 + $0x3b0] sm:$0xff]
    %v248 = vld [vmem:[#allocation2 + $0x3b8] sm:$0xff]
    %v249 = vld [vmem:[#allocation2 + $0x3c0] sm:$0xff]
    %v250 = vld [vmem:[#allocation2 + $0x3c8] sm:$0xff]
    %v251 = vld [vmem:[#allocation2 + $0x3d0] sm:$0xff]
    %v252 = vld [vmem:[#allocation2 + $0x3d8] sm:$0xff]
    %v253 = vld [vmem:[#allocation2 + $0x3e0] sm:$0xff]
    %v254 = vld [vmem:[#allocation2 + $0x3e8] sm:$0xff]
    %v255 = vld [vmem:[#allocation2 + $0x3f0] sm:$0xff]
    %v256 = vld [vmem:[#allocation2 + $0x3f8] sm:$0xff]
    %v257 = vld [vmem:[%s3] sm:$0xff]
    %v259 = vperm.slane %v257, 0
    %v260 = vperm.slane %v257, 1
    %v261 = vperm.slane %v257, 2
    %v262 = vperm.slane %v257, 3
    %v263 = vperm.slane %v257, 4
    %v264 = vperm.slane %v257, 5
    %v265 = vperm.slane %v257, 6
    %v266 = vperm.slane %v257, 7
    %v403 = vunpack.c.l.b16 %v129
    %v404 = vunpack.c.h.b16 %v129
    %v405 = vunpack.c.l.b16 %v130
    %v406 = vunpack.c.h.b16 %v130
    %v407 = vunpack.c.l.b16 %v131
    %v408 = vunpack.c.h.b16 %v131
    %v409 = vunpack.c.l.b16 %v132
    %v410 = vunpack.c.h.b16 %v132
    %v411 = vunpack.c.l.b16 %v133
    %v412 = vunpack.c.h.b16 %v133
    %v413 = vunpack.c.l.b16 %v134
    %v414 = vunpack.c.h.b16 %v134
    %v415 = vunpack.c.l.b16 %v135
    %v416 = vunpack.c.h.b16 %v135
    %v417 = vunpack.c.l.b16 %v136
    %v418 = vunpack.c.h.b16 %v136
    %v419 = vunpack.c.l.b16 %v137
    %v420 = vunpack.c.h.b16 %v137
    %v421 = vunpack.c.l.b16 %v138
    %v422 = vunpack.c.h.b16 %v138
    %v423 = vunpack.c.l.b16 %v139
    %v424 = vunpack.c.h.b16 %v139
    %v425 = vunpack.c.l.b16 %v140
    %v426 = vunpack.c.h.b16 %v140
    %v427 = vunpack.c.l.b16 %v141
    %v428 = vunpack.c.h.b16 %v141
    %v429 = vunpack.c.l.b16 %v142
    %v430 = vunpack.c.h.b16 %v142
    %v431 = vunpack.c.l.b16 %v143
    %v432 = vunpack.c.h.b16 %v143
    %v433 = vunpack.c.l.b16 %v144
    %v434 = vunpack.c.h.b16 %v144
    %v435 = vunpack.c.l.b16 %v145
    %v436 = vunpack.c.h.b16 %v145
    %v437 = vunpack.c.l.b16 %v146
    %v438 = vunpack.c.h.b16 %v146
    %v439 = vunpack.c.l.b16 %v147
    %v440 = vunpack.c.h.b16 %v147
    %v441 = vunpack.c.l.b16 %v148
    %v442 = vunpack.c.h.b16 %v148
    %v443 = vunpack.c.l.b16 %v149
    %v444 = vunpack.c.h.b16 %v149
    %v445 = vunpack.c.l.b16 %v150
    %v446 = vunpack.c.h.b16 %v150
    %v447 = vunpack.c.l.b16 %v151
    %v448 = vunpack.c.h.b16 %v151
    %v449 = vunpack.c.l.b16 %v152
    %v450 = vunpack.c.h.b16 %v152
    %v451 = vunpack.c.l.b16 %v153
    %v452 = vunpack.c.h.b16 %v153
    %v453 = vunpack.c.l.b16 %v154
    %v454 = vunpack.c.h.b16 %v154
    %v455 = vunpack.c.l.b16 %v155
    %v456 = vunpack.c.h.b16 %v155
    %v457 = vunpack.c.l.b16 %v156
    %v458 = vunpack.c.h.b16 %v156
    %v459 = vunpack.c.l.b16 %v157
    %v460 = vunpack.c.h.b16 %v157
    %v461 = vunpack.c.l.b16 %v158
    %v462 = vunpack.c.h.b16 %v158
    %v463 = vunpack.c.l.b16 %v159
    %v464 = vunpack.c.h.b16 %v159
    %v465 = vunpack.c.l.b16 %v160
    %v466 = vunpack.c.h.b16 %v160
    %v467 = vunpack.c.l.b16 %v161
    %v468 = vunpack.c.h.b16 %v161
    %v469 = vunpack.c.l.b16 %v162
    %v470 = vunpack.c.h.b16 %v162
    %v471 = vunpack.c.l.b16 %v163
    %v472 = vunpack.c.h.b16 %v163
    %v473 = vunpack.c.l.b16 %v164
    %v474 = vunpack.c.h.b16 %v164
    %v475 = vunpack.c.l.b16 %v165
    %v476 = vunpack.c.h.b16 %v165
    %v477 = vunpack.c.l.b16 %v166
    %v478 = vunpack.c.h.b16 %v166
    %v479 = vunpack.c.l.b16 %v167
    %v480 = vunpack.c.h.b16 %v167
    %v481 = vunpack.c.l.b16 %v168
    %v482 = vunpack.c.h.b16 %v168
    %v483 = vunpack.c.l.b16 %v169
    %v484 = vunpack.c.h.b16 %v169
    %v485 = vunpack.c.l.b16 %v170
    %v486 = vunpack.c.h.b16 %v170
    %v487 = vunpack.c.l.b16 %v171
    %v488 = vunpack.c.h.b16 %v171
    %v489 = vunpack.c.l.b16 %v172
    %v490 = vunpack.c.h.b16 %v172
    %v491 = vunpack.c.l.b16 %v173
    %v492 = vunpack.c.h.b16 %v173
    %v493 = vunpack.c.l.b16 %v174
    %v494 = vunpack.c.h.b16 %v174
    %v495 = vunpack.c.l.b16 %v175
    %v496 = vunpack.c.h.b16 %v175
    %v497 = vunpack.c.l.b16 %v176
    %v498 = vunpack.c.h.b16 %v176
    %v499 = vunpack.c.l.b16 %v177
    %v500 = vunpack.c.h.b16 %v177
    %v501 = vunpack.c.l.b16 %v178
    %v502 = vunpack.c.h.b16 %v178
    %v503 = vunpack.c.l.b16 %v179
    %v504 = vunpack.c.h.b16 %v179
    %v505 = vunpack.c.l.b16 %v180
    %v506 = vunpack.c.h.b16 %v180
    %v507 = vunpack.c.l.b16 %v181
    %v508 = vunpack.c.h.b16 %v181
    %v509 = vunpack.c.l.b16 %v182
    %v510 = vunpack.c.h.b16 %v182
    %v511 = vunpack.c.l.b16 %v183
    %v512 = vunpack.c.h.b16 %v183
    %v513 = vunpack.c.l.b16 %v184
    %v514 = vunpack.c.h.b16 %v184
    %v515 = vunpack.c.l.b16 %v185
    %v516 = vunpack.c.h.b16 %v185
    %v517 = vunpack.c.l.b16 %v186
    %v518 = vunpack.c.h.b16 %v186
    %v519 = vunpack.c.l.b16 %v187
    %v520 = vunpack.c.h.b16 %v187
    %v521 = vunpack.c.l.b16 %v188
    %v522 = vunpack.c.h.b16 %v188
    %v523 = vunpack.c.l.b16 %v189
    %v524 = vunpack.c.h.b16 %v189
    %v525 = vunpack.c.l.b16 %v190
    %v526 = vunpack.c.h.b16 %v190
    %v527 = vunpack.c.l.b16 %v191
    %v528 = vunpack.c.h.b16 %v191
    %v529 = vunpack.c.l.b16 %v192
    %v530 = vunpack.c.h.b16 %v192
    %v531 = vunpack.c.l.b16 %v193
    %v532 = vunpack.c.h.b16 %v193
    %v533 = vunpack.c.l.b16 %v194
    %v534 = vunpack.c.h.b16 %v194
    %v535 = vunpack.c.l.b16 %v195
    %v536 = vunpack.c.h.b16 %v195
    %v537 = vunpack.c.l.b16 %v196
    %v538 = vunpack.c.h.b16 %v196
    %v539 = vunpack.c.l.b16 %v197
    %v540 = vunpack.c.h.b16 %v197
    %v541 = vunpack.c.l.b16 %v198
    %v542 = vunpack.c.h.b16 %v198
    %v543 = vunpack.c.l.b16 %v199
    %v544 = vunpack.c.h.b16 %v199
    %v545 = vunpack.c.l.b16 %v200
    %v546 = vunpack.c.h.b16 %v200
    %v547 = vunpack.c.l.b16 %v201
    %v548 = vunpack.c.h.b16 %v201
    %v549 = vunpack.c.l.b16 %v202
    %v550 = vunpack.c.h.b16 %v202
    %v551 = vunpack.c.l.b16 %v203
    %v552 = vunpack.c.h.b16 %v203
    %v553 = vunpack.c.l.b16 %v204
    %v554 = vunpack.c.h.b16 %v204
    %v555 = vunpack.c.l.b16 %v205
    %v556 = vunpack.c.h.b16 %v205
    %v557 = vunpack.c.l.b16 %v206
    %v558 = vunpack.c.h.b16 %v206
    %v559 = vunpack.c.l.b16 %v207
    %v560 = vunpack.c.h.b16 %v207
    %v561 = vunpack.c.l.b16 %v208
    %v562 = vunpack.c.h.b16 %v208
    %v563 = vunpack.c.l.b16 %v209
    %v564 = vunpack.c.h.b16 %v209
    %v565 = vunpack.c.l.b16 %v210
    %v566 = vunpack.c.h.b16 %v210
    %v567 = vunpack.c.l.b16 %v211
    %v568 = vunpack.c.h.b16 %v211
    %v569 = vunpack.c.l.b16 %v212
    %v570 = vunpack.c.h.b16 %v212
    %v571 = vunpack.c.l.b16 %v213
    %v572 = vunpack.c.h.b16 %v213
    %v573 = vunpack.c.l.b16 %v214
    %v574 = vunpack.c.h.b16 %v214
    %v575 = vunpack.c.l.b16 %v215
    %v576 = vunpack.c.h.b16 %v215
    %v577 = vunpack.c.l.b16 %v216
    %v578 = vunpack.c.h.b16 %v216
    %v579 = vunpack.c.l.b16 %v217
    %v580 = vunpack.c.h.b16 %v217
    %v581 = vunpack.c.l.b16 %v218
    %v582 = vunpack.c.h.b16 %v218
    %v583 = vunpack.c.l.b16 %v219
    %v584 = vunpack.c.h.b16 %v219
    %v585 = vunpack.c.l.b16 %v220
    %v586 = vunpack.c.h.b16 %v220
    %v587 = vunpack.c.l.b16 %v221
    %v588 = vunpack.c.h.b16 %v221
    %v589 = vunpack.c.l.b16 %v222
    %v590 = vunpack.c.h.b16 %v222
    %v591 = vunpack.c.l.b16 %v223
    %v592 = vunpack.c.h.b16 %v223
    %v593 = vunpack.c.l.b16 %v224
    %v594 = vunpack.c.h.b16 %v224
    %v595 = vunpack.c.l.b16 %v225
    %v596 = vunpack.c.h.b16 %v225
    %v597 = vunpack.c.l.b16 %v226
    %v598 = vunpack.c.h.b16 %v226
    %v599 = vunpack.c.l.b16 %v227
    %v600 = vunpack.c.h.b16 %v227
    %v601 = vunpack.c.l.b16 %v228
    %v602 = vunpack.c.h.b16 %v228
    %v603 = vunpack.c.l.b16 %v229
    %v604 = vunpack.c.h.b16 %v229
    %v605 = vunpack.c.l.b16 %v230
    %v606 = vunpack.c.h.b16 %v230
    %v607 = vunpack.c.l.b16 %v231
    %v608 = vunpack.c.h.b16 %v231
    %v609 = vunpack.c.l.b16 %v232
    %v610 = vunpack.c.h.b16 %v232
    %v611 = vunpack.c.l.b16 %v233
    %v612 = vunpack.c.h.b16 %v233
    %v613 = vunpack.c.l.b16 %v234
    %v614 = vunpack.c.h.b16 %v234
    %v615 = vunpack.c.l.b16 %v235
    %v616 = vunpack.c.h.b16 %v235
    %v617 = vunpack.c.l.b16 %v236
    %v618 = vunpack.c.h.b16 %v236
    %v619 = vunpack.c.l.b16 %v237
    %v620 = vunpack.c.h.b16 %v237
    %v621 = vunpack.c.l.b16 %v238
    %v622 = vunpack.c.h.b16 %v238
    %v623 = vunpack.c.l.b16 %v239
    %v624 = vunpack.c.h.b16 %v239
    %v625 = vunpack.c.l.b16 %v240
    %v626 = vunpack.c.h.b16 %v240
    %v627 = vunpack.c.l.b16 %v241
    %v628 = vunpack.c.h.b16 %v241
    %v629 = vunpack.c.l.b16 %v242
    %v630 = vunpack.c.h.b16 %v242
    %v631 = vunpack.c.l.b16 %v243
    %v632 = vunpack.c.h.b16 %v243
    %v633 = vunpack.c.l.b16 %v244
    %v634 = vunpack.c.h.b16 %v244
    %v635 = vunpack.c.l.b16 %v245
    %v636 = vunpack.c.h.b16 %v245
    %v637 = vunpack.c.l.b16 %v246
    %v638 = vunpack.c.h.b16 %v246
    %v639 = vunpack.c.l.b16 %v247
    %v640 = vunpack.c.h.b16 %v247
    %v641 = vunpack.c.l.b16 %v248
    %v642 = vunpack.c.h.b16 %v248
    %v643 = vunpack.c.l.b16 %v249
    %v644 = vunpack.c.h.b16 %v249
    %v645 = vunpack.c.l.b16 %v250
    %v646 = vunpack.c.h.b16 %v250
    %v647 = vunpack.c.l.b16 %v251
    %v648 = vunpack.c.h.b16 %v251
    %v649 = vunpack.c.l.b16 %v252
    %v650 = vunpack.c.h.b16 %v252
    %v651 = vunpack.c.l.b16 %v253
    %v652 = vunpack.c.h.b16 %v253
    %v653 = vunpack.c.l.b16 %v254
    %v654 = vunpack.c.h.b16 %v254
    %v655 = vunpack.c.l.b16 %v255
    %v656 = vunpack.c.h.b16 %v255
    %v657 = vunpack.c.l.b16 %v256
    %v658 = vunpack.c.h.b16 %v256
    %v659 = vpack.c.b16 %v411, %v403
    %v660 = vpack.c.b16 %v412, %v404
    %v661 = vpack.c.b16 %v413, %v405
    %v662 = vpack.c.b16 %v414, %v406
    %v663 = vpack.c.b16 %v415, %v407
    %v664 = vpack.c.b16 %v416, %v408
    %v665 = vpack.c.b16 %v417, %v409
    %v666 = vpack.c.b16 %v418, %v410
    %v667 = vpack.c.b16 %v427, %v419
    %v668 = vpack.c.b16 %v428, %v420
    %v669 = vpack.c.b16 %v429, %v421
    %v670 = vpack.c.b16 %v430, %v422
    %v671 = vpack.c.b16 %v431, %v423
    %v672 = vpack.c.b16 %v432, %v424
    %v673 = vpack.c.b16 %v433, %v425
    %v674 = vpack.c.b16 %v434, %v426
    %v675 = vpack.c.b16 %v443, %v435
    %v676 = vpack.c.b16 %v444, %v436
    %v677 = vpack.c.b16 %v445, %v437
    %v678 = vpack.c.b16 %v446, %v438
    %v679 = vpack.c.b16 %v447, %v439
    %v680 = vpack.c.b16 %v448, %v440
    %v681 = vpack.c.b16 %v449, %v441
    %v682 = vpack.c.b16 %v450, %v442
    %v683 = vpack.c.b16 %v459, %v451
    %v684 = vpack.c.b16 %v460, %v452
    %v685 = vpack.c.b16 %v461, %v453
    %v686 = vpack.c.b16 %v462, %v454
    %v687 = vpack.c.b16 %v463, %v455
    %v688 = vpack.c.b16 %v464, %v456
    %v689 = vpack.c.b16 %v465, %v457
    %v690 = vpack.c.b16 %v466, %v458
    %v691 = vpack.c.b16 %v475, %v467
    %v692 = vpack.c.b16 %v476, %v468
    %v693 = vpack.c.b16 %v477, %v469
    %v694 = vpack.c.b16 %v478, %v470
    %v695 = vpack.c.b16 %v479, %v471
    %v696 = vpack.c.b16 %v480, %v472
    %v697 = vpack.c.b16 %v481, %v473
    %v698 = vpack.c.b16 %v482, %v474
    %v699 = vpack.c.b16 %v491, %v483
    %v700 = vpack.c.b16 %v492, %v484
    %v701 = vpack.c.b16 %v493, %v485
    %v702 = vpack.c.b16 %v494, %v486
    %v703 = vpack.c.b16 %v495, %v487
    %v704 = vpack.c.b16 %v496, %v488
    %v705 = vpack.c.b16 %v497, %v489
    %v706 = vpack.c.b16 %v498, %v490
    %v707 = vpack.c.b16 %v507, %v499
    %v708 = vpack.c.b16 %v508, %v500
    %v709 = vpack.c.b16 %v509, %v501
    %v710 = vpack.c.b16 %v510, %v502
    %v711 = vpack.c.b16 %v511, %v503
    %v712 = vpack.c.b16 %v512, %v504
    %v713 = vpack.c.b16 %v513, %v505
    %v714 = vpack.c.b16 %v514, %v506
    %v715 = vpack.c.b16 %v523, %v515
    %v716 = vpack.c.b16 %v524, %v516
    %v717 = vpack.c.b16 %v525, %v517
    %v718 = vpack.c.b16 %v526, %v518
    %v719 = vpack.c.b16 %v527, %v519
    %v720 = vpack.c.b16 %v528, %v520
    %v721 = vpack.c.b16 %v529, %v521
    %v722 = vpack.c.b16 %v530, %v522
    %v723 = vpack.c.b16 %v539, %v531
    %v724 = vpack.c.b16 %v540, %v532
    %v725 = vpack.c.b16 %v541, %v533
    %v726 = vpack.c.b16 %v542, %v534
    %v727 = vpack.c.b16 %v543, %v535
    %v728 = vpack.c.b16 %v544, %v536
    %v729 = vpack.c.b16 %v545, %v537
    %v730 = vpack.c.b16 %v546, %v538
    %v731 = vpack.c.b16 %v555, %v547
    %v732 = vpack.c.b16 %v556, %v548
    %v733 = vpack.c.b16 %v557, %v549
    %v734 = vpack.c.b16 %v558, %v550
    %v735 = vpack.c.b16 %v559, %v551
    %v736 = vpack.c.b16 %v560, %v552
    %v737 = vpack.c.b16 %v561, %v553
    %v738 = vpack.c.b16 %v562, %v554
    %v739 = vpack.c.b16 %v571, %v563
    %v740 = vpack.c.b16 %v572, %v564
    %v741 = vpack.c.b16 %v573, %v565
    %v742 = vpack.c.b16 %v574, %v566
    %v743 = vpack.c.b16 %v575, %v567
    %v744 = vpack.c.b16 %v576, %v568
    %v745 = vpack.c.b16 %v577, %v569
    %v746 = vpack.c.b16 %v578, %v570
    %v747 = vpack.c.b16 %v587, %v579
    %v748 = vpack.c.b16 %v588, %v580
    %v749 = vpack.c.b16 %v589, %v581
    %v750 = vpack.c.b16 %v590, %v582
    %v751 = vpack.c.b16 %v591, %v583
    %v752 = vpack.c.b16 %v592, %v584
    %v753 = vpack.c.b16 %v593, %v585
    %v754 = vpack.c.b16 %v594, %v586
    %v755 = vpack.c.b16 %v603, %v595
    %v756 = vpack.c.b16 %v604, %v596
    %v757 = vpack.c.b16 %v605, %v597
    %v758 = vpack.c.b16 %v606, %v598
    %v759 = vpack.c.b16 %v607, %v599
    %v760 = vpack.c.b16 %v608, %v600
    %v761 = vpack.c.b16 %v609, %v601
    %v762 = vpack.c.b16 %v610, %v602
    %v763 = vpack.c.b16 %v619, %v611
    %v764 = vpack.c.b16 %v620, %v612
    %v765 = vpack.c.b16 %v621, %v613
    %v766 = vpack.c.b16 %v622, %v614
    %v767 = vpack.c.b16 %v623, %v615
    %v768 = vpack.c.b16 %v624, %v616
    %v769 = vpack.c.b16 %v625, %v617
    %v770 = vpack.c.b16 %v626, %v618
    %v771 = vpack.c.b16 %v635, %v627
    %v772 = vpack.c.b16 %v636, %v628
    %v773 = vpack.c.b16 %v637, %v629
    %v774 = vpack.c.b16 %v638, %v630
    %v775 = vpack.c.b16 %v639, %v631
    %v776 = vpack.c.b16 %v640, %v632
    %v777 = vpack.c.b16 %v641, %v633
    %v778 = vpack.c.b16 %v642, %v634
    %v779 = vpack.c.b16 %v651, %v643
    %v780 = vpack.c.b16 %v652, %v644
    %v781 = vpack.c.b16 %v653, %v645
    %v782 = vpack.c.b16 %v654, %v646
    %v783 = vpack.c.b16 %v655, %v647
    %v784 = vpack.c.b16 %v656, %v648
    %v785 = vpack.c.b16 %v657, %v649
    %v786 = vpack.c.b16 %v658, %v650
    %915 = vmatpush.bf16.msra.mxu0 %v715
    %916 = vmatpush.bf16.msra.mxu0 %v707
    %917 = vmatpush.bf16.msra.mxu0 %v699
    %918 = vmatpush.bf16.msra.mxu0 %v691
    %919 = vmatpush.bf16.msra.mxu0 %v683
    %920 = vmatpush.bf16.msra.mxu0 %v675
    %921 = vmatpush.bf16.msra.mxu0 %v667
    %922 = vmatpush.bf16.msra.mxu0 %v659
    %923 = vmatmul.bf16.gmra.mxu0 %v126
    %v924 = vpop.f32.mrf.mxu0
    %v925 = vadd.f32 %v259, %v924
    %v926 = vpop.f32.mrf.mxu0
    %927 = vdwg.mxu0
    %928 = vmatpush.bf16.msra.mxu0 %v779
    %929 = vmatpush.bf16.msra.mxu0 %v771
    %930 = vmatpush.bf16.msra.mxu0 %v763
    %931 = vmatpush.bf16.msra.mxu0 %v755
    %932 = vmatpush.bf16.msra.mxu0 %v747
    %933 = vmatpush.bf16.msra.mxu0 %v739
    %934 = vmatpush.bf16.msra.mxu0 %v731
    %935 = vmatpush.bf16.msra.mxu0 %v723
    %936 = vmatmul.bf16.gmra.mxu0 %v127
    %v937 = vpop.f32.mrf.mxu0
    %v938 = vadd.f32 %v925, %v937
    %v939 = vpop.f32.mrf.mxu0
    %940 = vdwg.mxu0
    %941 = vmatpush.bf16.msra.mxu0 %v716
    %942 = vmatpush.bf16.msra.mxu0 %v708
    %943 = vmatpush.bf16.msra.mxu0 %v700
    %944 = vmatpush.bf16.msra.mxu0 %v692
    %945 = vmatpush.bf16.msra.mxu0 %v684
    %946 = vmatpush.bf16.msra.mxu0 %v676
    %947 = vmatpush.bf16.msra.mxu0 %v668
    %948 = vmatpush.bf16.msra.mxu0 %v660
    %949 = vmatmul.bf16.gmra.mxu0 %v126
    %v950 = vpop.f32.mrf.mxu0
    %v951 = vadd.f32 %v260, %v950
    %v952 = vpop.f32.mrf.mxu0
    %953 = vdwg.mxu0
    %954 = vmatpush.bf16.msra.mxu0 %v780
    %955 = vmatpush.bf16.msra.mxu0 %v772
    %956 = vmatpush.bf16.msra.mxu0 %v764
    %957 = vmatpush.bf16.msra.mxu0 %v756
    %958 = vmatpush.bf16.msra.mxu0 %v748
    %959 = vmatpush.bf16.msra.mxu0 %v740
    %960 = vmatpush.bf16.msra.mxu0 %v732
    %961 = vmatpush.bf16.msra.mxu0 %v724
    %962 = vmatmul.bf16.gmra.mxu0 %v127
    %v963 = vpop.f32.mrf.mxu0
    %v964 = vadd.f32 %v951, %v963
    %v965 = vpop.f32.mrf.mxu0
    %966 = vdwg.mxu0
    %967 = vmatpush.bf16.msra.mxu0 %v717
    %968 = vmatpush.bf16.msra.mxu0 %v709
    %969 = vmatpush.bf16.msra.mxu0 %v701
    %970 = vmatpush.bf16.msra.mxu0 %v693
    %971 = vmatpush.bf16.msra.mxu0 %v685
    %972 = vmatpush.bf16.msra.mxu0 %v677
    %973 = vmatpush.bf16.msra.mxu0 %v669
    %974 = vmatpush.bf16.msra.mxu0 %v661
    %975 = vmatmul.bf16.gmra.mxu0 %v126
    %v976 = vpop.f32.mrf.mxu0
    %v977 = vadd.f32 %v261, %v976
    %v978 = vpop.f32.mrf.mxu0
    %979 = vdwg.mxu0
    %980 = vmatpush.bf16.msra.mxu0 %v781
    %981 = vmatpush.bf16.msra.mxu0 %v773
    %982 = vmatpush.bf16.msra.mxu0 %v765
    %983 = vmatpush.bf16.msra.mxu0 %v757
    %984 = vmatpush.bf16.msra.mxu0 %v749
    %985 = vmatpush.bf16.msra.mxu0 %v741
    %986 = vmatpush.bf16.msra.mxu0 %v733
    %987 = vmatpush.bf16.msra.mxu0 %v725
    %988 = vmatmul.bf16.gmra.mxu0 %v127
    %v989 = vpop.f32.mrf.mxu0
    %v990 = vadd.f32 %v977, %v989
    %v991 = vpop.f32.mrf.mxu0
    %992 = vdwg.mxu0
    %993 = vmatpush.bf16.msra.mxu0 %v718
    %994 = vmatpush.bf16.msra.mxu0 %v710
    %995 = vmatpush.bf16.msra.mxu0 %v702
    %996 = vmatpush.bf16.msra.mxu0 %v694
    %997 = vmatpush.bf16.msra.mxu0 %v686
    %998 = vmatpush.bf16.msra.mxu0 %v678
    %999 = vmatpush.bf16.msra.mxu0 %v670
    %1000 = vmatpush.bf16.msra.mxu0 %v662
    %1001 = vmatmul.bf16.gmra.mxu0 %v126
    %v1002 = vpop.f32.mrf.mxu0
    %v1003 = vadd.f32 %v262, %v1002
    %v1004 = vpop.f32.mrf.mxu0
    %1005 = vdwg.mxu0
    %1006 = vmatpush.bf16.msra.mxu0 %v782
    %1007 = vmatpush.bf16.msra.mxu0 %v774
    %1008 = vmatpush.bf16.msra.mxu0 %v766
    %1009 = vmatpush.bf16.msra.mxu0 %v758
    %1010 = vmatpush.bf16.msra.mxu0 %v750
    %1011 = vmatpush.bf16.msra.mxu0 %v742
    %1012 = vmatpush.bf16.msra.mxu0 %v734
    %1013 = vmatpush.bf16.msra.mxu0 %v726
    %1014 = vmatmul.bf16.gmra.mxu0 %v127
    %v1015 = vpop.f32.mrf.mxu0
    %v1016 = vadd.f32 %v1003, %v1015
    %v1017 = vpop.f32.mrf.mxu0
    %1018 = vdwg.mxu0
    %1019 = vmatpush.bf16.msra.mxu0 %v719
    %1020 = vmatpush.bf16.msra.mxu0 %v711
    %1021 = vmatpush.bf16.msra.mxu0 %v703
    %1022 = vmatpush.bf16.msra.mxu0 %v695
    %1023 = vmatpush.bf16.msra.mxu0 %v687
    %1024 = vmatpush.bf16.msra.mxu0 %v679
    %1025 = vmatpush.bf16.msra.mxu0 %v671
    %1026 = vmatpush.bf16.msra.mxu0 %v663
    %1027 = vmatmul.bf16.gmra.mxu0 %v126
    %v1028 = vpop.f32.mrf.mxu0
    %v1029 = vadd.f32 %v263, %v1028
    %v1030 = vpop.f32.mrf.mxu0
    %1031 = vdwg.mxu0
    %1032 = vmatpush.bf16.msra.mxu0 %v783
    %1033 = vmatpush.bf16.msra.mxu0 %v775
    %1034 = vmatpush.bf16.msra.mxu0 %v767
    %1035 = vmatpush.bf16.msra.mxu0 %v759
    %1036 = vmatpush.bf16.msra.mxu0 %v751
    %1037 = vmatpush.bf16.msra.mxu0 %v743
    %1038 = vmatpush.bf16.msra.mxu0 %v735
    %1039 = vmatpush.bf16.msra.mxu0 %v727
    %1040 = vmatmul.bf16.gmra.mxu0 %v127
    %v1041 = vpop.f32.mrf.mxu0
    %v1042 = vadd.f32 %v1029, %v1041
    %v1043 = vpop.f32.mrf.mxu0
    %1044 = vdwg.mxu0
    %1045 = vmatpush.bf16.msra.mxu0 %v720
    %1046 = vmatpush.bf16.msra.mxu0 %v712
    %1047 = vmatpush.bf16.msra.mxu0 %v704
    %1048 = vmatpush.bf16.msra.mxu0 %v696
    %1049 = vmatpush.bf16.msra.mxu0 %v688
    %1050 = vmatpush.bf16.msra.mxu0 %v680
    %1051 = vmatpush.bf16.msra.mxu0 %v672
    %1052 = vmatpush.bf16.msra.mxu0 %v664
    %1053 = vmatmul.bf16.gmra.mxu0 %v126
    %v1054 = vpop.f32.mrf.mxu0
    %v1055 = vadd.f32 %v264, %v1054
    %v1056 = vpop.f32.mrf.mxu0
    %1057 = vdwg.mxu0
    %1058 = vmatpush.bf16.msra.mxu0 %v784
    %1059 = vmatpush.bf16.msra.mxu0 %v776
    %1060 = vmatpush.bf16.msra.mxu0 %v768
    %1061 = vmatpush.bf16.msra.mxu0 %v760
    %1062 = vmatpush.bf16.msra.mxu0 %v752
    %1063 = vmatpush.bf16.msra.mxu0 %v744
    %1064 = vmatpush.bf16.msra.mxu0 %v736
    %1065 = vmatpush.bf16.msra.mxu0 %v728
    %1066 = vmatmul.bf16.gmra.mxu0 %v127
    %v1067 = vpop.f32.mrf.mxu0
    %v1068 = vadd.f32 %v1055, %v1067
    %v1069 = vpop.f32.mrf.mxu0
    %1070 = vdwg.mxu0
    %1071 = vmatpush.bf16.msra.mxu0 %v721
    %1072 = vmatpush.bf16.msra.mxu0 %v713
    %1073 = vmatpush.bf16.msra.mxu0 %v705
    %1074 = vmatpush.bf16.msra.mxu0 %v697
    %1075 = vmatpush.bf16.msra.mxu0 %v689
    %1076 = vmatpush.bf16.msra.mxu0 %v681
    %1077 = vmatpush.bf16.msra.mxu0 %v673
    %1078 = vmatpush.bf16.msra.mxu0 %v665
    %1079 = vmatmul.bf16.gmra.mxu0 %v126
    %v1080 = vpop.f32.mrf.mxu0
    %v1081 = vadd.f32 %v265, %v1080
    %v1082 = vpop.f32.mrf.mxu0
    %1083 = vdwg.mxu0
    %1084 = vmatpush.bf16.msra.mxu0 %v785
    %1085 = vmatpush.bf16.msra.mxu0 %v777
    %1086 = vmatpush.bf16.msra.mxu0 %v769
    %1087 = vmatpush.bf16.msra.mxu0 %v761
    %1088 = vmatpush.bf16.msra.mxu0 %v753
    %1089 = vmatpush.bf16.msra.mxu0 %v745
    %1090 = vmatpush.bf16.msra.mxu0 %v737
    %1091 = vmatpush.bf16.msra.mxu0 %v729
    %1092 = vmatmul.bf16.gmra.mxu0 %v127
    %v1093 = vpop.f32.mrf.mxu0
    %v1094 = vadd.f32 %v1081, %v1093
    %v1095 = vpop.f32.mrf.mxu0
    %1096 = vdwg.mxu0
    %1097 = vmatpush.bf16.msra.mxu0 %v722
    %1098 = vmatpush.bf16.msra.mxu0 %v714
    %1099 = vmatpush.bf16.msra.mxu0 %v706
    %1100 = vmatpush.bf16.msra.mxu0 %v698
    %1101 = vmatpush.bf16.msra.mxu0 %v690
    %1102 = vmatpush.bf16.msra.mxu0 %v682
    %1103 = vmatpush.bf16.msra.mxu0 %v674
    %1104 = vmatpush.bf16.msra.mxu0 %v666
    %1105 = vmatmul.bf16.gmra.mxu0 %v126
    %v1106 = vpop.f32.mrf.mxu0
    %v1107 = vadd.f32 %v266, %v1106
    %v1108 = vpop.f32.mrf.mxu0
    %1109 = vdwg.mxu0
    %1110 = vmatpush.bf16.msra.mxu0 %v786
    %1111 = vmatpush.bf16.msra.mxu0 %v778
    %1112 = vmatpush.bf16.msra.mxu0 %v770
    %1113 = vmatpush.bf16.msra.mxu0 %v762
    %1114 = vmatpush.bf16.msra.mxu0 %v754
    %1115 = vmatpush.bf16.msra.mxu0 %v746
    %1116 = vmatpush.bf16.msra.mxu0 %v738
    %1117 = vmatpush.bf16.msra.mxu0 %v730
    %1118 = vmatmul.bf16.gmra.mxu0 %v127
    %v1119 = vpop.f32.mrf.mxu0
    %v1120 = vadd.f32 %v1107, %v1119
    %v1121 = vpop.f32.mrf.mxu0
    %1122 = vdwg.mxu0
    %v1123 = vmax.f32 %v938, 0.0
    %v1124 = vmax.f32 %v964, 0.0
    %v1125 = vmax.f32 %v990, 0.0
    %v1126 = vmax.f32 %v1016, 0.0
    %v1127 = vmax.f32 %v1042, 0.0
    %v1128 = vmax.f32 %v1068, 0.0
    %v1129 = vmax.f32 %v1094, 0.0
    %v1130 = vmax.f32 %v1120, 0.0
    %v1131 = vpack.c.bf16 %v1123, %v1123
    %v1132 = vpack.c.bf16 %v1124, %v1124
    %v1133 = vpack.c.bf16 %v1125, %v1125
    %v1134 = vpack.c.bf16 %v1126, %v1126
    %v1135 = vpack.c.bf16 %v1127, %v1127
    %v1136 = vpack.c.bf16 %v1128, %v1128
    %v1137 = vpack.c.bf16 %v1129, %v1129
    %v1138 = vpack.c.bf16 %v1130, %v1130
    %v1139 = vld [vmem:[#allocation5] sm:$0xff]
    %v1140 = vld [vmem:[#allocation5 + $0x8] sm:$0xff]
    %v1141 = vld [vmem:[#allocation5 + $0x10] sm:$0xff]
    %v1142 = vld [vmem:[#allocation5 + $0x18] sm:$0xff]
    %v1143 = vld [vmem:[#allocation5 + $0x20] sm:$0xff]
    %v1144 = vld [vmem:[#allocation5 + $0x28] sm:$0xff]
    %v1145 = vld [vmem:[#allocation5 + $0x30] sm:$0xff]
    %v1146 = vld [vmem:[#allocation5 + $0x38] sm:$0xff]
    %v1147 = vld [vmem:[#allocation5 + $0x40] sm:$0xff]
    %v1148 = vld [vmem:[#allocation5 + $0x48] sm:$0xff]
    %v1149 = vld [vmem:[#allocation5 + $0x50] sm:$0xff]
    %v1150 = vld [vmem:[#allocation5 + $0x58] sm:$0xff]
    %v1151 = vld [vmem:[#allocation5 + $0x60] sm:$0xff]
    %v1152 = vld [vmem:[#allocation5 + $0x68] sm:$0xff]
    %v1153 = vld [vmem:[#allocation5 + $0x70] sm:$0xff]
    %v1154 = vld [vmem:[#allocation5 + $0x78] sm:$0xff]
    %v1155 = vld [vmem:[#allocation5 + $0x80] sm:$0xff]
    %v1156 = vld [vmem:[#allocation5 + $0x88] sm:$0xff]
    %v1157 = vld [vmem:[#allocation5 + $0x90] sm:$0xff]
    %v1158 = vld [vmem:[#allocation5 + $0x98] sm:$0xff]
    %v1159 = vld [vmem:[#allocation5 + $0xa0] sm:$0xff]
    %v1160 = vld [vmem:[#allocation5 + $0xa8] sm:$0xff]
    %v1161 = vld [vmem:[#allocation5 + $0xb0] sm:$0xff]
    %v1162 = vld [vmem:[#allocation5 + $0xb8] sm:$0xff]
    %v1163 = vld [vmem:[#allocation5 + $0xc0] sm:$0xff]
    %v1164 = vld [vmem:[#allocation5 + $0xc8] sm:$0xff]
    %v1165 = vld [vmem:[#allocation5 + $0xd0] sm:$0xff]
    %v1166 = vld [vmem:[#allocation5 + $0xd8] sm:$0xff]
    %v1167 = vld [vmem:[#allocation5 + $0xe0] sm:$0xff]
    %v1168 = vld [vmem:[#allocation5 + $0xe8] sm:$0xff]
    %v1169 = vld [vmem:[#allocation5 + $0xf0] sm:$0xff]
    %v1170 = vld [vmem:[#allocation5 + $0xf8] sm:$0xff]
    %v1171 = vld [vmem:[#allocation5 + $0x100] sm:$0xff]
    %v1172 = vld [vmem:[#allocation5 + $0x108] sm:$0xff]
    %v1173 = vld [vmem:[#allocation5 + $0x110] sm:$0xff]
    %v1174 = vld [vmem:[#allocation5 + $0x118] sm:$0xff]
    %v1175 = vld [vmem:[#allocation5 + $0x120] sm:$0xff]
    %v1176 = vld [vmem:[#allocation5 + $0x128] sm:$0xff]
    %v1177 = vld [vmem:[#allocation5 + $0x130] sm:$0xff]
    %v1178 = vld [vmem:[#allocation5 + $0x138] sm:$0xff]
    %v1179 = vld [vmem:[#allocation5 + $0x140] sm:$0xff]
    %v1180 = vld [vmem:[#allocation5 + $0x148] sm:$0xff]
    %v1181 = vld [vmem:[#allocation5 + $0x150] sm:$0xff]
    %v1182 = vld [vmem:[#allocation5 + $0x158] sm:$0xff]
    %v1183 = vld [vmem:[#allocation5 + $0x160] sm:$0xff]
    %v1184 = vld [vmem:[#allocation5 + $0x168] sm:$0xff]
    %v1185 = vld [vmem:[#allocation5 + $0x170] sm:$0xff]
    %v1186 = vld [vmem:[#allocation5 + $0x178] sm:$0xff]
    %v1187 = vld [vmem:[#allocation5 + $0x180] sm:$0xff]
    %v1188 = vld [vmem:[#allocation5 + $0x188] sm:$0xff]
    %v1189 = vld [vmem:[#allocation5 + $0x190] sm:$0xff]
    %v1190 = vld [vmem:[#allocation5 + $0x198] sm:$0xff]
    %v1191 = vld [vmem:[#allocation5 + $0x1a0] sm:$0xff]
    %v1192 = vld [vmem:[#allocation5 + $0x1a8] sm:$0xff]
    %v1193 = vld [vmem:[#allocation5 + $0x1b0] sm:$0xff]
    %v1194 = vld [vmem:[#allocation5 + $0x1b8] sm:$0xff]
    %v1195 = vld [vmem:[#allocation5 + $0x1c0] sm:$0xff]
    %v1196 = vld [vmem:[#allocation5 + $0x1c8] sm:$0xff]
    %v1197 = vld [vmem:[#allocation5 + $0x1d0] sm:$0xff]
    %v1198 = vld [vmem:[#allocation5 + $0x1d8] sm:$0xff]
    %v1199 = vld [vmem:[#allocation5 + $0x1e0] sm:$0xff]
    %v1200 = vld [vmem:[#allocation5 + $0x1e8] sm:$0xff]
    %v1201 = vld [vmem:[#allocation5 + $0x1f0] sm:$0xff]
    %v1202 = vld [vmem:[#allocation5 + $0x1f8] sm:$0xff]
    %v1203 = vld [vmem:[#allocation5 + $0x200] sm:$0xff]
    %v1204 = vld [vmem:[#allocation5 + $0x208] sm:$0xff]
    %v1205 = vld [vmem:[#allocation5 + $0x210] sm:$0xff]
    %v1206 = vld [vmem:[#allocation5 + $0x218] sm:$0xff]
    %v1207 = vld [vmem:[#allocation5 + $0x220] sm:$0xff]
    %v1208 = vld [vmem:[#allocation5 + $0x228] sm:$0xff]
    %v1209 = vld [vmem:[#allocation5 + $0x230] sm:$0xff]
    %v1210 = vld [vmem:[#allocation5 + $0x238] sm:$0xff]
    %v1211 = vld [vmem:[#allocation5 + $0x240] sm:$0xff]
    %v1212 = vld [vmem:[#allocation5 + $0x248] sm:$0xff]
    %v1213 = vld [vmem:[#allocation5 + $0x250] sm:$0xff]
    %v1214 = vld [vmem:[#allocation5 + $0x258] sm:$0xff]
    %v1215 = vld [vmem:[#allocation5 + $0x260] sm:$0xff]
    %v1216 = vld [vmem:[#allocation5 + $0x268] sm:$0xff]
    %v1217 = vld [vmem:[#allocation5 + $0x270] sm:$0xff]
    %v1218 = vld [vmem:[#allocation5 + $0x278] sm:$0xff]
    %v1219 = vld [vmem:[#allocation5 + $0x280] sm:$0xff]
    %v1220 = vld [vmem:[#allocation5 + $0x288] sm:$0xff]
    %v1221 = vld [vmem:[#allocation5 + $0x290] sm:$0xff]
    %v1222 = vld [vmem:[#allocation5 + $0x298] sm:$0xff]
    %v1223 = vld [vmem:[#allocation5 + $0x2a0] sm:$0xff]
    %v1224 = vld [vmem:[#allocation5 + $0x2a8] sm:$0xff]
    %v1225 = vld [vmem:[#allocation5 + $0x2b0] sm:$0xff]
    %v1226 = vld [vmem:[#allocation5 + $0x2b8] sm:$0xff]
    %v1227 = vld [vmem:[#allocation5 + $0x2c0] sm:$0xff]
    %v1228 = vld [vmem:[#allocation5 + $0x2c8] sm:$0xff]
    %v1229 = vld [vmem:[#allocation5 + $0x2d0] sm:$0xff]
    %v1230 = vld [vmem:[#allocation5 + $0x2d8] sm:$0xff]
    %v1231 = vld [vmem:[#allocation5 + $0x2e0] sm:$0xff]
    %v1232 = vld [vmem:[#allocation5 + $0x2e8] sm:$0xff]
    %v1233 = vld [vmem:[#allocation5 + $0x2f0] sm:$0xff]
    %v1234 = vld [vmem:[#allocation5 + $0x2f8] sm:$0xff]
    %v1235 = vld [vmem:[#allocation5 + $0x300] sm:$0xff]
    %v1236 = vld [vmem:[#allocation5 + $0x308] sm:$0xff]
    %v1237 = vld [vmem:[#allocation5 + $0x310] sm:$0xff]
    %v1238 = vld [vmem:[#allocation5 + $0x318] sm:$0xff]
    %v1239 = vld [vmem:[#allocation5 + $0x320] sm:$0xff]
    %v1240 = vld [vmem:[#allocation5 + $0x328] sm:$0xff]
    %v1241 = vld [vmem:[#allocation5 + $0x330] sm:$0xff]
    %v1242 = vld [vmem:[#allocation5 + $0x338] sm:$0xff]
    %v1243 = vld [vmem:[#allocation5 + $0x340] sm:$0xff]
    %v1244 = vld [vmem:[#allocation5 + $0x348] sm:$0xff]
    %v1245 = vld [vmem:[#allocation5 + $0x350] sm:$0xff]
    %v1246 = vld [vmem:[#allocation5 + $0x358] sm:$0xff]
    %v1247 = vld [vmem:[#allocation5 + $0x360] sm:$0xff]
    %v1248 = vld [vmem:[#allocation5 + $0x368] sm:$0xff]
    %v1249 = vld [vmem:[#allocation5 + $0x370] sm:$0xff]
    %v1250 = vld [vmem:[#allocation5 + $0x378] sm:$0xff]
    %v1251 = vld [vmem:[#allocation5 + $0x380] sm:$0xff]
    %v1252 = vld [vmem:[#allocation5 + $0x388] sm:$0xff]
    %v1253 = vld [vmem:[#allocation5 + $0x390] sm:$0xff]
    %v1254 = vld [vmem:[#allocation5 + $0x398] sm:$0xff]
    %v1255 = vld [vmem:[#allocation5 + $0x3a0] sm:$0xff]
    %v1256 = vld [vmem:[#allocation5 + $0x3a8] sm:$0xff]
    %v1257 = vld [vmem:[#allocation5 + $0x3b0] sm:$0xff]
    %v1258 = vld [vmem:[#allocation5 + $0x3b8] sm:$0xff]
    %v1259 = vld [vmem:[#allocation5 + $0x3c0] sm:$0xff]
    %v1260 = vld [vmem:[#allocation5 + $0x3c8] sm:$0xff]
    %v1261 = vld [vmem:[#allocation5 + $0x3d0] sm:$0xff]
    %v1262 = vld [vmem:[#allocation5 + $0x3d8] sm:$0xff]
    %v1263 = vld [vmem:[#allocation5 + $0x3e0] sm:$0xff]
    %v1264 = vld [vmem:[#allocation5 + $0x3e8] sm:$0xff]
    %v1265 = vld [vmem:[#allocation5 + $0x3f0] sm:$0xff]
    %v1266 = vld [vmem:[#allocation5 + $0x3f8] sm:$0xff]
    %v1267 = vld [vmem:[#allocation5 + $0x400] sm:$0xff]
    %v1268 = vld [vmem:[#allocation5 + $0x408] sm:$0xff]
    %v1269 = vld [vmem:[#allocation5 + $0x410] sm:$0xff]
    %v1270 = vld [vmem:[#allocation5 + $0x418] sm:$0xff]
    %v1271 = vld [vmem:[#allocation5 + $0x420] sm:$0xff]
    %v1272 = vld [vmem:[#allocation5 + $0x428] sm:$0xff]
    %v1273 = vld [vmem:[#allocation5 + $0x430] sm:$0xff]
    %v1274 = vld [vmem:[#allocation5 + $0x438] sm:$0xff]
    %v1275 = vld [vmem:[#allocation5 + $0x440] sm:$0xff]
    %v1276 = vld [vmem:[#allocation5 + $0x448] sm:$0xff]
    %v1277 = vld [vmem:[#allocation5 + $0x450] sm:$0xff]
    %v1278 = vld [vmem:[#allocation5 + $0x458] sm:$0xff]
    %v1279 = vld [vmem:[#allocation5 + $0x460] sm:$0xff]
    %v1280 = vld [vmem:[#allocation5 + $0x468] sm:$0xff]
    %v1281 = vld [vmem:[#allocation5 + $0x470] sm:$0xff]
    %v1282 = vld [vmem:[#allocation5 + $0x478] sm:$0xff]
    %v1283 = vld [vmem:[#allocation5 + $0x480] sm:$0xff]
    %v1284 = vld [vmem:[#allocation5 + $0x488] sm:$0xff]
    %v1285 = vld [vmem:[#allocation5 + $0x490] sm:$0xff]
    %v1286 = vld [vmem:[#allocation5 + $0x498] sm:$0xff]
    %v1287 = vld [vmem:[#allocation5 + $0x4a0] sm:$0xff]
    %v1288 = vld [vmem:[#allocation5 + $0x4a8] sm:$0xff]
    %v1289 = vld [vmem:[#allocation5 + $0x4b0] sm:$0xff]
    %v1290 = vld [vmem:[#allocation5 + $0x4b8] sm:$0xff]
    %v1291 = vld [vmem:[#allocation5 + $0x4c0] sm:$0xff]
    %v1292 = vld [vmem:[#allocation5 + $0x4c8] sm:$0xff]
    %v1293 = vld [vmem:[#allocation5 + $0x4d0] sm:$0xff]
    %v1294 = vld [vmem:[#allocation5 + $0x4d8] sm:$0xff]
    %v1295 = vld [vmem:[#allocation5 + $0x4e0] sm:$0xff]
    %v1296 = vld [vmem:[#allocation5 + $0x4e8] sm:$0xff]
    %v1297 = vld [vmem:[#allocation5 + $0x4f0] sm:$0xff]
    %v1298 = vld [vmem:[#allocation5 + $0x4f8] sm:$0xff]
    %v1299 = vld [vmem:[#allocation5 + $0x500] sm:$0xff]
    %v1300 = vld [vmem:[#allocation5 + $0x508] sm:$0xff]
    %v1301 = vld [vmem:[#allocation5 + $0x510] sm:$0xff]
    %v1302 = vld [vmem:[#allocation5 + $0x518] sm:$0xff]
    %v1303 = vld [vmem:[#allocation5 + $0x520] sm:$0xff]
    %v1304 = vld [vmem:[#allocation5 + $0x528] sm:$0xff]
    %v1305 = vld [vmem:[#allocation5 + $0x530] sm:$0xff]
    %v1306 = vld [vmem:[#allocation5 + $0x538] sm:$0xff]
    %v1307 = vld [vmem:[#allocation5 + $0x540] sm:$0xff]
    %v1308 = vld [vmem:[#allocation5 + $0x548] sm:$0xff]
    %v1309 = vld [vmem:[#allocation5 + $0x550] sm:$0xff]
    %v1310 = vld [vmem:[#allocation5 + $0x558] sm:$0xff]
    %v1311 = vld [vmem:[#allocation5 + $0x560] sm:$0xff]
    %v1312 = vld [vmem:[#allocation5 + $0x568] sm:$0xff]
    %v1313 = vld [vmem:[#allocation5 + $0x570] sm:$0xff]
    %v1314 = vld [vmem:[#allocation5 + $0x578] sm:$0xff]
    %v1315 = vld [vmem:[#allocation5 + $0x580] sm:$0xff]
    %v1316 = vld [vmem:[#allocation5 + $0x588] sm:$0xff]
    %v1317 = vld [vmem:[#allocation5 + $0x590] sm:$0xff]
    %v1318 = vld [vmem:[#allocation5 + $0x598] sm:$0xff]
    %v1319 = vld [vmem:[#allocation5 + $0x5a0] sm:$0xff]
    %v1320 = vld [vmem:[#allocation5 + $0x5a8] sm:$0xff]
    %v1321 = vld [vmem:[#allocation5 + $0x5b0] sm:$0xff]
    %v1322 = vld [vmem:[#allocation5 + $0x5b8] sm:$0xff]
    %v1323 = vld [vmem:[#allocation5 + $0x5c0] sm:$0xff]
    %v1324 = vld [vmem:[#allocation5 + $0x5c8] sm:$0xff]
    %v1325 = vld [vmem:[#allocation5 + $0x5d0] sm:$0xff]
    %v1326 = vld [vmem:[#allocation5 + $0x5d8] sm:$0xff]
    %v1327 = vld [vmem:[#allocation5 + $0x5e0] sm:$0xff]
    %v1328 = vld [vmem:[#allocation5 + $0x5e8] sm:$0xff]
    %v1329 = vld [vmem:[#allocation5 + $0x5f0] sm:$0xff]
    %v1330 = vld [vmem:[#allocation5 + $0x5f8] sm:$0xff]
    %v1331 = vld [vmem:[#allocation5 + $0x600] sm:$0xff]
    %v1332 = vld [vmem:[#allocation5 + $0x608] sm:$0xff]
    %v1333 = vld [vmem:[#allocation5 + $0x610] sm:$0xff]
    %v1334 = vld [vmem:[#allocation5 + $0x618] sm:$0xff]
    %v1335 = vld [vmem:[#allocation5 + $0x620] sm:$0xff]
    %v1336 = vld [vmem:[#allocation5 + $0x628] sm:$0xff]
    %v1337 = vld [vmem:[#allocation5 + $0x630] sm:$0xff]
    %v1338 = vld [vmem:[#allocation5 + $0x638] sm:$0xff]
    %v1339 = vld [vmem:[#allocation5 + $0x640] sm:$0xff]
    %v1340 = vld [vmem:[#allocation5 + $0x648] sm:$0xff]
    %v1341 = vld [vmem:[#allocation5 + $0x650] sm:$0xff]
    %v1342 = vld [vmem:[#allocation5 + $0x658] sm:$0xff]
    %v1343 = vld [vmem:[#allocation5 + $0x660] sm:$0xff]
    %v1344 = vld [vmem:[#allocation5 + $0x668] sm:$0xff]
    %v1345 = vld [vmem:[#allocation5 + $0x670] sm:$0xff]
    %v1346 = vld [vmem:[#allocation5 + $0x678] sm:$0xff]
    %v1347 = vld [vmem:[#allocation5 + $0x680] sm:$0xff]
    %v1348 = vld [vmem:[#allocation5 + $0x688] sm:$0xff]
    %v1349 = vld [vmem:[#allocation5 + $0x690] sm:$0xff]
    %v1350 = vld [vmem:[#allocation5 + $0x698] sm:$0xff]
    %v1351 = vld [vmem:[#allocation5 + $0x6a0] sm:$0xff]
    %v1352 = vld [vmem:[#allocation5 + $0x6a8] sm:$0xff]
    %v1353 = vld [vmem:[#allocation5 + $0x6b0] sm:$0xff]
    %v1354 = vld [vmem:[#allocation5 + $0x6b8] sm:$0xff]
    %v1355 = vld [vmem:[#allocation5 + $0x6c0] sm:$0xff]
    %v1356 = vld [vmem:[#allocation5 + $0x6c8] sm:$0xff]
    %v1357 = vld [vmem:[#allocation5 + $0x6d0] sm:$0xff]
    %v1358 = vld [vmem:[#allocation5 + $0x6d8] sm:$0xff]
    %v1359 = vld [vmem:[#allocation5 + $0x6e0] sm:$0xff]
    %v1360 = vld [vmem:[#allocation5 + $0x6e8] sm:$0xff]
    %v1361 = vld [vmem:[#allocation5 + $0x6f0] sm:$0xff]
    %v1362 = vld [vmem:[#allocation5 + $0x6f8] sm:$0xff]
    %v1363 = vld [vmem:[#allocation5 + $0x700] sm:$0xff]
    %v1364 = vld [vmem:[#allocation5 + $0x708] sm:$0xff]
    %v1365 = vld [vmem:[#allocation5 + $0x710] sm:$0xff]
    %v1366 = vld [vmem:[#allocation5 + $0x718] sm:$0xff]
    %v1367 = vld [vmem:[#allocation5 + $0x720] sm:$0xff]
    %v1368 = vld [vmem:[#allocation5 + $0x728] sm:$0xff]
    %v1369 = vld [vmem:[#allocation5 + $0x730] sm:$0xff]
    %v1370 = vld [vmem:[#allocation5 + $0x738] sm:$0xff]
    %v1371 = vld [vmem:[#allocation5 + $0x740] sm:$0xff]
    %v1372 = vld [vmem:[#allocation5 + $0x748] sm:$0xff]
    %v1373 = vld [vmem:[#allocation5 + $0x750] sm:$0xff]
    %v1374 = vld [vmem:[#allocation5 + $0x758] sm:$0xff]
    %v1375 = vld [vmem:[#allocation5 + $0x760] sm:$0xff]
    %v1376 = vld [vmem:[#allocation5 + $0x768] sm:$0xff]
    %v1377 = vld [vmem:[#allocation5 + $0x770] sm:$0xff]
    %v1378 = vld [vmem:[#allocation5 + $0x778] sm:$0xff]
    %v1379 = vld [vmem:[#allocation5 + $0x780] sm:$0xff]
    %v1380 = vld [vmem:[#allocation5 + $0x788] sm:$0xff]
    %v1381 = vld [vmem:[#allocation5 + $0x790] sm:$0xff]
    %v1382 = vld [vmem:[#allocation5 + $0x798] sm:$0xff]
    %v1383 = vld [vmem:[#allocation5 + $0x7a0] sm:$0xff]
    %v1384 = vld [vmem:[#allocation5 + $0x7a8] sm:$0xff]
    %v1385 = vld [vmem:[#allocation5 + $0x7b0] sm:$0xff]
    %v1386 = vld [vmem:[#allocation5 + $0x7b8] sm:$0xff]
    %v1387 = vld [vmem:[#allocation5 + $0x7c0] sm:$0xff]
    %v1388 = vld [vmem:[#allocation5 + $0x7c8] sm:$0xff]
    %v1389 = vld [vmem:[#allocation5 + $0x7d0] sm:$0xff]
    %v1390 = vld [vmem:[#allocation5 + $0x7d8] sm:$0xff]
    %v1391 = vld [vmem:[#allocation5 + $0x7e0] sm:$0xff]
    %v1392 = vld [vmem:[#allocation5 + $0x7e8] sm:$0xff]
    %v1393 = vld [vmem:[#allocation5 + $0x7f0] sm:$0xff]
    %v1394 = vld [vmem:[#allocation5 + $0x7f8] sm:$0xff]
    %v1395 = vld [vmem:[%s5] sm:$0xf]
    %v1397 = vperm.slane %v1395, 0
    %v1398 = vperm.slane %v1395, 1
    %v1399 = vperm.slane %v1395, 2
    %v1400 = vperm.slane %v1395, 3
    %v1661 = vunpack.c.l.b16 %v1139
    %v1662 = vunpack.c.h.b16 %v1139
    %v1663 = vunpack.c.l.b16 %v1140
    %v1664 = vunpack.c.h.b16 %v1140
    %v1665 = vunpack.c.l.b16 %v1141
    %v1666 = vunpack.c.h.b16 %v1141
    %v1667 = vunpack.c.l.b16 %v1142
    %v1668 = vunpack.c.h.b16 %v1142
    %v1669 = vunpack.c.l.b16 %v1143
    %v1670 = vunpack.c.h.b16 %v1143
    %v1671 = vunpack.c.l.b16 %v1144
    %v1672 = vunpack.c.h.b16 %v1144
    %v1673 = vunpack.c.l.b16 %v1145
    %v1674 = vunpack.c.h.b16 %v1145
    %v1675 = vunpack.c.l.b16 %v1146
    %v1676 = vunpack.c.h.b16 %v1146
    %v1677 = vunpack.c.l.b16 %v1147
    %v1678 = vunpack.c.h.b16 %v1147
    %v1679 = vunpack.c.l.b16 %v1148
    %v1680 = vunpack.c.h.b16 %v1148
    %v1681 = vunpack.c.l.b16 %v1149
    %v1682 = vunpack.c.h.b16 %v1149
    %v1683 = vunpack.c.l.b16 %v1150
    %v1684 = vunpack.c.h.b16 %v1150
    %v1685 = vunpack.c.l.b16 %v1151
    %v1686 = vunpack.c.h.b16 %v1151
    %v1687 = vunpack.c.l.b16 %v1152
    %v1688 = vunpack.c.h.b16 %v1152
    %v1689 = vunpack.c.l.b16 %v1153
    %v1690 = vunpack.c.h.b16 %v1153
    %v1691 = vunpack.c.l.b16 %v1154
    %v1692 = vunpack.c.h.b16 %v1154
    %v1693 = vunpack.c.l.b16 %v1155
    %v1694 = vunpack.c.h.b16 %v1155
    %v1695 = vunpack.c.l.b16 %v1156
    %v1696 = vunpack.c.h.b16 %v1156
    %v1697 = vunpack.c.l.b16 %v1157
    %v1698 = vunpack.c.h.b16 %v1157
    %v1699 = vunpack.c.l.b16 %v1158
    %v1700 = vunpack.c.h.b16 %v1158
    %v1701 = vunpack.c.l.b16 %v1159
    %v1702 = vunpack.c.h.b16 %v1159
    %v1703 = vunpack.c.l.b16 %v1160
    %v1704 = vunpack.c.h.b16 %v1160
    %v1705 = vunpack.c.l.b16 %v1161
    %v1706 = vunpack.c.h.b16 %v1161
    %v1707 = vunpack.c.l.b16 %v1162
    %v1708 = vunpack.c.h.b16 %v1162
    %v1709 = vunpack.c.l.b16 %v1163
    %v1710 = vunpack.c.h.b16 %v1163
    %v1711 = vunpack.c.l.b16 %v1164
    %v1712 = vunpack.c.h.b16 %v1164
    %v1713 = vunpack.c.l.b16 %v1165
    %v1714 = vunpack.c.h.b16 %v1165
    %v1715 = vunpack.c.l.b16 %v1166
    %v1716 = vunpack.c.h.b16 %v1166
    %v1717 = vunpack.c.l.b16 %v1167
    %v1718 = vunpack.c.h.b16 %v1167
    %v1719 = vunpack.c.l.b16 %v1168
    %v1720 = vunpack.c.h.b16 %v1168
    %v1721 = vunpack.c.l.b16 %v1169
    %v1722 = vunpack.c.h.b16 %v1169
    %v1723 = vunpack.c.l.b16 %v1170
    %v1724 = vunpack.c.h.b16 %v1170
    %v1725 = vunpack.c.l.b16 %v1171
    %v1726 = vunpack.c.h.b16 %v1171
    %v1727 = vunpack.c.l.b16 %v1172
    %v1728 = vunpack.c.h.b16 %v1172
    %v1729 = vunpack.c.l.b16 %v1173
    %v1730 = vunpack.c.h.b16 %v1173
    %v1731 = vunpack.c.l.b16 %v1174
    %v1732 = vunpack.c.h.b16 %v1174
    %v1733 = vunpack.c.l.b16 %v1175
    %v1734 = vunpack.c.h.b16 %v1175
    %v1735 = vunpack.c.l.b16 %v1176
    %v1736 = vunpack.c.h.b16 %v1176
    %v1737 = vunpack.c.l.b16 %v1177
    %v1738 = vunpack.c.h.b16 %v1177
    %v1739 = vunpack.c.l.b16 %v1178
    %v1740 = vunpack.c.h.b16 %v1178
    %v1741 = vunpack.c.l.b16 %v1179
    %v1742 = vunpack.c.h.b16 %v1179
    %v1743 = vunpack.c.l.b16 %v1180
    %v1744 = vunpack.c.h.b16 %v1180
    %v1745 = vunpack.c.l.b16 %v1181
    %v1746 = vunpack.c.h.b16 %v1181
    %v1747 = vunpack.c.l.b16 %v1182
    %v1748 = vunpack.c.h.b16 %v1182
    %v1749 = vunpack.c.l.b16 %v1183
    %v1750 = vunpack.c.h.b16 %v1183
    %v1751 = vunpack.c.l.b16 %v1184
    %v1752 = vunpack.c.h.b16 %v1184
    %v1753 = vunpack.c.l.b16 %v1185
    %v1754 = vunpack.c.h.b16 %v1185
    %v1755 = vunpack.c.l.b16 %v1186
    %v1756 = vunpack.c.h.b16 %v1186
    %v1757 = vunpack.c.l.b16 %v1187
    %v1758 = vunpack.c.h.b16 %v1187
    %v1759 = vunpack.c.l.b16 %v1188
    %v1760 = vunpack.c.h.b16 %v1188
    %v1761 = vunpack.c.l.b16 %v1189
    %v1762 = vunpack.c.h.b16 %v1189
    %v1763 = vunpack.c.l.b16 %v1190
    %v1764 = vunpack.c.h.b16 %v1190
    %v1765 = vunpack.c.l.b16 %v1191
    %v1766 = vunpack.c.h.b16 %v1191
    %v1767 = vunpack.c.l.b16 %v1192
    %v1768 = vunpack.c.h.b16 %v1192
    %v1769 = vunpack.c.l.b16 %v1193
    %v1770 = vunpack.c.h.b16 %v1193
    %v1771 = vunpack.c.l.b16 %v1194
    %v1772 = vunpack.c.h.b16 %v1194
    %v1773 = vunpack.c.l.b16 %v1195
    %v1774 = vunpack.c.h.b16 %v1195
    %v1775 = vunpack.c.l.b16 %v1196
    %v1776 = vunpack.c.h.b16 %v1196
    %v1777 = vunpack.c.l.b16 %v1197
    %v1778 = vunpack.c.h.b16 %v1197
    %v1779 = vunpack.c.l.b16 %v1198
    %v1780 = vunpack.c.h.b16 %v1198
    %v1781 = vunpack.c.l.b16 %v1199
    %v1782 = vunpack.c.h.b16 %v1199
    %v1783 = vunpack.c.l.b16 %v1200
    %v1784 = vunpack.c.h.b16 %v1200
    %v1785 = vunpack.c.l.b16 %v1201
    %v1786 = vunpack.c.h.b16 %v1201
    %v1787 = vunpack.c.l.b16 %v1202
    %v1788 = vunpack.c.h.b16 %v1202
    %v1789 = vunpack.c.l.b16 %v1203
    %v1790 = vunpack.c.h.b16 %v1203
    %v1791 = vunpack.c.l.b16 %v1204
    %v1792 = vunpack.c.h.b16 %v1204
    %v1793 = vunpack.c.l.b16 %v1205
    %v1794 = vunpack.c.h.b16 %v1205
    %v1795 = vunpack.c.l.b16 %v1206
    %v1796 = vunpack.c.h.b16 %v1206
    %v1797 = vunpack.c.l.b16 %v1207
    %v1798 = vunpack.c.h.b16 %v1207
    %v1799 = vunpack.c.l.b16 %v1208
    %v1800 = vunpack.c.h.b16 %v1208
    %v1801 = vunpack.c.l.b16 %v1209
    %v1802 = vunpack.c.h.b16 %v1209
    %v1803 = vunpack.c.l.b16 %v1210
    %v1804 = vunpack.c.h.b16 %v1210
    %v1805 = vunpack.c.l.b16 %v1211
    %v1806 = vunpack.c.h.b16 %v1211
    %v1807 = vunpack.c.l.b16 %v1212
    %v1808 = vunpack.c.h.b16 %v1212
    %v1809 = vunpack.c.l.b16 %v1213
    %v1810 = vunpack.c.h.b16 %v1213
    %v1811 = vunpack.c.l.b16 %v1214
    %v1812 = vunpack.c.h.b16 %v1214
    %v1813 = vunpack.c.l.b16 %v1215
    %v1814 = vunpack.c.h.b16 %v1215
    %v1815 = vunpack.c.l.b16 %v1216
    %v1816 = vunpack.c.h.b16 %v1216
    %v1817 = vunpack.c.l.b16 %v1217
    %v1818 = vunpack.c.h.b16 %v1217
    %v1819 = vunpack.c.l.b16 %v1218
    %v1820 = vunpack.c.h.b16 %v1218
    %v1821 = vunpack.c.l.b16 %v1219
    %v1822 = vunpack.c.h.b16 %v1219
    %v1823 = vunpack.c.l.b16 %v1220
    %v1824 = vunpack.c.h.b16 %v1220
    %v1825 = vunpack.c.l.b16 %v1221
    %v1826 = vunpack.c.h.b16 %v1221
    %v1827 = vunpack.c.l.b16 %v1222
    %v1828 = vunpack.c.h.b16 %v1222
    %v1829 = vunpack.c.l.b16 %v1223
    %v1830 = vunpack.c.h.b16 %v1223
    %v1831 = vunpack.c.l.b16 %v1224
    %v1832 = vunpack.c.h.b16 %v1224
    %v1833 = vunpack.c.l.b16 %v1225
    %v1834 = vunpack.c.h.b16 %v1225
    %v1835 = vunpack.c.l.b16 %v1226
    %v1836 = vunpack.c.h.b16 %v1226
    %v1837 = vunpack.c.l.b16 %v1227
    %v1838 = vunpack.c.h.b16 %v1227
    %v1839 = vunpack.c.l.b16 %v1228
    %v1840 = vunpack.c.h.b16 %v1228
    %v1841 = vunpack.c.l.b16 %v1229
    %v1842 = vunpack.c.h.b16 %v1229
    %v1843 = vunpack.c.l.b16 %v1230
    %v1844 = vunpack.c.h.b16 %v1230
    %v1845 = vunpack.c.l.b16 %v1231
    %v1846 = vunpack.c.h.b16 %v1231
    %v1847 = vunpack.c.l.b16 %v1232
    %v1848 = vunpack.c.h.b16 %v1232
    %v1849 = vunpack.c.l.b16 %v1233
    %v1850 = vunpack.c.h.b16 %v1233
    %v1851 = vunpack.c.l.b16 %v1234
    %v1852 = vunpack.c.h.b16 %v1234
    %v1853 = vunpack.c.l.b16 %v1235
    %v1854 = vunpack.c.h.b16 %v1235
    %v1855 = vunpack.c.l.b16 %v1236
    %v1856 = vunpack.c.h.b16 %v1236
    %v1857 = vunpack.c.l.b16 %v1237
    %v1858 = vunpack.c.h.b16 %v1237
    %v1859 = vunpack.c.l.b16 %v1238
    %v1860 = vunpack.c.h.b16 %v1238
    %v1861 = vunpack.c.l.b16 %v1239
    %v1862 = vunpack.c.h.b16 %v1239
    %v1863 = vunpack.c.l.b16 %v1240
    %v1864 = vunpack.c.h.b16 %v1240
    %v1865 = vunpack.c.l.b16 %v1241
    %v1866 = vunpack.c.h.b16 %v1241
    %v1867 = vunpack.c.l.b16 %v1242
    %v1868 = vunpack.c.h.b16 %v1242
    %v1869 = vunpack.c.l.b16 %v1243
    %v1870 = vunpack.c.h.b16 %v1243
    %v1871 = vunpack.c.l.b16 %v1244
    %v1872 = vunpack.c.h.b16 %v1244
    %v1873 = vunpack.c.l.b16 %v1245
    %v1874 = vunpack.c.h.b16 %v1245
    %v1875 = vunpack.c.l.b16 %v1246
    %v1876 = vunpack.c.h.b16 %v1246
    %v1877 = vunpack.c.l.b16 %v1247
    %v1878 = vunpack.c.h.b16 %v1247
    %v1879 = vunpack.c.l.b16 %v1248
    %v1880 = vunpack.c.h.b16 %v1248
    %v1881 = vunpack.c.l.b16 %v1249
    %v1882 = vunpack.c.h.b16 %v1249
    %v1883 = vunpack.c.l.b16 %v1250
    %v1884 = vunpack.c.h.b16 %v1250
    %v1885 = vunpack.c.l.b16 %v1251
    %v1886 = vunpack.c.h.b16 %v1251
    %v1887 = vunpack.c.l.b16 %v1252
    %v1888 = vunpack.c.h.b16 %v1252
    %v1889 = vunpack.c.l.b16 %v1253
    %v1890 = vunpack.c.h.b16 %v1253
    %v1891 = vunpack.c.l.b16 %v1254
    %v1892 = vunpack.c.h.b16 %v1254
    %v1893 = vunpack.c.l.b16 %v1255
    %v1894 = vunpack.c.h.b16 %v1255
    %v1895 = vunpack.c.l.b16 %v1256
    %v1896 = vunpack.c.h.b16 %v1256
    %v1897 = vunpack.c.l.b16 %v1257
    %v1898 = vunpack.c.h.b16 %v1257
    %v1899 = vunpack.c.l.b16 %v1258
    %v1900 = vunpack.c.h.b16 %v1258
    %v1901 = vunpack.c.l.b16 %v1259
    %v1902 = vunpack.c.h.b16 %v1259
    %v1903 = vunpack.c.l.b16 %v1260
    %v1904 = vunpack.c.h.b16 %v1260
    %v1905 = vunpack.c.l.b16 %v1261
    %v1906 = vunpack.c.h.b16 %v1261
    %v1907 = vunpack.c.l.b16 %v1262
    %v1908 = vunpack.c.h.b16 %v1262
    %v1909 = vunpack.c.l.b16 %v1263
    %v1910 = vunpack.c.h.b16 %v1263
    %v1911 = vunpack.c.l.b16 %v1264
    %v1912 = vunpack.c.h.b16 %v1264
    %v1913 = vunpack.c.l.b16 %v1265
    %v1914 = vunpack.c.h.b16 %v1265
    %v1915 = vunpack.c.l.b16 %v1266
    %v1916 = vunpack.c.h.b16 %v1266
    %v1917 = vunpack.c.l.b16 %v1267
    %v1918 = vunpack.c.h.b16 %v1267
    %v1919 = vunpack.c.l.b16 %v1268
    %v1920 = vunpack.c.h.b16 %v1268
    %v1921 = vunpack.c.l.b16 %v1269
    %v1922 = vunpack.c.h.b16 %v1269
    %v1923 = vunpack.c.l.b16 %v1270
    %v1924 = vunpack.c.h.b16 %v1270
    %v1925 = vunpack.c.l.b16 %v1271
    %v1926 = vunpack.c.h.b16 %v1271
    %v1927 = vunpack.c.l.b16 %v1272
    %v1928 = vunpack.c.h.b16 %v1272
    %v1929 = vunpack.c.l.b16 %v1273
    %v1930 = vunpack.c.h.b16 %v1273
    %v1931 = vunpack.c.l.b16 %v1274
    %v1932 = vunpack.c.h.b16 %v1274
    %v1933 = vunpack.c.l.b16 %v1275
    %v1934 = vunpack.c.h.b16 %v1275
    %v1935 = vunpack.c.l.b16 %v1276
    %v1936 = vunpack.c.h.b16 %v1276
    %v1937 = vunpack.c.l.b16 %v1277
    %v1938 = vunpack.c.h.b16 %v1277
    %v1939 = vunpack.c.l.b16 %v1278
    %v1940 = vunpack.c.h.b16 %v1278
    %v1941 = vunpack.c.l.b16 %v1279
    %v1942 = vunpack.c.h.b16 %v1279
    %v1943 = vunpack.c.l.b16 %v1280
    %v1944 = vunpack.c.h.b16 %v1280
    %v1945 = vunpack.c.l.b16 %v1281
    %v1946 = vunpack.c.h.b16 %v1281
    %v1947 = vunpack.c.l.b16 %v1282
    %v1948 = vunpack.c.h.b16 %v1282
    %v1949 = vunpack.c.l.b16 %v1283
    %v1950 = vunpack.c.h.b16 %v1283
    %v1951 = vunpack.c.l.b16 %v1284
    %v1952 = vunpack.c.h.b16 %v1284
    %v1953 = vunpack.c.l.b16 %v1285
    %v1954 = vunpack.c.h.b16 %v1285
    %v1955 = vunpack.c.l.b16 %v1286
    %v1956 = vunpack.c.h.b16 %v1286
    %v1957 = vunpack.c.l.b16 %v1287
    %v1958 = vunpack.c.h.b16 %v1287
    %v1959 = vunpack.c.l.b16 %v1288
    %v1960 = vunpack.c.h.b16 %v1288
    %v1961 = vunpack.c.l.b16 %v1289
    %v1962 = vunpack.c.h.b16 %v1289
    %v1963 = vunpack.c.l.b16 %v1290
    %v1964 = vunpack.c.h.b16 %v1290
    %v1965 = vunpack.c.l.b16 %v1291
    %v1966 = vunpack.c.h.b16 %v1291
    %v1967 = vunpack.c.l.b16 %v1292
    %v1968 = vunpack.c.h.b16 %v1292
    %v1969 = vunpack.c.l.b16 %v1293
    %v1970 = vunpack.c.h.b16 %v1293
    %v1971 = vunpack.c.l.b16 %v1294
    %v1972 = vunpack.c.h.b16 %v1294
    %v1973 = vunpack.c.l.b16 %v1295
    %v1974 = vunpack.c.h.b16 %v1295
    %v1975 = vunpack.c.l.b16 %v1296
    %v1976 = vunpack.c.h.b16 %v1296
    %v1977 = vunpack.c.l.b16 %v1297
    %v1978 = vunpack.c.h.b16 %v1297
    %v1979 = vunpack.c.l.b16 %v1298
    %v1980 = vunpack.c.h.b16 %v1298
    %v1981 = vunpack.c.l.b16 %v1299
    %v1982 = vunpack.c.h.b16 %v1299
    %v1983 = vunpack.c.l.b16 %v1300
    %v1984 = vunpack.c.h.b16 %v1300
    %v1985 = vunpack.c.l.b16 %v1301
    %v1986 = vunpack.c.h.b16 %v1301
    %v1987 = vunpack.c.l.b16 %v1302
    %v1988 = vunpack.c.h.b16 %v1302
    %v1989 = vunpack.c.l.b16 %v1303
    %v1990 = vunpack.c.h.b16 %v1303
    %v1991 = vunpack.c.l.b16 %v1304
    %v1992 = vunpack.c.h.b16 %v1304
    %v1993 = vunpack.c.l.b16 %v1305
    %v1994 = vunpack.c.h.b16 %v1305
    %v1995 = vunpack.c.l.b16 %v1306
    %v1996 = vunpack.c.h.b16 %v1306
    %v1997 = vunpack.c.l.b16 %v1307
    %v1998 = vunpack.c.h.b16 %v1307
    %v1999 = vunpack.c.l.b16 %v1308
    %v2000 = vunpack.c.h.b16 %v1308
    %v2001 = vunpack.c.l.b16 %v1309
    %v2002 = vunpack.c.h.b16 %v1309
    %v2003 = vunpack.c.l.b16 %v1310
    %v2004 = vunpack.c.h.b16 %v1310
    %v2005 = vunpack.c.l.b16 %v1311
    %v2006 = vunpack.c.h.b16 %v1311
    %v2007 = vunpack.c.l.b16 %v1312
    %v2008 = vunpack.c.h.b16 %v1312
    %v2009 = vunpack.c.l.b16 %v1313
    %v2010 = vunpack.c.h.b16 %v1313
    %v2011 = vunpack.c.l.b16 %v1314
    %v2012 = vunpack.c.h.b16 %v1314
    %v2013 = vunpack.c.l.b16 %v1315
    %v2014 = vunpack.c.h.b16 %v1315
    %v2015 = vunpack.c.l.b16 %v1316
    %v2016 = vunpack.c.h.b16 %v1316
    %v2017 = vunpack.c.l.b16 %v1317
    %v2018 = vunpack.c.h.b16 %v1317
    %v2019 = vunpack.c.l.b16 %v1318
    %v2020 = vunpack.c.h.b16 %v1318
    %v2021 = vunpack.c.l.b16 %v1319
    %v2022 = vunpack.c.h.b16 %v1319
    %v2023 = vunpack.c.l.b16 %v1320
    %v2024 = vunpack.c.h.b16 %v1320
    %v2025 = vunpack.c.l.b16 %v1321
    %v2026 = vunpack.c.h.b16 %v1321
    %v2027 = vunpack.c.l.b16 %v1322
    %v2028 = vunpack.c.h.b16 %v1322
    %v2029 = vunpack.c.l.b16 %v1323
    %v2030 = vunpack.c.h.b16 %v1323
    %v2031 = vunpack.c.l.b16 %v1324
    %v2032 = vunpack.c.h.b16 %v1324
    %v2033 = vunpack.c.l.b16 %v1325
    %v2034 = vunpack.c.h.b16 %v1325
    %v2035 = vunpack.c.l.b16 %v1326
    %v2036 = vunpack.c.h.b16 %v1326
    %v2037 = vunpack.c.l.b16 %v1327
    %v2038 = vunpack.c.h.b16 %v1327
    %v2039 = vunpack.c.l.b16 %v1328
    %v2040 = vunpack.c.h.b16 %v1328
    %v2041 = vunpack.c.l.b16 %v1329
    %v2042 = vunpack.c.h.b16 %v1329
    %v2043 = vunpack.c.l.b16 %v1330
    %v2044 = vunpack.c.h.b16 %v1330
    %v2045 = vunpack.c.l.b16 %v1331
    %v2046 = vunpack.c.h.b16 %v1331
    %v2047 = vunpack.c.l.b16 %v1332
    %v2048 = vunpack.c.h.b16 %v1332
    %v2049 = vunpack.c.l.b16 %v1333
    %v2050 = vunpack.c.h.b16 %v1333
    %v2051 = vunpack.c.l.b16 %v1334
    %v2052 = vunpack.c.h.b16 %v1334
    %v2053 = vunpack.c.l.b16 %v1335
    %v2054 = vunpack.c.h.b16 %v1335
    %v2055 = vunpack.c.l.b16 %v1336
    %v2056 = vunpack.c.h.b16 %v1336
    %v2057 = vunpack.c.l.b16 %v1337
    %v2058 = vunpack.c.h.b16 %v1337
    %v2059 = vunpack.c.l.b16 %v1338
    %v2060 = vunpack.c.h.b16 %v1338
    %v2061 = vunpack.c.l.b16 %v1339
    %v2062 = vunpack.c.h.b16 %v1339
    %v2063 = vunpack.c.l.b16 %v1340
    %v2064 = vunpack.c.h.b16 %v1340
    %v2065 = vunpack.c.l.b16 %v1341
    %v2066 = vunpack.c.h.b16 %v1341
    %v2067 = vunpack.c.l.b16 %v1342
    %v2068 = vunpack.c.h.b16 %v1342
    %v2069 = vunpack.c.l.b16 %v1343
    %v2070 = vunpack.c.h.b16 %v1343
    %v2071 = vunpack.c.l.b16 %v1344
    %v2072 = vunpack.c.h.b16 %v1344
    %v2073 = vunpack.c.l.b16 %v1345
    %v2074 = vunpack.c.h.b16 %v1345
    %v2075 = vunpack.c.l.b16 %v1346
    %v2076 = vunpack.c.h.b16 %v1346
    %v2077 = vunpack.c.l.b16 %v1347
    %v2078 = vunpack.c.h.b16 %v1347
    %v2079 = vunpack.c.l.b16 %v1348
    %v2080 = vunpack.c.h.b16 %v1348
    %v2081 = vunpack.c.l.b16 %v1349
    %v2082 = vunpack.c.h.b16 %v1349
    %v2083 = vunpack.c.l.b16 %v1350
    %v2084 = vunpack.c.h.b16 %v1350
    %v2085 = vunpack.c.l.b16 %v1351
    %v2086 = vunpack.c.h.b16 %v1351
    %v2087 = vunpack.c.l.b16 %v1352
    %v2088 = vunpack.c.h.b16 %v1352
    %v2089 = vunpack.c.l.b16 %v1353
    %v2090 = vunpack.c.h.b16 %v1353
    %v2091 = vunpack.c.l.b16 %v1354
    %v2092 = vunpack.c.h.b16 %v1354
    %v2093 = vunpack.c.l.b16 %v1355
    %v2094 = vunpack.c.h.b16 %v1355
    %v2095 = vunpack.c.l.b16 %v1356
    %v2096 = vunpack.c.h.b16 %v1356
    %v2097 = vunpack.c.l.b16 %v1357
    %v2098 = vunpack.c.h.b16 %v1357
    %v2099 = vunpack.c.l.b16 %v1358
    %v2100 = vunpack.c.h.b16 %v1358
    %v2101 = vunpack.c.l.b16 %v1359
    %v2102 = vunpack.c.h.b16 %v1359
    %v2103 = vunpack.c.l.b16 %v1360
    %v2104 = vunpack.c.h.b16 %v1360
    %v2105 = vunpack.c.l.b16 %v1361
    %v2106 = vunpack.c.h.b16 %v1361
    %v2107 = vunpack.c.l.b16 %v1362
    %v2108 = vunpack.c.h.b16 %v1362
    %v2109 = vunpack.c.l.b16 %v1363
    %v2110 = vunpack.c.h.b16 %v1363
    %v2111 = vunpack.c.l.b16 %v1364
    %v2112 = vunpack.c.h.b16 %v1364
    %v2113 = vunpack.c.l.b16 %v1365
    %v2114 = vunpack.c.h.b16 %v1365
    %v2115 = vunpack.c.l.b16 %v1366
    %v2116 = vunpack.c.h.b16 %v1366
    %v2117 = vunpack.c.l.b16 %v1367
    %v2118 = vunpack.c.h.b16 %v1367
    %v2119 = vunpack.c.l.b16 %v1368
    %v2120 = vunpack.c.h.b16 %v1368
    %v2121 = vunpack.c.l.b16 %v1369
    %v2122 = vunpack.c.h.b16 %v1369
    %v2123 = vunpack.c.l.b16 %v1370
    %v2124 = vunpack.c.h.b16 %v1370
    %v2125 = vunpack.c.l.b16 %v1371
    %v2126 = vunpack.c.h.b16 %v1371
    %v2127 = vunpack.c.l.b16 %v1372
    %v2128 = vunpack.c.h.b16 %v1372
    %v2129 = vunpack.c.l.b16 %v1373
    %v2130 = vunpack.c.h.b16 %v1373
    %v2131 = vunpack.c.l.b16 %v1374
    %v2132 = vunpack.c.h.b16 %v1374
    %v2133 = vunpack.c.l.b16 %v1375
    %v2134 = vunpack.c.h.b16 %v1375
    %v2135 = vunpack.c.l.b16 %v1376
    %v2136 = vunpack.c.h.b16 %v1376
    %v2137 = vunpack.c.l.b16 %v1377
    %v2138 = vunpack.c.h.b16 %v1377
    %v2139 = vunpack.c.l.b16 %v1378
    %v2140 = vunpack.c.h.b16 %v1378
    %v2141 = vunpack.c.l.b16 %v1379
    %v2142 = vunpack.c.h.b16 %v1379
    %v2143 = vunpack.c.l.b16 %v1380
    %v2144 = vunpack.c.h.b16 %v1380
    %v2145 = vunpack.c.l.b16 %v1381
    %v2146 = vunpack.c.h.b16 %v1381
    %v2147 = vunpack.c.l.b16 %v1382
    %v2148 = vunpack.c.h.b16 %v1382
    %v2149 = vunpack.c.l.b16 %v1383
    %v2150 = vunpack.c.h.b16 %v1383
    %v2151 = vunpack.c.l.b16 %v1384
    %v2152 = vunpack.c.h.b16 %v1384
    %v2153 = vunpack.c.l.b16 %v1385
    %v2154 = vunpack.c.h.b16 %v1385
    %v2155 = vunpack.c.l.b16 %v1386
    %v2156 = vunpack.c.h.b16 %v1386
    %v2157 = vunpack.c.l.b16 %v1387
    %v2158 = vunpack.c.h.b16 %v1387
    %v2159 = vunpack.c.l.b16 %v1388
    %v2160 = vunpack.c.h.b16 %v1388
    %v2161 = vunpack.c.l.b16 %v1389
    %v2162 = vunpack.c.h.b16 %v1389
    %v2163 = vunpack.c.l.b16 %v1390
    %v2164 = vunpack.c.h.b16 %v1390
    %v2165 = vunpack.c.l.b16 %v1391
    %v2166 = vunpack.c.h.b16 %v1391
    %v2167 = vunpack.c.l.b16 %v1392
    %v2168 = vunpack.c.h.b16 %v1392
    %v2169 = vunpack.c.l.b16 %v1393
    %v2170 = vunpack.c.h.b16 %v1393
    %v2171 = vunpack.c.l.b16 %v1394
    %v2172 = vunpack.c.h.b16 %v1394
    %v2173 = vpack.c.b16 %v1665, %v1661
    %v2174 = vpack.c.b16 %v1666, %v1662
    %v2175 = vpack.c.b16 %v1667, %v1663
    %v2176 = vpack.c.b16 %v1668, %v1664
    %v2177 = vpack.c.b16 %v1673, %v1669
    %v2178 = vpack.c.b16 %v1674, %v1670
    %v2179 = vpack.c.b16 %v1675, %v1671
    %v2180 = vpack.c.b16 %v1676, %v1672
    %v2181 = vpack.c.b16 %v1681, %v1677
    %v2182 = vpack.c.b16 %v1682, %v1678
    %v2183 = vpack.c.b16 %v1683, %v1679
    %v2184 = vpack.c.b16 %v1684, %v1680
    %v2185 = vpack.c.b16 %v1689, %v1685
    %v2186 = vpack.c.b16 %v1690, %v1686
    %v2187 = vpack.c.b16 %v1691, %v1687
    %v2188 = vpack.c.b16 %v1692, %v1688
    %v2189 = vpack.c.b16 %v1697, %v1693
    %v2190 = vpack.c.b16 %v1698, %v1694
    %v2191 = vpack.c.b16 %v1699, %v1695
    %v2192 = vpack.c.b16 %v1700, %v1696
    %v2193 = vpack.c.b16 %v1705, %v1701
    %v2194 = vpack.c.b16 %v1706, %v1702
    %v2195 = vpack.c.b16 %v1707, %v1703
    %v2196 = vpack.c.b16 %v1708, %v1704
    %v2197 = vpack.c.b16 %v1713, %v1709
    %v2198 = vpack.c.b16 %v1714, %v1710
    %v2199 = vpack.c.b16 %v1715, %v1711
    %v2200 = vpack.c.b16 %v1716, %v1712
    %v2201 = vpack.c.b16 %v1721, %v1717
    %v2202 = vpack.c.b16 %v1722, %v1718
    %v2203 = vpack.c.b16 %v1723, %v1719
    %v2204 = vpack.c.b16 %v1724, %v1720
    %v2205 = vpack.c.b16 %v1729, %v1725
    %v2206 = vpack.c.b16 %v1730, %v1726
    %v2207 = vpack.c.b16 %v1731, %v1727
    %v2208 = vpack.c.b16 %v1732, %v1728
    %v2209 = vpack.c.b16 %v1737, %v1733
    %v2210 = vpack.c.b16 %v1738, %v1734
    %v2211 = vpack.c.b16 %v1739, %v1735
    %v2212 = vpack.c.b16 %v1740, %v1736
    %v2213 = vpack.c.b16 %v1745, %v1741
    %v2214 = vpack.c.b16 %v1746, %v1742
    %v2215 = vpack.c.b16 %v1747, %v1743
    %v2216 = vpack.c.b16 %v1748, %v1744
    %v2217 = vpack.c.b16 %v1753, %v1749
    %v2218 = vpack.c.b16 %v1754, %v1750
    %v2219 = vpack.c.b16 %v1755, %v1751
    %v2220 = vpack.c.b16 %v1756, %v1752
    %v2221 = vpack.c.b16 %v1761, %v1757
    %v2222 = vpack.c.b16 %v1762, %v1758
    %v2223 = vpack.c.b16 %v1763, %v1759
    %v2224 = vpack.c.b16 %v1764, %v1760
    %v2225 = vpack.c.b16 %v1769, %v1765
    %v2226 = vpack.c.b16 %v1770, %v1766
    %v2227 = vpack.c.b16 %v1771, %v1767
    %v2228 = vpack.c.b16 %v1772, %v1768
    %v2229 = vpack.c.b16 %v1777, %v1773
    %v2230 = vpack.c.b16 %v1778, %v1774
    %v2231 = vpack.c.b16 %v1779, %v1775
    %v2232 = vpack.c.b16 %v1780, %v1776
    %v2233 = vpack.c.b16 %v1785, %v1781
    %v2234 = vpack.c.b16 %v1786, %v1782
    %v2235 = vpack.c.b16 %v1787, %v1783
    %v2236 = vpack.c.b16 %v1788, %v1784
    %v2237 = vpack.c.b16 %v1793, %v1789
    %v2238 = vpack.c.b16 %v1794, %v1790
    %v2239 = vpack.c.b16 %v1795, %v1791
    %v2240 = vpack.c.b16 %v1796, %v1792
    %v2241 = vpack.c.b16 %v1801, %v1797
    %v2242 = vpack.c.b16 %v1802, %v1798
    %v2243 = vpack.c.b16 %v1803, %v1799
    %v2244 = vpack.c.b16 %v1804, %v1800
    %v2245 = vpack.c.b16 %v1809, %v1805
    %v2246 = vpack.c.b16 %v1810, %v1806
    %v2247 = vpack.c.b16 %v1811, %v1807
    %v2248 = vpack.c.b16 %v1812, %v1808
    %v2249 = vpack.c.b16 %v1817, %v1813
    %v2250 = vpack.c.b16 %v1818, %v1814
    %v2251 = vpack.c.b16 %v1819, %v1815
    %v2252 = vpack.c.b16 %v1820, %v1816
    %v2253 = vpack.c.b16 %v1825, %v1821
    %v2254 = vpack.c.b16 %v1826, %v1822
    %v2255 = vpack.c.b16 %v1827, %v1823
    %v2256 = vpack.c.b16 %v1828, %v1824
    %v2257 = vpack.c.b16 %v1833, %v1829
    %v2258 = vpack.c.b16 %v1834, %v1830
    %v2259 = vpack.c.b16 %v1835, %v1831
    %v2260 = vpack.c.b16 %v1836, %v1832
    %v2261 = vpack.c.b16 %v1841, %v1837
    %v2262 = vpack.c.b16 %v1842, %v1838
    %v2263 = vpack.c.b16 %v1843, %v1839
    %v2264 = vpack.c.b16 %v1844, %v1840
    %v2265 = vpack.c.b16 %v1849, %v1845
    %v2266 = vpack.c.b16 %v1850, %v1846
    %v2267 = vpack.c.b16 %v1851, %v1847
    %v2268 = vpack.c.b16 %v1852, %v1848
    %v2269 = vpack.c.b16 %v1857, %v1853
    %v2270 = vpack.c.b16 %v1858, %v1854
    %v2271 = vpack.c.b16 %v1859, %v1855
    %v2272 = vpack.c.b16 %v1860, %v1856
    %v2273 = vpack.c.b16 %v1865, %v1861
    %v2274 = vpack.c.b16 %v1866, %v1862
    %v2275 = vpack.c.b16 %v1867, %v1863
    %v2276 = vpack.c.b16 %v1868, %v1864
    %v2277 = vpack.c.b16 %v1873, %v1869
    %v2278 = vpack.c.b16 %v1874, %v1870
    %v2279 = vpack.c.b16 %v1875, %v1871
    %v2280 = vpack.c.b16 %v1876, %v1872
    %v2281 = vpack.c.b16 %v1881, %v1877
    %v2282 = vpack.c.b16 %v1882, %v1878
    %v2283 = vpack.c.b16 %v1883, %v1879
    %v2284 = vpack.c.b16 %v1884, %v1880
    %v2285 = vpack.c.b16 %v1889, %v1885
    %v2286 = vpack.c.b16 %v1890, %v1886
    %v2287 = vpack.c.b16 %v1891, %v1887
    %v2288 = vpack.c.b16 %v1892, %v1888
    %v2289 = vpack.c.b16 %v1897, %v1893
    %v2290 = vpack.c.b16 %v1898, %v1894
    %v2291 = vpack.c.b16 %v1899, %v1895
    %v2292 = vpack.c.b16 %v1900, %v1896
    %v2293 = vpack.c.b16 %v1905, %v1901
    %v2294 = vpack.c.b16 %v1906, %v1902
    %v2295 = vpack.c.b16 %v1907, %v1903
    %v2296 = vpack.c.b16 %v1908, %v1904
    %v2297 = vpack.c.b16 %v1913, %v1909
    %v2298 = vpack.c.b16 %v1914, %v1910
    %v2299 = vpack.c.b16 %v1915, %v1911
    %v2300 = vpack.c.b16 %v1916, %v1912
    %v2301 = vpack.c.b16 %v1921, %v1917
    %v2302 = vpack.c.b16 %v1922, %v1918
    %v2303 = vpack.c.b16 %v1923, %v1919
    %v2304 = vpack.c.b16 %v1924, %v1920
    %v2305 = vpack.c.b16 %v1929, %v1925
    %v2306 = vpack.c.b16 %v1930, %v1926
    %v2307 = vpack.c.b16 %v1931, %v1927
    %v2308 = vpack.c.b16 %v1932, %v1928
    %v2309 = vpack.c.b16 %v1937, %v1933
    %v2310 = vpack.c.b16 %v1938, %v1934
    %v2311 = vpack.c.b16 %v1939, %v1935
    %v2312 = vpack.c.b16 %v1940, %v1936
    %v2313 = vpack.c.b16 %v1945, %v1941
    %v2314 = vpack.c.b16 %v1946, %v1942
    %v2315 = vpack.c.b16 %v1947, %v1943
    %v2316 = vpack.c.b16 %v1948, %v1944
    %v2317 = vpack.c.b16 %v1953, %v1949
    %v2318 = vpack.c.b16 %v1954, %v1950
    %v2319 = vpack.c.b16 %v1955, %v1951
    %v2320 = vpack.c.b16 %v1956, %v1952
    %v2321 = vpack.c.b16 %v1961, %v1957
    %v2322 = vpack.c.b16 %v1962, %v1958
    %v2323 = vpack.c.b16 %v1963, %v1959
    %v2324 = vpack.c.b16 %v1964, %v1960
    %v2325 = vpack.c.b16 %v1969, %v1965
    %v2326 = vpack.c.b16 %v1970, %v1966
    %v2327 = vpack.c.b16 %v1971, %v1967
    %v2328 = vpack.c.b16 %v1972, %v1968
    %v2329 = vpack.c.b16 %v1977, %v1973
    %v2330 = vpack.c.b16 %v1978, %v1974
    %v2331 = vpack.c.b16 %v1979, %v1975
    %v2332 = vpack.c.b16 %v1980, %v1976
    %v2333 = vpack.c.b16 %v1985, %v1981
    %v2334 = vpack.c.b16 %v1986, %v1982
    %v2335 = vpack.c.b16 %v1987, %v1983
    %v2336 = vpack.c.b16 %v1988, %v1984
    %v2337 = vpack.c.b16 %v1993, %v1989
    %v2338 = vpack.c.b16 %v1994, %v1990
    %v2339 = vpack.c.b16 %v1995, %v1991
    %v2340 = vpack.c.b16 %v1996, %v1992
    %v2341 = vpack.c.b16 %v2001, %v1997
    %v2342 = vpack.c.b16 %v2002, %v1998
    %v2343 = vpack.c.b16 %v2003, %v1999
    %v2344 = vpack.c.b16 %v2004, %v2000
    %v2345 = vpack.c.b16 %v2009, %v2005
    %v2346 = vpack.c.b16 %v2010, %v2006
    %v2347 = vpack.c.b16 %v2011, %v2007
    %v2348 = vpack.c.b16 %v2012, %v2008
    %v2349 = vpack.c.b16 %v2017, %v2013
    %v2350 = vpack.c.b16 %v2018, %v2014
    %v2351 = vpack.c.b16 %v2019, %v2015
    %v2352 = vpack.c.b16 %v2020, %v2016
    %v2353 = vpack.c.b16 %v2025, %v2021
    %v2354 = vpack.c.b16 %v2026, %v2022
    %v2355 = vpack.c.b16 %v2027, %v2023
    %v2356 = vpack.c.b16 %v2028, %v2024
    %v2357 = vpack.c.b16 %v2033, %v2029
    %v2358 = vpack.c.b16 %v2034, %v2030
    %v2359 = vpack.c.b16 %v2035, %v2031
    %v2360 = vpack.c.b16 %v2036, %v2032
    %v2361 = vpack.c.b16 %v2041, %v2037
    %v2362 = vpack.c.b16 %v2042, %v2038
    %v2363 = vpack.c.b16 %v2043, %v2039
    %v2364 = vpack.c.b16 %v2044, %v2040
    %v2365 = vpack.c.b16 %v2049, %v2045
    %v2366 = vpack.c.b16 %v2050, %v2046
    %v2367 = vpack.c.b16 %v2051, %v2047
    %v2368 = vpack.c.b16 %v2052, %v2048
    %v2369 = vpack.c.b16 %v2057, %v2053
    %v2370 = vpack.c.b16 %v2058, %v2054
    %v2371 = vpack.c.b16 %v2059, %v2055
    %v2372 = vpack.c.b16 %v2060, %v2056
    %v2373 = vpack.c.b16 %v2065, %v2061
    %v2374 = vpack.c.b16 %v2066, %v2062
    %v2375 = vpack.c.b16 %v2067, %v2063
    %v2376 = vpack.c.b16 %v2068, %v2064
    %v2377 = vpack.c.b16 %v2073, %v2069
    %v2378 = vpack.c.b16 %v2074, %v2070
    %v2379 = vpack.c.b16 %v2075, %v2071
    %v2380 = vpack.c.b16 %v2076, %v2072
    %v2381 = vpack.c.b16 %v2081, %v2077
    %v2382 = vpack.c.b16 %v2082, %v2078
    %v2383 = vpack.c.b16 %v2083, %v2079
    %v2384 = vpack.c.b16 %v2084, %v2080
    %v2385 = vpack.c.b16 %v2089, %v2085
    %v2386 = vpack.c.b16 %v2090, %v2086
    %v2387 = vpack.c.b16 %v2091, %v2087
    %v2388 = vpack.c.b16 %v2092, %v2088
    %v2389 = vpack.c.b16 %v2097, %v2093
    %v2390 = vpack.c.b16 %v2098, %v2094
    %v2391 = vpack.c.b16 %v2099, %v2095
    %v2392 = vpack.c.b16 %v2100, %v2096
    %v2393 = vpack.c.b16 %v2105, %v2101
    %v2394 = vpack.c.b16 %v2106, %v2102
    %v2395 = vpack.c.b16 %v2107, %v2103
    %v2396 = vpack.c.b16 %v2108, %v2104
    %v2397 = vpack.c.b16 %v2113, %v2109
    %v2398 = vpack.c.b16 %v2114, %v2110
    %v2399 = vpack.c.b16 %v2115, %v2111
    %v2400 = vpack.c.b16 %v2116, %v2112
    %v2401 = vpack.c.b16 %v2121, %v2117
    %v2402 = vpack.c.b16 %v2122, %v2118
    %v2403 = vpack.c.b16 %v2123, %v2119
    %v2404 = vpack.c.b16 %v2124, %v2120
    %v2405 = vpack.c.b16 %v2129, %v2125
    %v2406 = vpack.c.b16 %v2130, %v2126
    %v2407 = vpack.c.b16 %v2131, %v2127
    %v2408 = vpack.c.b16 %v2132, %v2128
    %v2409 = vpack.c.b16 %v2137, %v2133
    %v2410 = vpack.c.b16 %v2138, %v2134
    %v2411 = vpack.c.b16 %v2139, %v2135
    %v2412 = vpack.c.b16 %v2140, %v2136
    %v2413 = vpack.c.b16 %v2145, %v2141
    %v2414 = vpack.c.b16 %v2146, %v2142
    %v2415 = vpack.c.b16 %v2147, %v2143
    %v2416 = vpack.c.b16 %v2148, %v2144
    %v2417 = vpack.c.b16 %v2153, %v2149
    %v2418 = vpack.c.b16 %v2154, %v2150
    %v2419 = vpack.c.b16 %v2155, %v2151
    %v2420 = vpack.c.b16 %v2156, %v2152
    %v2421 = vpack.c.b16 %v2161, %v2157
    %v2422 = vpack.c.b16 %v2162, %v2158
    %v2423 = vpack.c.b16 %v2163, %v2159
    %v2424 = vpack.c.b16 %v2164, %v2160
    %v2425 = vpack.c.b16 %v2169, %v2165
    %v2426 = vpack.c.b16 %v2170, %v2166
    %v2427 = vpack.c.b16 %v2171, %v2167
    %v2428 = vpack.c.b16 %v2172, %v2168
    %2685 = vmatpush.bf16.msra.mxu0 %v2201
    %2686 = vmatpush.bf16.msra.mxu0 %v2197
    %2687 = vmatpush.bf16.msra.mxu0 %v2193
    %2688 = vmatpush.bf16.msra.mxu0 %v2189
    %2689 = vmatpush.bf16.msra.mxu0 %v2185
    %2690 = vmatpush.bf16.msra.mxu0 %v2181
    %2691 = vmatpush.bf16.msra.mxu0 %v2177
    %2692 = vmatpush.bf16.msra.mxu0 %v2173
    %2693 = vmatmul.bf16.gmra.mxu0 %v1131
    %v2694 = vpop.f32.mrf.mxu0
    %v2695 = vadd.f32 %v1397, %v2694
    %v2696 = vpop.f32.mrf.mxu0
    %2697 = vdwg.mxu0
    %2698 = vmatpush.bf16.msra.mxu0 %v2233
    %2699 = vmatpush.bf16.msra.mxu0 %v2229
    %2700 = vmatpush.bf16.msra.mxu0 %v2225
    %2701 = vmatpush.bf16.msra.mxu0 %v2221
    %2702 = vmatpush.bf16.msra.mxu0 %v2217
    %2703 = vmatpush.bf16.msra.mxu0 %v2213
    %2704 = vmatpush.bf16.msra.mxu0 %v2209
    %2705 = vmatpush.bf16.msra.mxu0 %v2205
    %2706 = vmatmul.bf16.gmra.mxu0 %v1132
    %v2707 = vpop.f32.mrf.mxu0
    %v2708 = vadd.f32 %v2695, %v2707
    %v2709 = vpop.f32.mrf.mxu0
    %2710 = vdwg.mxu0
    %2711 = vmatpush.bf16.msra.mxu0 %v2265
    %2712 = vmatpush.bf16.msra.mxu0 %v2261
    %2713 = vmatpush.bf16.msra.mxu0 %v2257
    %2714 = vmatpush.bf16.msra.mxu0 %v2253
    %2715 = vmatpush.bf16.msra.mxu0 %v2249
    %2716 = vmatpush.bf16.msra.mxu0 %v2245
    %2717 = vmatpush.bf16.msra.mxu0 %v2241
    %2718 = vmatpush.bf16.msra.mxu0 %v2237
    %2719 = vmatmul.bf16.gmra.mxu0 %v1133
    %v2720 = vpop.f32.mrf.mxu0
    %v2721 = vadd.f32 %v2708, %v2720
    %v2722 = vpop.f32.mrf.mxu0
    %2723 = vdwg.mxu0
    %2724 = vmatpush.bf16.msra.mxu0 %v2297
    %2725 = vmatpush.bf16.msra.mxu0 %v2293
    %2726 = vmatpush.bf16.msra.mxu0 %v2289
    %2727 = vmatpush.bf16.msra.mxu0 %v2285
    %2728 = vmatpush.bf16.msra.mxu0 %v2281
    %2729 = vmatpush.bf16.msra.mxu0 %v2277
    %2730 = vmatpush.bf16.msra.mxu0 %v2273
    %2731 = vmatpush.bf16.msra.mxu0 %v2269
    %2732 = vmatmul.bf16.gmra.mxu0 %v1134
    %v2733 = vpop.f32.mrf.mxu0
    %v2734 = vadd.f32 %v2721, %v2733
    %v2735 = vpop.f32.mrf.mxu0
    %2736 = vdwg.mxu0
    %2737 = vmatpush.bf16.msra.mxu0 %v2329
    %2738 = vmatpush.bf16.msra.mxu0 %v2325
    %2739 = vmatpush.bf16.msra.mxu0 %v2321
    %2740 = vmatpush.bf16.msra.mxu0 %v2317
    %2741 = vmatpush.bf16.msra.mxu0 %v2313
    %2742 = vmatpush.bf16.msra.mxu0 %v2309
    %2743 = vmatpush.bf16.msra.mxu0 %v2305
    %2744 = vmatpush.bf16.msra.mxu0 %v2301
    %2745 = vmatmul.bf16.gmra.mxu0 %v1135
    %v2746 = vpop.f32.mrf.mxu0
    %v2747 = vadd.f32 %v2734, %v2746
    %v2748 = vpop.f32.mrf.mxu0
    %2749 = vdwg.mxu0
    %2750 = vmatpush.bf16.msra.mxu0 %v2361
    %2751 = vmatpush.bf16.msra.mxu0 %v2357
    %2752 = vmatpush.bf16.msra.mxu0 %v2353
    %2753 = vmatpush.bf16.msra.mxu0 %v2349
    %2754 = vmatpush.bf16.msra.mxu0 %v2345
    %2755 = vmatpush.bf16.msra.mxu0 %v2341
    %2756 = vmatpush.bf16.msra.mxu0 %v2337
    %2757 = vmatpush.bf16.msra.mxu0 %v2333
    %2758 = vmatmul.bf16.gmra.mxu0 %v1136
    %v2759 = vpop.f32.mrf.mxu0
    %v2760 = vadd.f32 %v2747, %v2759
    %v2761 = vpop.f32.mrf.mxu0
    %2762 = vdwg.mxu0
    %2763 = vmatpush.bf16.msra.mxu0 %v2393
    %2764 = vmatpush.bf16.msra.mxu0 %v2389
    %2765 = vmatpush.bf16.msra.mxu0 %v2385
    %2766 = vmatpush.bf16.msra.mxu0 %v2381
    %2767 = vmatpush.bf16.msra.mxu0 %v2377
    %2768 = vmatpush.bf16.msra.mxu0 %v2373
    %2769 = vmatpush.bf16.msra.mxu0 %v2369
    %2770 = vmatpush.bf16.msra.mxu0 %v2365
    %2771 = vmatmul.bf16.gmra.mxu0 %v1137
    %v2772 = vpop.f32.mrf.mxu0
    %v2773 = vadd.f32 %v2760, %v2772
    %v2774 = vpop.f32.mrf.mxu0
    %2775 = vdwg.mxu0
    %2776 = vmatpush.bf16.msra.mxu0 %v2425
    %2777 = vmatpush.bf16.msra.mxu0 %v2421
    %2778 = vmatpush.bf16.msra.mxu0 %v2417
    %2779 = vmatpush.bf16.msra.mxu0 %v2413
    %2780 = vmatpush.bf16.msra.mxu0 %v2409
    %2781 = vmatpush.bf16.msra.mxu0 %v2405
    %2782 = vmatpush.bf16.msra.mxu0 %v2401
    %2783 = vmatpush.bf16.msra.mxu0 %v2397
    %2784 = vmatmul.bf16.gmra.mxu0 %v1138
    %v2785 = vpop.f32.mrf.mxu0
    %v2786 = vadd.f32 %v2773, %v2785
    %v2787 = vpop.f32.mrf.mxu0
    %2788 = vdwg.mxu0
    %2789 = vmatpush.bf16.msra.mxu0 %v2202
    %2790 = vmatpush.bf16.msra.mxu0 %v2198
    %2791 = vmatpush.bf16.msra.mxu0 %v2194
    %2792 = vmatpush.bf16.msra.mxu0 %v2190
    %2793 = vmatpush.bf16.msra.mxu0 %v2186
    %2794 = vmatpush.bf16.msra.mxu0 %v2182
    %2795 = vmatpush.bf16.msra.mxu0 %v2178
    %2796 = vmatpush.bf16.msra.mxu0 %v2174
    %2797 = vmatmul.bf16.gmra.mxu0 %v1131
    %v2798 = vpop.f32.mrf.mxu0
    %v2799 = vadd.f32 %v1398, %v2798
    %v2800 = vpop.f32.mrf.mxu0
    %2801 = vdwg.mxu0
    %2802 = vmatpush.bf16.msra.mxu0 %v2234
    %2803 = vmatpush.bf16.msra.mxu0 %v2230
    %2804 = vmatpush.bf16.msra.mxu0 %v2226
    %2805 = vmatpush.bf16.msra.mxu0 %v2222
    %2806 = vmatpush.bf16.msra.mxu0 %v2218
    %2807 = vmatpush.bf16.msra.mxu0 %v2214
    %2808 = vmatpush.bf16.msra.mxu0 %v2210
    %2809 = vmatpush.bf16.msra.mxu0 %v2206
    %2810 = vmatmul.bf16.gmra.mxu0 %v1132
    %v2811 = vpop.f32.mrf.mxu0
    %v2812 = vadd.f32 %v2799, %v2811
    %v2813 = vpop.f32.mrf.mxu0
    %2814 = vdwg.mxu0
    %2815 = vmatpush.bf16.msra.mxu0 %v2266
    %2816 = vmatpush.bf16.msra.mxu0 %v2262
    %2817 = vmatpush.bf16.msra.mxu0 %v2258
    %2818 = vmatpush.bf16.msra.mxu0 %v2254
    %2819 = vmatpush.bf16.msra.mxu0 %v2250
    %2820 = vmatpush.bf16.msra.mxu0 %v2246
    %2821 = vmatpush.bf16.msra.mxu0 %v2242
    %2822 = vmatpush.bf16.msra.mxu0 %v2238
    %2823 = vmatmul.bf16.gmra.mxu0 %v1133
    %v2824 = vpop.f32.mrf.mxu0
    %v2825 = vadd.f32 %v2812, %v2824
    %v2826 = vpop.f32.mrf.mxu0
    %2827 = vdwg.mxu0
    %2828 = vmatpush.bf16.msra.mxu0 %v2298
    %2829 = vmatpush.bf16.msra.mxu0 %v2294
    %2830 = vmatpush.bf16.msra.mxu0 %v2290
    %2831 = vmatpush.bf16.msra.mxu0 %v2286
    %2832 = vmatpush.bf16.msra.mxu0 %v2282
    %2833 = vmatpush.bf16.msra.mxu0 %v2278
    %2834 = vmatpush.bf16.msra.mxu0 %v2274
    %2835 = vmatpush.bf16.msra.mxu0 %v2270
    %2836 = vmatmul.bf16.gmra.mxu0 %v1134
    %v2837 = vpop.f32.mrf.mxu0
    %v2838 = vadd.f32 %v2825, %v2837
    %v2839 = vpop.f32.mrf.mxu0
    %2840 = vdwg.mxu0
    %2841 = vmatpush.bf16.msra.mxu0 %v2330
    %2842 = vmatpush.bf16.msra.mxu0 %v2326
    %2843 = vmatpush.bf16.msra.mxu0 %v2322
    %2844 = vmatpush.bf16.msra.mxu0 %v2318
    %2845 = vmatpush.bf16.msra.mxu0 %v2314
    %2846 = vmatpush.bf16.msra.mxu0 %v2310
    %2847 = vmatpush.bf16.msra.mxu0 %v2306
    %2848 = vmatpush.bf16.msra.mxu0 %v2302
    %2849 = vmatmul.bf16.gmra.mxu0 %v1135
    %v2850 = vpop.f32.mrf.mxu0
    %v2851 = vadd.f32 %v2838, %v2850
    %v2852 = vpop.f32.mrf.mxu0
    %2853 = vdwg.mxu0
    %2854 = vmatpush.bf16.msra.mxu0 %v2362
    %2855 = vmatpush.bf16.msra.mxu0 %v2358
    %2856 = vmatpush.bf16.msra.mxu0 %v2354
    %2857 = vmatpush.bf16.msra.mxu0 %v2350
    %2858 = vmatpush.bf16.msra.mxu0 %v2346
    %2859 = vmatpush.bf16.msra.mxu0 %v2342
    %2860 = vmatpush.bf16.msra.mxu0 %v2338
    %2861 = vmatpush.bf16.msra.mxu0 %v2334
    %2862 = vmatmul.bf16.gmra.mxu0 %v1136
    %v2863 = vpop.f32.mrf.mxu0
    %v2864 = vadd.f32 %v2851, %v2863
    %v2865 = vpop.f32.mrf.mxu0
    %2866 = vdwg.mxu0
    %2867 = vmatpush.bf16.msra.mxu0 %v2394
    %2868 = vmatpush.bf16.msra.mxu0 %v2390
    %2869 = vmatpush.bf16.msra.mxu0 %v2386
    %2870 = vmatpush.bf16.msra.mxu0 %v2382
    %2871 = vmatpush.bf16.msra.mxu0 %v2378
    %2872 = vmatpush.bf16.msra.mxu0 %v2374
    %2873 = vmatpush.bf16.msra.mxu0 %v2370
    %2874 = vmatpush.bf16.msra.mxu0 %v2366
    %2875 = vmatmul.bf16.gmra.mxu0 %v1137
    %v2876 = vpop.f32.mrf.mxu0
    %v2877 = vadd.f32 %v2864, %v2876
    %v2878 = vpop.f32.mrf.mxu0
    %2879 = vdwg.mxu0
    %2880 = vmatpush.bf16.msra.mxu0 %v2426
    %2881 = vmatpush.bf16.msra.mxu0 %v2422
    %2882 = vmatpush.bf16.msra.mxu0 %v2418
    %2883 = vmatpush.bf16.msra.mxu0 %v2414
    %2884 = vmatpush.bf16.msra.mxu0 %v2410
    %2885 = vmatpush.bf16.msra.mxu0 %v2406
    %2886 = vmatpush.bf16.msra.mxu0 %v2402
    %2887 = vmatpush.bf16.msra.mxu0 %v2398
    %2888 = vmatmul.bf16.gmra.mxu0 %v1138
    %v2889 = vpop.f32.mrf.mxu0
    %v2890 = vadd.f32 %v2877, %v2889
    %v2891 = vpop.f32.mrf.mxu0
    %2892 = vdwg.mxu0
    %2893 = vmatpush.bf16.msra.mxu0 %v2203
    %2894 = vmatpush.bf16.msra.mxu0 %v2199
    %2895 = vmatpush.bf16.msra.mxu0 %v2195
    %2896 = vmatpush.bf16.msra.mxu0 %v2191
    %2897 = vmatpush.bf16.msra.mxu0 %v2187
    %2898 = vmatpush.bf16.msra.mxu0 %v2183
    %2899 = vmatpush.bf16.msra.mxu0 %v2179
    %2900 = vmatpush.bf16.msra.mxu0 %v2175
    %2901 = vmatmul.bf16.gmra.mxu0 %v1131
    %v2902 = vpop.f32.mrf.mxu0
    %v2903 = vadd.f32 %v1399, %v2902
    %v2904 = vpop.f32.mrf.mxu0
    %2905 = vdwg.mxu0
    %2906 = vmatpush.bf16.msra.mxu0 %v2235
    %2907 = vmatpush.bf16.msra.mxu0 %v2231
    %2908 = vmatpush.bf16.msra.mxu0 %v2227
    %2909 = vmatpush.bf16.msra.mxu0 %v2223
    %2910 = vmatpush.bf16.msra.mxu0 %v2219
    %2911 = vmatpush.bf16.msra.mxu0 %v2215
    %2912 = vmatpush.bf16.msra.mxu0 %v2211
    %2913 = vmatpush.bf16.msra.mxu0 %v2207
    %2914 = vmatmul.bf16.gmra.mxu0 %v1132
    %v2915 = vpop.f32.mrf.mxu0
    %v2916 = vadd.f32 %v2903, %v2915
    %v2917 = vpop.f32.mrf.mxu0
    %2918 = vdwg.mxu0
    %2919 = vmatpush.bf16.msra.mxu0 %v2267
    %2920 = vmatpush.bf16.msra.mxu0 %v2263
    %2921 = vmatpush.bf16.msra.mxu0 %v2259
    %2922 = vmatpush.bf16.msra.mxu0 %v2255
    %2923 = vmatpush.bf16.msra.mxu0 %v2251
    %2924 = vmatpush.bf16.msra.mxu0 %v2247
    %2925 = vmatpush.bf16.msra.mxu0 %v2243
    %2926 = vmatpush.bf16.msra.mxu0 %v2239
    %2927 = vmatmul.bf16.gmra.mxu0 %v1133
    %v2928 = vpop.f32.mrf.mxu0
    %v2929 = vadd.f32 %v2916, %v2928
    %v2930 = vpop.f32.mrf.mxu0
    %2931 = vdwg.mxu0
    %2932 = vmatpush.bf16.msra.mxu0 %v2299
    %2933 = vmatpush.bf16.msra.mxu0 %v2295
    %2934 = vmatpush.bf16.msra.mxu0 %v2291
    %2935 = vmatpush.bf16.msra.mxu0 %v2287
    %2936 = vmatpush.bf16.msra.mxu0 %v2283
    %2937 = vmatpush.bf16.msra.mxu0 %v2279
    %2938 = vmatpush.bf16.msra.mxu0 %v2275
    %2939 = vmatpush.bf16.msra.mxu0 %v2271
    %2940 = vmatmul.bf16.gmra.mxu0 %v1134
    %v2941 = vpop.f32.mrf.mxu0
    %v2942 = vadd.f32 %v2929, %v2941
    %v2943 = vpop.f32.mrf.mxu0
    %2944 = vdwg.mxu0
    %2945 = vmatpush.bf16.msra.mxu0 %v2331
    %2946 = vmatpush.bf16.msra.mxu0 %v2327
    %2947 = vmatpush.bf16.msra.mxu0 %v2323
    %2948 = vmatpush.bf16.msra.mxu0 %v2319
    %2949 = vmatpush.bf16.msra.mxu0 %v2315
    %2950 = vmatpush.bf16.msra.mxu0 %v2311
    %2951 = vmatpush.bf16.msra.mxu0 %v2307
    %2952 = vmatpush.bf16.msra.mxu0 %v2303
    %2953 = vmatmul.bf16.gmra.mxu0 %v1135
    %v2954 = vpop.f32.mrf.mxu0
    %v2955 = vadd.f32 %v2942, %v2954
    %v2956 = vpop.f32.mrf.mxu0
    %2957 = vdwg.mxu0
    %2958 = vmatpush.bf16.msra.mxu0 %v2363
    %2959 = vmatpush.bf16.msra.mxu0 %v2359
    %2960 = vmatpush.bf16.msra.mxu0 %v2355
    %2961 = vmatpush.bf16.msra.mxu0 %v2351
    %2962 = vmatpush.bf16.msra.mxu0 %v2347
    %2963 = vmatpush.bf16.msra.mxu0 %v2343
    %2964 = vmatpush.bf16.msra.mxu0 %v2339
    %2965 = vmatpush.bf16.msra.mxu0 %v2335
    %2966 = vmatmul.bf16.gmra.mxu0 %v1136
    %v2967 = vpop.f32.mrf.mxu0
    %v2968 = vadd.f32 %v2955, %v2967
    %v2969 = vpop.f32.mrf.mxu0
    %2970 = vdwg.mxu0
    %2971 = vmatpush.bf16.msra.mxu0 %v2395
    %2972 = vmatpush.bf16.msra.mxu0 %v2391
    %2973 = vmatpush.bf16.msra.mxu0 %v2387
    %2974 = vmatpush.bf16.msra.mxu0 %v2383
    %2975 = vmatpush.bf16.msra.mxu0 %v2379
    %2976 = vmatpush.bf16.msra.mxu0 %v2375
    %2977 = vmatpush.bf16.msra.mxu0 %v2371
    %2978 = vmatpush.bf16.msra.mxu0 %v2367
    %2979 = vmatmul.bf16.gmra.mxu0 %v1137
    %v2980 = vpop.f32.mrf.mxu0
    %v2981 = vadd.f32 %v2968, %v2980
    %v2982 = vpop.f32.mrf.mxu0
    %2983 = vdwg.mxu0
    %2984 = vmatpush.bf16.msra.mxu0 %v2427
    %2985 = vmatpush.bf16.msra.mxu0 %v2423
    %2986 = vmatpush.bf16.msra.mxu0 %v2419
    %2987 = vmatpush.bf16.msra.mxu0 %v2415
    %2988 = vmatpush.bf16.msra.mxu0 %v2411
    %2989 = vmatpush.bf16.msra.mxu0 %v2407
    %2990 = vmatpush.bf16.msra.mxu0 %v2403
    %2991 = vmatpush.bf16.msra.mxu0 %v2399
    %2992 = vmatmul.bf16.gmra.mxu0 %v1138
    %v2993 = vpop.f32.mrf.mxu0
    %v2994 = vadd.f32 %v2981, %v2993
    %v2995 = vpop.f32.mrf.mxu0
    %2996 = vdwg.mxu0
    %2997 = vmatpush.bf16.msra.mxu0 %v2204
    %2998 = vmatpush.bf16.msra.mxu0 %v2200
    %2999 = vmatpush.bf16.msra.mxu0 %v2196
    %3000 = vmatpush.bf16.msra.mxu0 %v2192
    %3001 = vmatpush.bf16.msra.mxu0 %v2188
    %3002 = vmatpush.bf16.msra.mxu0 %v2184
    %3003 = vmatpush.bf16.msra.mxu0 %v2180
    %3004 = vmatpush.bf16.msra.mxu0 %v2176
    %3005 = vmatmul.bf16.gmra.mxu0 %v1131
    %v3006 = vpop.f32.mrf.mxu0
    %v3007 = vadd.f32 %v1400, %v3006
    %v3008 = vpop.f32.mrf.mxu0
    %3009 = vdwg.mxu0
    %3010 = vmatpush.bf16.msra.mxu0 %v2236
    %3011 = vmatpush.bf16.msra.mxu0 %v2232
    %3012 = vmatpush.bf16.msra.mxu0 %v2228
    %3013 = vmatpush.bf16.msra.mxu0 %v2224
    %3014 = vmatpush.bf16.msra.mxu0 %v2220
    %3015 = vmatpush.bf16.msra.mxu0 %v2216
    %3016 = vmatpush.bf16.msra.mxu0 %v2212
    %3017 = vmatpush.bf16.msra.mxu0 %v2208
    %3018 = vmatmul.bf16.gmra.mxu0 %v1132
    %v3019 = vpop.f32.mrf.mxu0
    %v3020 = vadd.f32 %v3007, %v3019
    %v3021 = vpop.f32.mrf.mxu0
    %3022 = vdwg.mxu0
    %3023 = vmatpush.bf16.msra.mxu0 %v2268
    %3024 = vmatpush.bf16.msra.mxu0 %v2264
    %3025 = vmatpush.bf16.msra.mxu0 %v2260
    %3026 = vmatpush.bf16.msra.mxu0 %v2256
    %3027 = vmatpush.bf16.msra.mxu0 %v2252
    %3028 = vmatpush.bf16.msra.mxu0 %v2248
    %3029 = vmatpush.bf16.msra.mxu0 %v2244
    %3030 = vmatpush.bf16.msra.mxu0 %v2240
    %3031 = vmatmul.bf16.gmra.mxu0 %v1133
    %v3032 = vpop.f32.mrf.mxu0
    %v3033 = vadd.f32 %v3020, %v3032
    %v3034 = vpop.f32.mrf.mxu0
    %3035 = vdwg.mxu0
    %3036 = vmatpush.bf16.msra.mxu0 %v2300
    %3037 = vmatpush.bf16.msra.mxu0 %v2296
    %3038 = vmatpush.bf16.msra.mxu0 %v2292
    %3039 = vmatpush.bf16.msra.mxu0 %v2288
    %3040 = vmatpush.bf16.msra.mxu0 %v2284
    %3041 = vmatpush.bf16.msra.mxu0 %v2280
    %3042 = vmatpush.bf16.msra.mxu0 %v2276
    %3043 = vmatpush.bf16.msra.mxu0 %v2272
    %3044 = vmatmul.bf16.gmra.mxu0 %v1134
    %v3045 = vpop.f32.mrf.mxu0
    %v3046 = vadd.f32 %v3033, %v3045
    %v3047 = vpop.f32.mrf.mxu0
    %3048 = vdwg.mxu0
    %3049 = vmatpush.bf16.msra.mxu0 %v2332
    %3050 = vmatpush.bf16.msra.mxu0 %v2328
    %3051 = vmatpush.bf16.msra.mxu0 %v2324
    %3052 = vmatpush.bf16.msra.mxu0 %v2320
    %3053 = vmatpush.bf16.msra.mxu0 %v2316
    %3054 = vmatpush.bf16.msra.mxu0 %v2312
    %3055 = vmatpush.bf16.msra.mxu0 %v2308
    %3056 = vmatpush.bf16.msra.mxu0 %v2304
    %3057 = vmatmul.bf16.gmra.mxu0 %v1135
    %v3058 = vpop.f32.mrf.mxu0
    %v3059 = vadd.f32 %v3046, %v3058
    %v3060 = vpop.f32.mrf.mxu0
    %3061 = vdwg.mxu0
    %3062 = vmatpush.bf16.msra.mxu0 %v2364
    %3063 = vmatpush.bf16.msra.mxu0 %v2360
    %3064 = vmatpush.bf16.msra.mxu0 %v2356
    %3065 = vmatpush.bf16.msra.mxu0 %v2352
    %3066 = vmatpush.bf16.msra.mxu0 %v2348
    %3067 = vmatpush.bf16.msra.mxu0 %v2344
    %3068 = vmatpush.bf16.msra.mxu0 %v2340
    %3069 = vmatpush.bf16.msra.mxu0 %v2336
    %3070 = vmatmul.bf16.gmra.mxu0 %v1136
    %v3071 = vpop.f32.mrf.mxu0
    %v3072 = vadd.f32 %v3059, %v3071
    %v3073 = vpop.f32.mrf.mxu0
    %3074 = vdwg.mxu0
    %3075 = vmatpush.bf16.msra.mxu0 %v2396
    %3076 = vmatpush.bf16.msra.mxu0 %v2392
    %3077 = vmatpush.bf16.msra.mxu0 %v2388
    %3078 = vmatpush.bf16.msra.mxu0 %v2384
    %3079 = vmatpush.bf16.msra.mxu0 %v2380
    %3080 = vmatpush.bf16.msra.mxu0 %v2376
    %3081 = vmatpush.bf16.msra.mxu0 %v2372
    %3082 = vmatpush.bf16.msra.mxu0 %v2368
    %3083 = vmatmul.bf16.gmra.mxu0 %v1137
    %v3084 = vpop.f32.mrf.mxu0
    %v3085 = vadd.f32 %v3072, %v3084
    %v3086 = vpop.f32.mrf.mxu0
    %3087 = vdwg.mxu0
    %3088 = vmatpush.bf16.msra.mxu0 %v2428
    %3089 = vmatpush.bf16.msra.mxu0 %v2424
    %3090 = vmatpush.bf16.msra.mxu0 %v2420
    %3091 = vmatpush.bf16.msra.mxu0 %v2416
    %3092 = vmatpush.bf16.msra.mxu0 %v2412
    %3093 = vmatpush.bf16.msra.mxu0 %v2408
    %3094 = vmatpush.bf16.msra.mxu0 %v2404
    %3095 = vmatpush.bf16.msra.mxu0 %v2400
    %3096 = vmatmul.bf16.gmra.mxu0 %v1138
    %v3097 = vpop.f32.mrf.mxu0
    %v3098 = vadd.f32 %v3085, %v3097
    %v3099 = vpop.f32.mrf.mxu0
    %3100 = vdwg.mxu0
    %v3101 = vmax.f32 %v2786, 0.0
    %v3102 = vmax.f32 %v2890, 0.0
    %v3103 = vmax.f32 %v2994, 0.0
    %v3104 = vmax.f32 %v3098, 0.0
    %v3105 = vpack.c.bf16 %v3101, %v3101
    %v3106 = vpack.c.bf16 %v3102, %v3102
    %v3107 = vpack.c.bf16 %v3103, %v3103
    %v3108 = vpack.c.bf16 %v3104, %v3104
    %v3109 = vld [vmem:[#allocation7] sm:$0xff]
    %v3110 = vld [vmem:[#allocation7 + $0x8] sm:$0xff]
    %v3111 = vld [vmem:[#allocation7 + $0x10] sm:$0xff]
    %v3112 = vld [vmem:[#allocation7 + $0x18] sm:$0xff]
    %v3113 = vld [vmem:[#allocation7 + $0x20] sm:$0xff]
    %v3114 = vld [vmem:[#allocation7 + $0x28] sm:$0xff]
    %v3115 = vld [vmem:[#allocation7 + $0x30] sm:$0xff]
    %v3116 = vld [vmem:[#allocation7 + $0x38] sm:$0xff]
    %v3117 = vld [vmem:[#allocation7 + $0x40] sm:$0xff]
    %v3118 = vld [vmem:[#allocation7 + $0x48] sm:$0xff]
    %v3119 = vld [vmem:[#allocation7 + $0x50] sm:$0xff]
    %v3120 = vld [vmem:[#allocation7 + $0x58] sm:$0xff]
    %v3121 = vld [vmem:[#allocation7 + $0x60] sm:$0xff]
    %v3122 = vld [vmem:[#allocation7 + $0x68] sm:$0xff]
    %v3123 = vld [vmem:[#allocation7 + $0x70] sm:$0xff]
    %v3124 = vld [vmem:[#allocation7 + $0x78] sm:$0xff]
    %v3125 = vld [vmem:[#allocation7 + $0x80] sm:$0xff]
    %v3126 = vld [vmem:[#allocation7 + $0x88] sm:$0xff]
    %v3127 = vld [vmem:[#allocation7 + $0x90] sm:$0xff]
    %v3128 = vld [vmem:[#allocation7 + $0x98] sm:$0xff]
    %v3129 = vld [vmem:[#allocation7 + $0xa0] sm:$0xff]
    %v3130 = vld [vmem:[#allocation7 + $0xa8] sm:$0xff]
    %v3131 = vld [vmem:[#allocation7 + $0xb0] sm:$0xff]
    %v3132 = vld [vmem:[#allocation7 + $0xb8] sm:$0xff]
    %v3133 = vld [vmem:[#allocation7 + $0xc0] sm:$0xff]
    %v3134 = vld [vmem:[#allocation7 + $0xc8] sm:$0xff]
    %v3135 = vld [vmem:[#allocation7 + $0xd0] sm:$0xff]
    %v3136 = vld [vmem:[#allocation7 + $0xd8] sm:$0xff]
    %v3137 = vld [vmem:[#allocation7 + $0xe0] sm:$0xff]
    %v3138 = vld [vmem:[#allocation7 + $0xe8] sm:$0xff]
    %v3139 = vld [vmem:[#allocation7 + $0xf0] sm:$0xff]
    %v3140 = vld [vmem:[#allocation7 + $0xf8] sm:$0xff]
    %v3141 = vld [vmem:[#allocation7 + $0x100] sm:$0xff]
    %v3142 = vld [vmem:[#allocation7 + $0x108] sm:$0xff]
    %v3143 = vld [vmem:[#allocation7 + $0x110] sm:$0xff]
    %v3144 = vld [vmem:[#allocation7 + $0x118] sm:$0xff]
    %v3145 = vld [vmem:[#allocation7 + $0x120] sm:$0xff]
    %v3146 = vld [vmem:[#allocation7 + $0x128] sm:$0xff]
    %v3147 = vld [vmem:[#allocation7 + $0x130] sm:$0xff]
    %v3148 = vld [vmem:[#allocation7 + $0x138] sm:$0xff]
    %v3149 = vld [vmem:[#allocation7 + $0x140] sm:$0xff]
    %v3150 = vld [vmem:[#allocation7 + $0x148] sm:$0xff]
    %v3151 = vld [vmem:[#allocation7 + $0x150] sm:$0xff]
    %v3152 = vld [vmem:[#allocation7 + $0x158] sm:$0xff]
    %v3153 = vld [vmem:[#allocation7 + $0x160] sm:$0xff]
    %v3154 = vld [vmem:[#allocation7 + $0x168] sm:$0xff]
    %v3155 = vld [vmem:[#allocation7 + $0x170] sm:$0xff]
    %v3156 = vld [vmem:[#allocation7 + $0x178] sm:$0xff]
    %v3157 = vld [vmem:[#allocation7 + $0x180] sm:$0xff]
    %v3158 = vld [vmem:[#allocation7 + $0x188] sm:$0xff]
    %v3159 = vld [vmem:[#allocation7 + $0x190] sm:$0xff]
    %v3160 = vld [vmem:[#allocation7 + $0x198] sm:$0xff]
    %v3161 = vld [vmem:[#allocation7 + $0x1a0] sm:$0xff]
    %v3162 = vld [vmem:[#allocation7 + $0x1a8] sm:$0xff]
    %v3163 = vld [vmem:[#allocation7 + $0x1b0] sm:$0xff]
    %v3164 = vld [vmem:[#allocation7 + $0x1b8] sm:$0xff]
    %v3165 = vld [vmem:[#allocation7 + $0x1c0] sm:$0xff]
    %v3166 = vld [vmem:[#allocation7 + $0x1c8] sm:$0xff]
    %v3167 = vld [vmem:[#allocation7 + $0x1d0] sm:$0xff]
    %v3168 = vld [vmem:[#allocation7 + $0x1d8] sm:$0xff]
    %v3169 = vld [vmem:[#allocation7 + $0x1e0] sm:$0xff]
    %v3170 = vld [vmem:[#allocation7 + $0x1e8] sm:$0xff]
    %v3171 = vld [vmem:[#allocation7 + $0x1f0] sm:$0xff]
    %v3172 = vld [vmem:[#allocation7 + $0x1f8] sm:$0xff]
    %v3173 = vld [vmem:[%s7] sm:$0x3]
    %v3175 = vperm.slane %v3173, 0
    %v3176 = vperm.slane %v3173, 1
    %v3243 = vunpack.c.l.b16 %v3109
    %v3244 = vunpack.c.h.b16 %v3109
    %v3245 = vunpack.c.l.b16 %v3110
    %v3246 = vunpack.c.h.b16 %v3110
    %v3247 = vunpack.c.l.b16 %v3111
    %v3248 = vunpack.c.h.b16 %v3111
    %v3249 = vunpack.c.l.b16 %v3112
    %v3250 = vunpack.c.h.b16 %v3112
    %v3251 = vunpack.c.l.b16 %v3113
    %v3252 = vunpack.c.h.b16 %v3113
    %v3253 = vunpack.c.l.b16 %v3114
    %v3254 = vunpack.c.h.b16 %v3114
    %v3255 = vunpack.c.l.b16 %v3115
    %v3256 = vunpack.c.h.b16 %v3115
    %v3257 = vunpack.c.l.b16 %v3116
    %v3258 = vunpack.c.h.b16 %v3116
    %v3259 = vunpack.c.l.b16 %v3117
    %v3260 = vunpack.c.h.b16 %v3117
    %v3261 = vunpack.c.l.b16 %v3118
    %v3262 = vunpack.c.h.b16 %v3118
    %v3263 = vunpack.c.l.b16 %v3119
    %v3264 = vunpack.c.h.b16 %v3119
    %v3265 = vunpack.c.l.b16 %v3120
    %v3266 = vunpack.c.h.b16 %v3120
    %v3267 = vunpack.c.l.b16 %v3121
    %v3268 = vunpack.c.h.b16 %v3121
    %v3269 = vunpack.c.l.b16 %v3122
    %v3270 = vunpack.c.h.b16 %v3122
    %v3271 = vunpack.c.l.b16 %v3123
    %v3272 = vunpack.c.h.b16 %v3123
    %v3273 = vunpack.c.l.b16 %v3124
    %v3274 = vunpack.c.h.b16 %v3124
    %v3275 = vunpack.c.l.b16 %v3125
    %v3276 = vunpack.c.h.b16 %v3125
    %v3277 = vunpack.c.l.b16 %v3126
    %v3278 = vunpack.c.h.b16 %v3126
    %v3279 = vunpack.c.l.b16 %v3127
    %v3280 = vunpack.c.h.b16 %v3127
    %v3281 = vunpack.c.l.b16 %v3128
    %v3282 = vunpack.c.h.b16 %v3128
    %v3283 = vunpack.c.l.b16 %v3129
    %v3284 = vunpack.c.h.b16 %v3129
    %v3285 = vunpack.c.l.b16 %v3130
    %v3286 = vunpack.c.h.b16 %v3130
    %v3287 = vunpack.c.l.b16 %v3131
    %v3288 = vunpack.c.h.b16 %v3131
    %v3289 = vunpack.c.l.b16 %v3132
    %v3290 = vunpack.c.h.b16 %v3132
    %v3291 = vunpack.c.l.b16 %v3133
    %v3292 = vunpack.c.h.b16 %v3133
    %v3293 = vunpack.c.l.b16 %v3134
    %v3294 = vunpack.c.h.b16 %v3134
    %v3295 = vunpack.c.l.b16 %v3135
    %v3296 = vunpack.c.h.b16 %v3135
    %v3297 = vunpack.c.l.b16 %v3136
    %v3298 = vunpack.c.h.b16 %v3136
    %v3299 = vunpack.c.l.b16 %v3137
    %v3300 = vunpack.c.h.b16 %v3137
    %v3301 = vunpack.c.l.b16 %v3138
    %v3302 = vunpack.c.h.b16 %v3138
    %v3303 = vunpack.c.l.b16 %v3139
    %v3304 = vunpack.c.h.b16 %v3139
    %v3305 = vunpack.c.l.b16 %v3140
    %v3306 = vunpack.c.h.b16 %v3140
    %v3307 = vunpack.c.l.b16 %v3141
    %v3308 = vunpack.c.h.b16 %v3141
    %v3309 = vunpack.c.l.b16 %v3142
    %v3310 = vunpack.c.h.b16 %v3142
    %v3311 = vunpack.c.l.b16 %v3143
    %v3312 = vunpack.c.h.b16 %v3143
    %v3313 = vunpack.c.l.b16 %v3144
    %v3314 = vunpack.c.h.b16 %v3144
    %v3315 = vunpack.c.l.b16 %v3145
    %v3316 = vunpack.c.h.b16 %v3145
    %v3317 = vunpack.c.l.b16 %v3146
    %v3318 = vunpack.c.h.b16 %v3146
    %v3319 = vunpack.c.l.b16 %v3147
    %v3320 = vunpack.c.h.b16 %v3147
    %v3321 = vunpack.c.l.b16 %v3148
    %v3322 = vunpack.c.h.b16 %v3148
    %v3323 = vunpack.c.l.b16 %v3149
    %v3324 = vunpack.c.h.b16 %v3149
    %v3325 = vunpack.c.l.b16 %v3150
    %v3326 = vunpack.c.h.b16 %v3150
    %v3327 = vunpack.c.l.b16 %v3151
    %v3328 = vunpack.c.h.b16 %v3151
    %v3329 = vunpack.c.l.b16 %v3152
    %v3330 = vunpack.c.h.b16 %v3152
    %v3331 = vunpack.c.l.b16 %v3153
    %v3332 = vunpack.c.h.b16 %v3153
    %v3333 = vunpack.c.l.b16 %v3154
    %v3334 = vunpack.c.h.b16 %v3154
    %v3335 = vunpack.c.l.b16 %v3155
    %v3336 = vunpack.c.h.b16 %v3155
    %v3337 = vunpack.c.l.b16 %v3156
    %v3338 = vunpack.c.h.b16 %v3156
    %v3339 = vunpack.c.l.b16 %v3157
    %v3340 = vunpack.c.h.b16 %v3157
    %v3341 = vunpack.c.l.b16 %v3158
    %v3342 = vunpack.c.h.b16 %v3158
    %v3343 = vunpack.c.l.b16 %v3159
    %v3344 = vunpack.c.h.b16 %v3159
    %v3345 = vunpack.c.l.b16 %v3160
    %v3346 = vunpack.c.h.b16 %v3160
    %v3347 = vunpack.c.l.b16 %v3161
    %v3348 = vunpack.c.h.b16 %v3161
    %v3349 = vunpack.c.l.b16 %v3162
    %v3350 = vunpack.c.h.b16 %v3162
    %v3351 = vunpack.c.l.b16 %v3163
    %v3352 = vunpack.c.h.b16 %v3163
    %v3353 = vunpack.c.l.b16 %v3164
    %v3354 = vunpack.c.h.b16 %v3164
    %v3355 = vunpack.c.l.b16 %v3165
    %v3356 = vunpack.c.h.b16 %v3165
    %v3357 = vunpack.c.l.b16 %v3166
    %v3358 = vunpack.c.h.b16 %v3166
    %v3359 = vunpack.c.l.b16 %v3167
    %v3360 = vunpack.c.h.b16 %v3167
    %v3361 = vunpack.c.l.b16 %v3168
    %v3362 = vunpack.c.h.b16 %v3168
    %v3363 = vunpack.c.l.b16 %v3169
    %v3364 = vunpack.c.h.b16 %v3169
    %v3365 = vunpack.c.l.b16 %v3170
    %v3366 = vunpack.c.h.b16 %v3170
    %v3367 = vunpack.c.l.b16 %v3171
    %v3368 = vunpack.c.h.b16 %v3171
    %v3369 = vunpack.c.l.b16 %v3172
    %v3370 = vunpack.c.h.b16 %v3172
    %v3371 = vpack.c.b16 %v3245, %v3243
    %v3372 = vpack.c.b16 %v3246, %v3244
    %v3373 = vpack.c.b16 %v3249, %v3247
    %v3374 = vpack.c.b16 %v3250, %v3248
    %v3375 = vpack.c.b16 %v3253, %v3251
    %v3376 = vpack.c.b16 %v3254, %v3252
    %v3377 = vpack.c.b16 %v3257, %v3255
    %v3378 = vpack.c.b16 %v3258, %v3256
    %v3379 = vpack.c.b16 %v3261, %v3259
    %v3380 = vpack.c.b16 %v3262, %v3260
    %v3381 = vpack.c.b16 %v3265, %v3263
    %v3382 = vpack.c.b16 %v3266, %v3264
    %v3383 = vpack.c.b16 %v3269, %v3267
    %v3384 = vpack.c.b16 %v3270, %v3268
    %v3385 = vpack.c.b16 %v3273, %v3271
    %v3386 = vpack.c.b16 %v3274, %v3272
    %v3387 = vpack.c.b16 %v3277, %v3275
    %v3388 = vpack.c.b16 %v3278, %v3276
    %v3389 = vpack.c.b16 %v3281, %v3279
    %v3390 = vpack.c.b16 %v3282, %v3280
    %v3391 = vpack.c.b16 %v3285, %v3283
    %v3392 = vpack.c.b16 %v3286, %v3284
    %v3393 = vpack.c.b16 %v3289, %v3287
    %v3394 = vpack.c.b16 %v3290, %v3288
    %v3395 = vpack.c.b16 %v3293, %v3291
    %v3396 = vpack.c.b16 %v3294, %v3292
    %v3397 = vpack.c.b16 %v3297, %v3295
    %v3398 = vpack.c.b16 %v3298, %v3296
    %v3399 = vpack.c.b16 %v3301, %v3299
    %v3400 = vpack.c.b16 %v3302, %v3300
    %v3401 = vpack.c.b16 %v3305, %v3303
    %v3402 = vpack.c.b16 %v3306, %v3304
    %v3403 = vpack.c.b16 %v3309, %v3307
    %v3404 = vpack.c.b16 %v3310, %v3308
    %v3405 = vpack.c.b16 %v3313, %v3311
    %v3406 = vpack.c.b16 %v3314, %v3312
    %v3407 = vpack.c.b16 %v3317, %v3315
    %v3408 = vpack.c.b16 %v3318, %v3316
    %v3409 = vpack.c.b16 %v3321, %v3319
    %v3410 = vpack.c.b16 %v3322, %v3320
    %v3411 = vpack.c.b16 %v3325, %v3323
    %v3412 = vpack.c.b16 %v3326, %v3324
    %v3413 = vpack.c.b16 %v3329, %v3327
    %v3414 = vpack.c.b16 %v3330, %v3328
    %v3415 = vpack.c.b16 %v3333, %v3331
    %v3416 = vpack.c.b16 %v3334, %v3332
    %v3417 = vpack.c.b16 %v3337, %v3335
    %v3418 = vpack.c.b16 %v3338, %v3336
    %v3419 = vpack.c.b16 %v3341, %v3339
    %v3420 = vpack.c.b16 %v3342, %v3340
    %v3421 = vpack.c.b16 %v3345, %v3343
    %v3422 = vpack.c.b16 %v3346, %v3344
    %v3423 = vpack.c.b16 %v3349, %v3347
    %v3424 = vpack.c.b16 %v3350, %v3348
    %v3425 = vpack.c.b16 %v3353, %v3351
    %v3426 = vpack.c.b16 %v3354, %v3352
    %v3427 = vpack.c.b16 %v3357, %v3355
    %v3428 = vpack.c.b16 %v3358, %v3356
    %v3429 = vpack.c.b16 %v3361, %v3359
    %v3430 = vpack.c.b16 %v3362, %v3360
    %v3431 = vpack.c.b16 %v3365, %v3363
    %v3432 = vpack.c.b16 %v3366, %v3364
    %v3433 = vpack.c.b16 %v3369, %v3367
    %v3434 = vpack.c.b16 %v3370, %v3368
    %3499 = vmatpush.bf16.msra.mxu0 %v3385
    %3500 = vmatpush.bf16.msra.mxu0 %v3383
    %3501 = vmatpush.bf16.msra.mxu0 %v3381
    %3502 = vmatpush.bf16.msra.mxu0 %v3379
    %3503 = vmatpush.bf16.msra.mxu0 %v3377
    %3504 = vmatpush.bf16.msra.mxu0 %v3375
    %3505 = vmatpush.bf16.msra.mxu0 %v3373
    %3506 = vmatpush.bf16.msra.mxu0 %v3371
    %3507 = vmatmul.bf16.gmra.mxu0 %v3105
    %v3508 = vpop.f32.mrf.mxu0
    %v3509 = vadd.f32 %v3175, %v3508
    %v3510 = vpop.f32.mrf.mxu0
    %3511 = vdwg.mxu0
    %3512 = vmatpush.bf16.msra.mxu0 %v3401
    %3513 = vmatpush.bf16.msra.mxu0 %v3399
    %3514 = vmatpush.bf16.msra.mxu0 %v3397
    %3515 = vmatpush.bf16.msra.mxu0 %v3395
    %3516 = vmatpush.bf16.msra.mxu0 %v3393
    %3517 = vmatpush.bf16.msra.mxu0 %v3391
    %3518 = vmatpush.bf16.msra.mxu0 %v3389
    %3519 = vmatpush.bf16.msra.mxu0 %v3387
    %3520 = vmatmul.bf16.gmra.mxu0 %v3106
    %v3521 = vpop.f32.mrf.mxu0
    %v3522 = vadd.f32 %v3509, %v3521
    %v3523 = vpop.f32.mrf.mxu0
    %3524 = vdwg.mxu0
    %3525 = vmatpush.bf16.msra.mxu0 %v3417
    %3526 = vmatpush.bf16.msra.mxu0 %v3415
    %3527 = vmatpush.bf16.msra.mxu0 %v3413
    %3528 = vmatpush.bf16.msra.mxu0 %v3411
    %3529 = vmatpush.bf16.msra.mxu0 %v3409
    %3530 = vmatpush.bf16.msra.mxu0 %v3407
    %3531 = vmatpush.bf16.msra.mxu0 %v3405
    %3532 = vmatpush.bf16.msra.mxu0 %v3403
    %3533 = vmatmul.bf16.gmra.mxu0 %v3107
    %v3534 = vpop.f32.mrf.mxu0
    %v3535 = vadd.f32 %v3522, %v3534
    %v3536 = vpop.f32.mrf.mxu0
    %3537 = vdwg.mxu0
    %3538 = vmatpush.bf16.msra.mxu0 %v3433
    %3539 = vmatpush.bf16.msra.mxu0 %v3431
    %3540 = vmatpush.bf16.msra.mxu0 %v3429
    %3541 = vmatpush.bf16.msra.mxu0 %v3427
    %3542 = vmatpush.bf16.msra.mxu0 %v3425
    %3543 = vmatpush.bf16.msra.mxu0 %v3423
    %3544 = vmatpush.bf16.msra.mxu0 %v3421
    %3545 = vmatpush.bf16.msra.mxu0 %v3419
    %3546 = vmatmul.bf16.gmra.mxu0 %v3108
    %v3547 = vpop.f32.mrf.mxu0
    %v3548 = vadd.f32 %v3535, %v3547
    %v3549 = vpop.f32.mrf.mxu0
    %3550 = vdwg.mxu0
    %3551 = vmatpush.bf16.msra.mxu0 %v3386
    %3552 = vmatpush.bf16.msra.mxu0 %v3384
    %3553 = vmatpush.bf16.msra.mxu0 %v3382
    %3554 = vmatpush.bf16.msra.mxu0 %v3380
    %3555 = vmatpush.bf16.msra.mxu0 %v3378
    %3556 = vmatpush.bf16.msra.mxu0 %v3376
    %3557 = vmatpush.bf16.msra.mxu0 %v3374
    %3558 = vmatpush.bf16.msra.mxu0 %v3372
    %3559 = vmatmul.bf16.gmra.mxu0 %v3105
    %v3560 = vpop.f32.mrf.mxu0
    %v3561 = vadd.f32 %v3176, %v3560
    %v3562 = vpop.f32.mrf.mxu0
    %3563 = vdwg.mxu0
    %3564 = vmatpush.bf16.msra.mxu0 %v3402
    %3565 = vmatpush.bf16.msra.mxu0 %v3400
    %3566 = vmatpush.bf16.msra.mxu0 %v3398
    %3567 = vmatpush.bf16.msra.mxu0 %v3396
    %3568 = vmatpush.bf16.msra.mxu0 %v3394
    %3569 = vmatpush.bf16.msra.mxu0 %v3392
    %3570 = vmatpush.bf16.msra.mxu0 %v3390
    %3571 = vmatpush.bf16.msra.mxu0 %v3388
    %3572 = vmatmul.bf16.gmra.mxu0 %v3106
    %v3573 = vpop.f32.mrf.mxu0
    %v3574 = vadd.f32 %v3561, %v3573
    %v3575 = vpop.f32.mrf.mxu0
    %3576 = vdwg.mxu0
    %3577 = vmatpush.bf16.msra.mxu0 %v3418
    %3578 = vmatpush.bf16.msra.mxu0 %v3416
    %3579 = vmatpush.bf16.msra.mxu0 %v3414
    %3580 = vmatpush.bf16.msra.mxu0 %v3412
    %3581 = vmatpush.bf16.msra.mxu0 %v3410
    %3582 = vmatpush.bf16.msra.mxu0 %v3408
    %3583 = vmatpush.bf16.msra.mxu0 %v3406
    %3584 = vmatpush.bf16.msra.mxu0 %v3404
    %3585 = vmatmul.bf16.gmra.mxu0 %v3107
    %v3586 = vpop.f32.mrf.mxu0
    %v3587 = vadd.f32 %v3574, %v3586
    %v3588 = vpop.f32.mrf.mxu0
    %3589 = vdwg.mxu0
    %3590 = vmatpush.bf16.msra.mxu0 %v3434
    %3591 = vmatpush.bf16.msra.mxu0 %v3432
    %3592 = vmatpush.bf16.msra.mxu0 %v3430
    %3593 = vmatpush.bf16.msra.mxu0 %v3428
    %3594 = vmatpush.bf16.msra.mxu0 %v3426
    %3595 = vmatpush.bf16.msra.mxu0 %v3424
    %3596 = vmatpush.bf16.msra.mxu0 %v3422
    %3597 = vmatpush.bf16.msra.mxu0 %v3420
    %3598 = vmatmul.bf16.gmra.mxu0 %v3108
    %v3599 = vpop.f32.mrf.mxu0
    %v3600 = vadd.f32 %v3587, %v3599
    %v3601 = vpop.f32.mrf.mxu0
    %3602 = vdwg.mxu0
    %v3603 = vmul.f32 %v3600, 0.5
    %v3604 = vmul.f32 %v3603, 1.442695
    %v3605 = vpow.pop %v3604
    %v3606 = vmul.f32 %v128, %v3605
    %v3607 = vadd.f32 %v3548, %v3606
    %v3608 = vpack.c.bf16 %v3607, %v3607
    %v3609 = vld [vmem:[#allocation8] sm:$0xff]
    %v3610 = vld [vmem:[#allocation8 + $0x8] sm:$0xff]
    %v3611 = vld [vmem:[#allocation8 + $0x10] sm:$0xff]
    %v3612 = vld [vmem:[#allocation8 + $0x18] sm:$0xff]
    %v3613 = vld [vmem:[#allocation8 + $0x20] sm:$0xff]
    %v3614 = vld [vmem:[#allocation8 + $0x28] sm:$0xff]
    %v3615 = vld [vmem:[#allocation8 + $0x30] sm:$0xff]
    %v3616 = vld [vmem:[#allocation8 + $0x38] sm:$0xff]
    %v3617 = vld [vmem:[#allocation8 + $0x40] sm:$0xff]
    %v3618 = vld [vmem:[#allocation8 + $0x48] sm:$0xff]
    %v3619 = vld [vmem:[#allocation8 + $0x50] sm:$0xff]
    %v3620 = vld [vmem:[#allocation8 + $0x58] sm:$0xff]
    %v3621 = vld [vmem:[#allocation8 + $0x60] sm:$0xff]
    %v3622 = vld [vmem:[#allocation8 + $0x68] sm:$0xff]
    %v3623 = vld [vmem:[#allocation8 + $0x70] sm:$0xff]
    %v3624 = vld [vmem:[#allocation8 + $0x78] sm:$0xff]
    %v3625 = vld [vmem:[#allocation8 + $0x80] sm:$0xff]
    %v3626 = vld [vmem:[#allocation8 + $0x88] sm:$0xff]
    %v3627 = vld [vmem:[#allocation8 + $0x90] sm:$0xff]
    %v3628 = vld [vmem:[#allocation8 + $0x98] sm:$0xff]
    %v3629 = vld [vmem:[#allocation8 + $0xa0] sm:$0xff]
    %v3630 = vld [vmem:[#allocation8 + $0xa8] sm:$0xff]
    %v3631 = vld [vmem:[#allocation8 + $0xb0] sm:$0xff]
    %v3632 = vld [vmem:[#allocation8 + $0xb8] sm:$0xff]
    %v3633 = vld [vmem:[#allocation8 + $0xc0] sm:$0xff]
    %v3634 = vld [vmem:[#allocation8 + $0xc8] sm:$0xff]
    %v3635 = vld [vmem:[#allocation8 + $0xd0] sm:$0xff]
    %v3636 = vld [vmem:[#allocation8 + $0xd8] sm:$0xff]
    %v3637 = vld [vmem:[#allocation8 + $0xe0] sm:$0xff]
    %v3638 = vld [vmem:[#allocation8 + $0xe8] sm:$0xff]
    %v3639 = vld [vmem:[#allocation8 + $0xf0] sm:$0xff]
    %v3640 = vld [vmem:[#allocation8 + $0xf8] sm:$0xff]
    %v3641 = vld [vmem:[%s9] sm:$0xf]
    %v3643 = vperm.slane %v3641, 0
    %v3644 = vperm.slane %v3641, 1
    %v3645 = vperm.slane %v3641, 2
    %v3646 = vperm.slane %v3641, 3
    %v3683 = vunpack.c.l.b16 %v3609
    %v3684 = vunpack.c.h.b16 %v3609
    %v3685 = vunpack.c.l.b16 %v3610
    %v3686 = vunpack.c.h.b16 %v3610
    %v3687 = vunpack.c.l.b16 %v3611
    %v3688 = vunpack.c.h.b16 %v3611
    %v3689 = vunpack.c.l.b16 %v3612
    %v3690 = vunpack.c.h.b16 %v3612
    %v3691 = vunpack.c.l.b16 %v3613
    %v3692 = vunpack.c.h.b16 %v3613
    %v3693 = vunpack.c.l.b16 %v3614
    %v3694 = vunpack.c.h.b16 %v3614
    %v3695 = vunpack.c.l.b16 %v3615
    %v3696 = vunpack.c.h.b16 %v3615
    %v3697 = vunpack.c.l.b16 %v3616
    %v3698 = vunpack.c.h.b16 %v3616
    %v3699 = vunpack.c.l.b16 %v3617
    %v3700 = vunpack.c.h.b16 %v3617
    %v3701 = vunpack.c.l.b16 %v3618
    %v3702 = vunpack.c.h.b16 %v3618
    %v3703 = vunpack.c.l.b16 %v3619
    %v3704 = vunpack.c.h.b16 %v3619
    %v3705 = vunpack.c.l.b16 %v3620
    %v3706 = vunpack.c.h.b16 %v3620
    %v3707 = vunpack.c.l.b16 %v3621
    %v3708 = vunpack.c.h.b16 %v3621
    %v3709 = vunpack.c.l.b16 %v3622
    %v3710 = vunpack.c.h.b16 %v3622
    %v3711 = vunpack.c.l.b16 %v3623
    %v3712 = vunpack.c.h.b16 %v3623
    %v3713 = vunpack.c.l.b16 %v3624
    %v3714 = vunpack.c.h.b16 %v3624
    %v3715 = vunpack.c.l.b16 %v3625
    %v3716 = vunpack.c.h.b16 %v3625
    %v3717 = vunpack.c.l.b16 %v3626
    %v3718 = vunpack.c.h.b16 %v3626
    %v3719 = vunpack.c.l.b16 %v3627
    %v3720 = vunpack.c.h.b16 %v3627
    %v3721 = vunpack.c.l.b16 %v3628
    %v3722 = vunpack.c.h.b16 %v3628
    %v3723 = vunpack.c.l.b16 %v3629
    %v3724 = vunpack.c.h.b16 %v3629
    %v3725 = vunpack.c.l.b16 %v3630
    %v3726 = vunpack.c.h.b16 %v3630
    %v3727 = vunpack.c.l.b16 %v3631
    %v3728 = vunpack.c.h.b16 %v3631
    %v3729 = vunpack.c.l.b16 %v3632
    %v3730 = vunpack.c.h.b16 %v3632
    %v3731 = vunpack.c.l.b16 %v3633
    %v3732 = vunpack.c.h.b16 %v3633
    %v3733 = vunpack.c.l.b16 %v3634
    %v3734 = vunpack.c.h.b16 %v3634
    %v3735 = vunpack.c.l.b16 %v3635
    %v3736 = vunpack.c.h.b16 %v3635
    %v3737 = vunpack.c.l.b16 %v3636
    %v3738 = vunpack.c.h.b16 %v3636
    %v3739 = vunpack.c.l.b16 %v3637
    %v3740 = vunpack.c.h.b16 %v3637
    %v3741 = vunpack.c.l.b16 %v3638
    %v3742 = vunpack.c.h.b16 %v3638
    %v3743 = vunpack.c.l.b16 %v3639
    %v3744 = vunpack.c.h.b16 %v3639
    %v3745 = vunpack.c.l.b16 %v3640
    %v3746 = vunpack.c.h.b16 %v3640
    %v3747 = vpack.c.b16 %v3687, %v3683
    %v3748 = vpack.c.b16 %v3688, %v3684
    %v3749 = vpack.c.b16 %v3689, %v3685
    %v3750 = vpack.c.b16 %v3690, %v3686
    %v3751 = vpack.c.b16 %v3695, %v3691
    %v3752 = vpack.c.b16 %v3696, %v3692
    %v3753 = vpack.c.b16 %v3697, %v3693
    %v3754 = vpack.c.b16 %v3698, %v3694
    %v3755 = vpack.c.b16 %v3703, %v3699
    %v3756 = vpack.c.b16 %v3704, %v3700
    %v3757 = vpack.c.b16 %v3705, %v3701
    %v3758 = vpack.c.b16 %v3706, %v3702
    %v3759 = vpack.c.b16 %v3711, %v3707
    %v3760 = vpack.c.b16 %v3712, %v3708
    %v3761 = vpack.c.b16 %v3713, %v3709
    %v3762 = vpack.c.b16 %v3714, %v3710
    %v3763 = vpack.c.b16 %v3719, %v3715
    %v3764 = vpack.c.b16 %v3720, %v3716
    %v3765 = vpack.c.b16 %v3721, %v3717
    %v3766 = vpack.c.b16 %v3722, %v3718
    %v3767 = vpack.c.b16 %v3727, %v3723
    %v3768 = vpack.c.b16 %v3728, %v3724
    %v3769 = vpack.c.b16 %v3729, %v3725
    %v3770 = vpack.c.b16 %v3730, %v3726
    %v3771 = vpack.c.b16 %v3735, %v3731
    %v3772 = vpack.c.b16 %v3736, %v3732
    %v3773 = vpack.c.b16 %v3737, %v3733
    %v3774 = vpack.c.b16 %v3738, %v3734
    %v3775 = vpack.c.b16 %v3743, %v3739
    %v3776 = vpack.c.b16 %v3744, %v3740
    %v3777 = vpack.c.b16 %v3745, %v3741
    %v3778 = vpack.c.b16 %v3746, %v3742
    %3811 = vmatpush.bf16.msra.mxu0 %v3775
    %3812 = vmatpush.bf16.msra.mxu0 %v3771
    %3813 = vmatpush.bf16.msra.mxu0 %v3767
    %3814 = vmatpush.bf16.msra.mxu0 %v3763
    %3815 = vmatpush.bf16.msra.mxu0 %v3759
    %3816 = vmatpush.bf16.msra.mxu0 %v3755
    %3817 = vmatpush.bf16.msra.mxu0 %v3751
    %3818 = vmatpush.bf16.msra.mxu0 %v3747
    %3819 = vmatmul.bf16.gmra.mxu0 %v3608
    %v3820 = vpop.f32.mrf.mxu0
    %v3821 = vadd.f32 %v3643, %v3820
    %v3822 = vpop.f32.mrf.mxu0
    %3823 = vdwg.mxu0
    %3824 = vmatpush.bf16.msra.mxu0 %v3776
    %3825 = vmatpush.bf16.msra.mxu0 %v3772
    %3826 = vmatpush.bf16.msra.mxu0 %v3768
    %3827 = vmatpush.bf16.msra.mxu0 %v3764
    %3828 = vmatpush.bf16.msra.mxu0 %v3760
    %3829 = vmatpush.bf16.msra.mxu0 %v3756
    %3830 = vmatpush.bf16.msra.mxu0 %v3752
    %3831 = vmatpush.bf16.msra.mxu0 %v3748
    %3832 = vmatmul.bf16.gmra.mxu0 %v3608
    %v3833 = vpop.f32.mrf.mxu0
    %v3834 = vadd.f32 %v3644, %v3833
    %v3835 = vpop.f32.mrf.mxu0
    %3836 = vdwg.mxu0
    %3837 = vmatpush.bf16.msra.mxu0 %v3777
    %3838 = vmatpush.bf16.msra.mxu0 %v3773
    %3839 = vmatpush.bf16.msra.mxu0 %v3769
    %3840 = vmatpush.bf16.msra.mxu0 %v3765
    %3841 = vmatpush.bf16.msra.mxu0 %v3761
    %3842 = vmatpush.bf16.msra.mxu0 %v3757
    %3843 = vmatpush.bf16.msra.mxu0 %v3753
    %3844 = vmatpush.bf16.msra.mxu0 %v3749
    %3845 = vmatmul.bf16.gmra.mxu0 %v3608
    %v3846 = vpop.f32.mrf.mxu0
    %v3847 = vadd.f32 %v3645, %v3846
    %v3848 = vpop.f32.mrf.mxu0
    %3849 = vdwg.mxu0
    %3850 = vmatpush.bf16.msra.mxu0 %v3778
    %3851 = vmatpush.bf16.msra.mxu0 %v3774
    %3852 = vmatpush.bf16.msra.mxu0 %v3770
    %3853 = vmatpush.bf16.msra.mxu0 %v3766
    %3854 = vmatpush.bf16.msra.mxu0 %v3762
    %3855 = vmatpush.bf16.msra.mxu0 %v3758
    %3856 = vmatpush.bf16.msra.mxu0 %v3754
    %3857 = vmatpush.bf16.msra.mxu0 %v3750
    %3858 = vmatmul.bf16.gmra.mxu0 %v3608
    %v3859 = vpop.f32.mrf.mxu0
    %v3860 = vadd.f32 %v3646, %v3859
    %v3861 = vpop.f32.mrf.mxu0
    %3862 = vdwg.mxu0
    %v3863 = vmax.f32 %v3821, 0.0
    %v3864 = vmax.f32 %v3834, 0.0
    %v3865 = vmax.f32 %v3847, 0.0
    %v3866 = vmax.f32 %v3860, 0.0
    %v3867 = vpack.c.bf16 %v3863, %v3863
    %v3868 = vpack.c.bf16 %v3864, %v3864
    %v3869 = vpack.c.bf16 %v3865, %v3865
    %v3870 = vpack.c.bf16 %v3866, %v3866
    %v3871 = vld [vmem:[#allocation10] sm:$0xff]
    %v3872 = vld [vmem:[#allocation10 + $0x8] sm:$0xff]
    %v3873 = vld [vmem:[#allocation10 + $0x10] sm:$0xff]
    %v3874 = vld [vmem:[#allocation10 + $0x18] sm:$0xff]
    %v3875 = vld [vmem:[#allocation10 + $0x20] sm:$0xff]
    %v3876 = vld [vmem:[#allocation10 + $0x28] sm:$0xff]
    %v3877 = vld [vmem:[#allocation10 + $0x30] sm:$0xff]
    %v3878 = vld [vmem:[#allocation10 + $0x38] sm:$0xff]
    %v3879 = vld [vmem:[#allocation10 + $0x40] sm:$0xff]
    %v3880 = vld [vmem:[#allocation10 + $0x48] sm:$0xff]
    %v3881 = vld [vmem:[#allocation10 + $0x50] sm:$0xff]
    %v3882 = vld [vmem:[#allocation10 + $0x58] sm:$0xff]
    %v3883 = vld [vmem:[#allocation10 + $0x60] sm:$0xff]
    %v3884 = vld [vmem:[#allocation10 + $0x68] sm:$0xff]
    %v3885 = vld [vmem:[#allocation10 + $0x70] sm:$0xff]
    %v3886 = vld [vmem:[#allocation10 + $0x78] sm:$0xff]
    %v3887 = vld [vmem:[#allocation10 + $0x80] sm:$0xff]
    %v3888 = vld [vmem:[#allocation10 + $0x88] sm:$0xff]
    %v3889 = vld [vmem:[#allocation10 + $0x90] sm:$0xff]
    %v3890 = vld [vmem:[#allocation10 + $0x98] sm:$0xff]
    %v3891 = vld [vmem:[#allocation10 + $0xa0] sm:$0xff]
    %v3892 = vld [vmem:[#allocation10 + $0xa8] sm:$0xff]
    %v3893 = vld [vmem:[#allocation10 + $0xb0] sm:$0xff]
    %v3894 = vld [vmem:[#allocation10 + $0xb8] sm:$0xff]
    %v3895 = vld [vmem:[#allocation10 + $0xc0] sm:$0xff]
    %v3896 = vld [vmem:[#allocation10 + $0xc8] sm:$0xff]
    %v3897 = vld [vmem:[#allocation10 + $0xd0] sm:$0xff]
    %v3898 = vld [vmem:[#allocation10 + $0xd8] sm:$0xff]
    %v3899 = vld [vmem:[#allocation10 + $0xe0] sm:$0xff]
    %v3900 = vld [vmem:[#allocation10 + $0xe8] sm:$0xff]
    %v3901 = vld [vmem:[#allocation10 + $0xf0] sm:$0xff]
    %v3902 = vld [vmem:[#allocation10 + $0xf8] sm:$0xff]
    %v3903 = vld [vmem:[#allocation10 + $0x100] sm:$0xff]
    %v3904 = vld [vmem:[#allocation10 + $0x108] sm:$0xff]
    %v3905 = vld [vmem:[#allocation10 + $0x110] sm:$0xff]
    %v3906 = vld [vmem:[#allocation10 + $0x118] sm:$0xff]
    %v3907 = vld [vmem:[#allocation10 + $0x120] sm:$0xff]
    %v3908 = vld [vmem:[#allocation10 + $0x128] sm:$0xff]
    %v3909 = vld [vmem:[#allocation10 + $0x130] sm:$0xff]
    %v3910 = vld [vmem:[#allocation10 + $0x138] sm:$0xff]
    %v3911 = vld [vmem:[#allocation10 + $0x140] sm:$0xff]
    %v3912 = vld [vmem:[#allocation10 + $0x148] sm:$0xff]
    %v3913 = vld [vmem:[#allocation10 + $0x150] sm:$0xff]
    %v3914 = vld [vmem:[#allocation10 + $0x158] sm:$0xff]
    %v3915 = vld [vmem:[#allocation10 + $0x160] sm:$0xff]
    %v3916 = vld [vmem:[#allocation10 + $0x168] sm:$0xff]
    %v3917 = vld [vmem:[#allocation10 + $0x170] sm:$0xff]
    %v3918 = vld [vmem:[#allocation10 + $0x178] sm:$0xff]
    %v3919 = vld [vmem:[#allocation10 + $0x180] sm:$0xff]
    %v3920 = vld [vmem:[#allocation10 + $0x188] sm:$0xff]
    %v3921 = vld [vmem:[#allocation10 + $0x190] sm:$0xff]
    %v3922 = vld [vmem:[#allocation10 + $0x198] sm:$0xff]
    %v3923 = vld [vmem:[#allocation10 + $0x1a0] sm:$0xff]
    %v3924 = vld [vmem:[#allocation10 + $0x1a8] sm:$0xff]
    %v3925 = vld [vmem:[#allocation10 + $0x1b0] sm:$0xff]
    %v3926 = vld [vmem:[#allocation10 + $0x1b8] sm:$0xff]
    %v3927 = vld [vmem:[#allocation10 + $0x1c0] sm:$0xff]
    %v3928 = vld [vmem:[#allocation10 + $0x1c8] sm:$0xff]
    %v3929 = vld [vmem:[#allocation10 + $0x1d0] sm:$0xff]
    %v3930 = vld [vmem:[#allocation10 + $0x1d8] sm:$0xff]
    %v3931 = vld [vmem:[#allocation10 + $0x1e0] sm:$0xff]
    %v3932 = vld [vmem:[#allocation10 + $0x1e8] sm:$0xff]
    %v3933 = vld [vmem:[#allocation10 + $0x1f0] sm:$0xff]
    %v3934 = vld [vmem:[#allocation10 + $0x1f8] sm:$0xff]
    %v3935 = vld [vmem:[%s11] sm:$0x3]
    %v3937 = vperm.slane %v3935, 0
    %v3938 = vperm.slane %v3935, 1
    %v4005 = vunpack.c.l.b16 %v3871
    %v4006 = vunpack.c.h.b16 %v3871
    %v4007 = vunpack.c.l.b16 %v3872
    %v4008 = vunpack.c.h.b16 %v3872
    %v4009 = vunpack.c.l.b16 %v3873
    %v4010 = vunpack.c.h.b16 %v3873
    %v4011 = vunpack.c.l.b16 %v3874
    %v4012 = vunpack.c.h.b16 %v3874
    %v4013 = vunpack.c.l.b16 %v3875
    %v4014 = vunpack.c.h.b16 %v3875
    %v4015 = vunpack.c.l.b16 %v3876
    %v4016 = vunpack.c.h.b16 %v3876
    %v4017 = vunpack.c.l.b16 %v3877
    %v4018 = vunpack.c.h.b16 %v3877
    %v4019 = vunpack.c.l.b16 %v3878
    %v4020 = vunpack.c.h.b16 %v3878
    %v4021 = vunpack.c.l.b16 %v3879
    %v4022 = vunpack.c.h.b16 %v3879
    %v4023 = vunpack.c.l.b16 %v3880
    %v4024 = vunpack.c.h.b16 %v3880
    %v4025 = vunpack.c.l.b16 %v3881
    %v4026 = vunpack.c.h.b16 %v3881
    %v4027 = vunpack.c.l.b16 %v3882
    %v4028 = vunpack.c.h.b16 %v3882
    %v4029 = vunpack.c.l.b16 %v3883
    %v4030 = vunpack.c.h.b16 %v3883
    %v4031 = vunpack.c.l.b16 %v3884
    %v4032 = vunpack.c.h.b16 %v3884
    %v4033 = vunpack.c.l.b16 %v3885
    %v4034 = vunpack.c.h.b16 %v3885
    %v4035 = vunpack.c.l.b16 %v3886
    %v4036 = vunpack.c.h.b16 %v3886
    %v4037 = vunpack.c.l.b16 %v3887
    %v4038 = vunpack.c.h.b16 %v3887
    %v4039 = vunpack.c.l.b16 %v3888
    %v4040 = vunpack.c.h.b16 %v3888
    %v4041 = vunpack.c.l.b16 %v3889
    %v4042 = vunpack.c.h.b16 %v3889
    %v4043 = vunpack.c.l.b16 %v3890
    %v4044 = vunpack.c.h.b16 %v3890
    %v4045 = vunpack.c.l.b16 %v3891
    %v4046 = vunpack.c.h.b16 %v3891
    %v4047 = vunpack.c.l.b16 %v3892
    %v4048 = vunpack.c.h.b16 %v3892
    %v4049 = vunpack.c.l.b16 %v3893
    %v4050 = vunpack.c.h.b16 %v3893
    %v4051 = vunpack.c.l.b16 %v3894
    %v4052 = vunpack.c.h.b16 %v3894
    %v4053 = vunpack.c.l.b16 %v3895
    %v4054 = vunpack.c.h.b16 %v3895
    %v4055 = vunpack.c.l.b16 %v3896
    %v4056 = vunpack.c.h.b16 %v3896
    %v4057 = vunpack.c.l.b16 %v3897
    %v4058 = vunpack.c.h.b16 %v3897
    %v4059 = vunpack.c.l.b16 %v3898
    %v4060 = vunpack.c.h.b16 %v3898
    %v4061 = vunpack.c.l.b16 %v3899
    %v4062 = vunpack.c.h.b16 %v3899
    %v4063 = vunpack.c.l.b16 %v3900
    %v4064 = vunpack.c.h.b16 %v3900
    %v4065 = vunpack.c.l.b16 %v3901
    %v4066 = vunpack.c.h.b16 %v3901
    %v4067 = vunpack.c.l.b16 %v3902
    %v4068 = vunpack.c.h.b16 %v3902
    %v4069 = vunpack.c.l.b16 %v3903
    %v4070 = vunpack.c.h.b16 %v3903
    %v4071 = vunpack.c.l.b16 %v3904
    %v4072 = vunpack.c.h.b16 %v3904
    %v4073 = vunpack.c.l.b16 %v3905
    %v4074 = vunpack.c.h.b16 %v3905
    %v4075 = vunpack.c.l.b16 %v3906
    %v4076 = vunpack.c.h.b16 %v3906
    %v4077 = vunpack.c.l.b16 %v3907
    %v4078 = vunpack.c.h.b16 %v3907
    %v4079 = vunpack.c.l.b16 %v3908
    %v4080 = vunpack.c.h.b16 %v3908
    %v4081 = vunpack.c.l.b16 %v3909
    %v4082 = vunpack.c.h.b16 %v3909
    %v4083 = vunpack.c.l.b16 %v3910
    %v4084 = vunpack.c.h.b16 %v3910
    %v4085 = vunpack.c.l.b16 %v3911
    %v4086 = vunpack.c.h.b16 %v3911
    %v4087 = vunpack.c.l.b16 %v3912
    %v4088 = vunpack.c.h.b16 %v3912
    %v4089 = vunpack.c.l.b16 %v3913
    %v4090 = vunpack.c.h.b16 %v3913
    %v4091 = vunpack.c.l.b16 %v3914
    %v4092 = vunpack.c.h.b16 %v3914
    %v4093 = vunpack.c.l.b16 %v3915
    %v4094 = vunpack.c.h.b16 %v3915
    %v4095 = vunpack.c.l.b16 %v3916
    %v4096 = vunpack.c.h.b16 %v3916
    %v4097 = vunpack.c.l.b16 %v3917
    %v4098 = vunpack.c.h.b16 %v3917
    %v4099 = vunpack.c.l.b16 %v3918
    %v4100 = vunpack.c.h.b16 %v3918
    %v4101 = vunpack.c.l.b16 %v3919
    %v4102 = vunpack.c.h.b16 %v3919
    %v4103 = vunpack.c.l.b16 %v3920
    %v4104 = vunpack.c.h.b16 %v3920
    %v4105 = vunpack.c.l.b16 %v3921
    %v4106 = vunpack.c.h.b16 %v3921
    %v4107 = vunpack.c.l.b16 %v3922
    %v4108 = vunpack.c.h.b16 %v3922
    %v4109 = vunpack.c.l.b16 %v3923
    %v4110 = vunpack.c.h.b16 %v3923
    %v4111 = vunpack.c.l.b16 %v3924
    %v4112 = vunpack.c.h.b16 %v3924
    %v4113 = vunpack.c.l.b16 %v3925
    %v4114 = vunpack.c.h.b16 %v3925
    %v4115 = vunpack.c.l.b16 %v3926
    %v4116 = vunpack.c.h.b16 %v3926
    %v4117 = vunpack.c.l.b16 %v3927
    %v4118 = vunpack.c.h.b16 %v3927
    %v4119 = vunpack.c.l.b16 %v3928
    %v4120 = vunpack.c.h.b16 %v3928
    %v4121 = vunpack.c.l.b16 %v3929
    %v4122 = vunpack.c.h.b16 %v3929
    %v4123 = vunpack.c.l.b16 %v3930
    %v4124 = vunpack.c.h.b16 %v3930
    %v4125 = vunpack.c.l.b16 %v3931
    %v4126 = vunpack.c.h.b16 %v3931
    %v4127 = vunpack.c.l.b16 %v3932
    %v4128 = vunpack.c.h.b16 %v3932
    %v4129 = vunpack.c.l.b16 %v3933
    %v4130 = vunpack.c.h.b16 %v3933
    %v4131 = vunpack.c.l.b16 %v3934
    %v4132 = vunpack.c.h.b16 %v3934
    %v4133 = vpack.c.b16 %v4007, %v4005
    %v4134 = vpack.c.b16 %v4008, %v4006
    %v4135 = vpack.c.b16 %v4011, %v4009
    %v4136 = vpack.c.b16 %v4012, %v4010
    %v4137 = vpack.c.b16 %v4015, %v4013
    %v4138 = vpack.c.b16 %v4016, %v4014
    %v4139 = vpack.c.b16 %v4019, %v4017
    %v4140 = vpack.c.b16 %v4020, %v4018
    %v4141 = vpack.c.b16 %v4023, %v4021
    %v4142 = vpack.c.b16 %v4024, %v4022
    %v4143 = vpack.c.b16 %v4027, %v4025
    %v4144 = vpack.c.b16 %v4028, %v4026
    %v4145 = vpack.c.b16 %v4031, %v4029
    %v4146 = vpack.c.b16 %v4032, %v4030
    %v4147 = vpack.c.b16 %v4035, %v4033
    %v4148 = vpack.c.b16 %v4036, %v4034
    %v4149 = vpack.c.b16 %v4039, %v4037
    %v4150 = vpack.c.b16 %v4040, %v4038
    %v4151 = vpack.c.b16 %v4043, %v4041
    %v4152 = vpack.c.b16 %v4044, %v4042
    %v4153 = vpack.c.b16 %v4047, %v4045
    %v4154 = vpack.c.b16 %v4048, %v4046
    %v4155 = vpack.c.b16 %v4051, %v4049
    %v4156 = vpack.c.b16 %v4052, %v4050
    %v4157 = vpack.c.b16 %v4055, %v4053
    %v4158 = vpack.c.b16 %v4056, %v4054
    %v4159 = vpack.c.b16 %v4059, %v4057
    %v4160 = vpack.c.b16 %v4060, %v4058
    %v4161 = vpack.c.b16 %v4063, %v4061
    %v4162 = vpack.c.b16 %v4064, %v4062
    %v4163 = vpack.c.b16 %v4067, %v4065
    %v4164 = vpack.c.b16 %v4068, %v4066
    %v4165 = vpack.c.b16 %v4071, %v4069
    %v4166 = vpack.c.b16 %v4072, %v4070
    %v4167 = vpack.c.b16 %v4075, %v4073
    %v4168 = vpack.c.b16 %v4076, %v4074
    %v4169 = vpack.c.b16 %v4079, %v4077
    %v4170 = vpack.c.b16 %v4080, %v4078
    %v4171 = vpack.c.b16 %v4083, %v4081
    %v4172 = vpack.c.b16 %v4084, %v4082
    %v4173 = vpack.c.b16 %v4087, %v4085
    %v4174 = vpack.c.b16 %v4088, %v4086
    %v4175 = vpack.c.b16 %v4091, %v4089
    %v4176 = vpack.c.b16 %v4092, %v4090
    %v4177 = vpack.c.b16 %v4095, %v4093
    %v4178 = vpack.c.b16 %v4096, %v4094
    %v4179 = vpack.c.b16 %v4099, %v4097
    %v4180 = vpack.c.b16 %v4100, %v4098
    %v4181 = vpack.c.b16 %v4103, %v4101
    %v4182 = vpack.c.b16 %v4104, %v4102
    %v4183 = vpack.c.b16 %v4107, %v4105
    %v4184 = vpack.c.b16 %v4108, %v4106
    %v4185 = vpack.c.b16 %v4111, %v4109
    %v4186 = vpack.c.b16 %v4112, %v4110
    %v4187 = vpack.c.b16 %v4115, %v4113
    %v4188 = vpack.c.b16 %v4116, %v4114
    %v4189 = vpack.c.b16 %v4119, %v4117
    %v4190 = vpack.c.b16 %v4120, %v4118
    %v4191 = vpack.c.b16 %v4123, %v4121
    %v4192 = vpack.c.b16 %v4124, %v4122
    %v4193 = vpack.c.b16 %v4127, %v4125
    %v4194 = vpack.c.b16 %v4128, %v4126
    %v4195 = vpack.c.b16 %v4131, %v4129
    %v4196 = vpack.c.b16 %v4132, %v4130
    %4261 = vmatpush.bf16.msra.mxu0 %v4147
    %4262 = vmatpush.bf16.msra.mxu0 %v4145
    %4263 = vmatpush.bf16.msra.mxu0 %v4143
    %4264 = vmatpush.bf16.msra.mxu0 %v4141
    %4265 = vmatpush.bf16.msra.mxu0 %v4139
    %4266 = vmatpush.bf16.msra.mxu0 %v4137
    %4267 = vmatpush.bf16.msra.mxu0 %v4135
    %4268 = vmatpush.bf16.msra.mxu0 %v4133
    %4269 = vmatmul.bf16.gmra.mxu0 %v3867
    %v4270 = vpop.f32.mrf.mxu0
    %v4271 = vadd.f32 %v3937, %v4270
    %v4272 = vpop.f32.mrf.mxu0
    %4273 = vdwg.mxu0
    %4274 = vmatpush.bf16.msra.mxu0 %v4163
    %4275 = vmatpush.bf16.msra.mxu0 %v4161
    %4276 = vmatpush.bf16.msra.mxu0 %v4159
    %4277 = vmatpush.bf16.msra.mxu0 %v4157
    %4278 = vmatpush.bf16.msra.mxu0 %v4155
    %4279 = vmatpush.bf16.msra.mxu0 %v4153
    %4280 = vmatpush.bf16.msra.mxu0 %v4151
    %4281 = vmatpush.bf16.msra.mxu0 %v4149
    %4282 = vmatmul.bf16.gmra.mxu0 %v3868
    %v4283 = vpop.f32.mrf.mxu0
    %v4284 = vadd.f32 %v4271, %v4283
    %v4285 = vpop.f32.mrf.mxu0
    %4286 = vdwg.mxu0
    %4287 = vmatpush.bf16.msra.mxu0 %v4179
    %4288 = vmatpush.bf16.msra.mxu0 %v4177
    %4289 = vmatpush.bf16.msra.mxu0 %v4175
    %4290 = vmatpush.bf16.msra.mxu0 %v4173
    %4291 = vmatpush.bf16.msra.mxu0 %v4171
    %4292 = vmatpush.bf16.msra.mxu0 %v4169
    %4293 = vmatpush.bf16.msra.mxu0 %v4167
    %4294 = vmatpush.bf16.msra.mxu0 %v4165
    %4295 = vmatmul.bf16.gmra.mxu0 %v3869
    %v4296 = vpop.f32.mrf.mxu0
    %v4297 = vadd.f32 %v4284, %v4296
    %v4298 = vpop.f32.mrf.mxu0
    %4299 = vdwg.mxu0
    %4300 = vmatpush.bf16.msra.mxu0 %v4195
    %4301 = vmatpush.bf16.msra.mxu0 %v4193
    %4302 = vmatpush.bf16.msra.mxu0 %v4191
    %4303 = vmatpush.bf16.msra.mxu0 %v4189
    %4304 = vmatpush.bf16.msra.mxu0 %v4187
    %4305 = vmatpush.bf16.msra.mxu0 %v4185
    %4306 = vmatpush.bf16.msra.mxu0 %v4183
    %4307 = vmatpush.bf16.msra.mxu0 %v4181
    %4308 = vmatmul.bf16.gmra.mxu0 %v3870
    %v4309 = vpop.f32.mrf.mxu0
    %v4310 = vadd.f32 %v4297, %v4309
    %v4311 = vpop.f32.mrf.mxu0
    %4312 = vdwg.mxu0
    %4313 = vmatpush.bf16.msra.mxu0 %v4148
    %4314 = vmatpush.bf16.msra.mxu0 %v4146
    %4315 = vmatpush.bf16.msra.mxu0 %v4144
    %4316 = vmatpush.bf16.msra.mxu0 %v4142
    %4317 = vmatpush.bf16.msra.mxu0 %v4140
    %4318 = vmatpush.bf16.msra.mxu0 %v4138
    %4319 = vmatpush.bf16.msra.mxu0 %v4136
    %4320 = vmatpush.bf16.msra.mxu0 %v4134
    %4321 = vmatmul.bf16.gmra.mxu0 %v3867
    %v4322 = vpop.f32.mrf.mxu0
    %v4323 = vadd.f32 %v3938, %v4322
    %v4324 = vpop.f32.mrf.mxu0
    %4325 = vdwg.mxu0
    %4326 = vmatpush.bf16.msra.mxu0 %v4164
    %4327 = vmatpush.bf16.msra.mxu0 %v4162
    %4328 = vmatpush.bf16.msra.mxu0 %v4160
    %4329 = vmatpush.bf16.msra.mxu0 %v4158
    %4330 = vmatpush.bf16.msra.mxu0 %v4156
    %4331 = vmatpush.bf16.msra.mxu0 %v4154
    %4332 = vmatpush.bf16.msra.mxu0 %v4152
    %4333 = vmatpush.bf16.msra.mxu0 %v4150
    %4334 = vmatmul.bf16.gmra.mxu0 %v3868
    %v4335 = vpop.f32.mrf.mxu0
    %v4336 = vadd.f32 %v4323, %v4335
    %v4337 = vpop.f32.mrf.mxu0
    %4338 = vdwg.mxu0
    %4339 = vmatpush.bf16.msra.mxu0 %v4180
    %4340 = vmatpush.bf16.msra.mxu0 %v4178
    %4341 = vmatpush.bf16.msra.mxu0 %v4176
    %4342 = vmatpush.bf16.msra.mxu0 %v4174
    %4343 = vmatpush.bf16.msra.mxu0 %v4172
    %4344 = vmatpush.bf16.msra.mxu0 %v4170
    %4345 = vmatpush.bf16.msra.mxu0 %v4168
    %4346 = vmatpush.bf16.msra.mxu0 %v4166
    %4347 = vmatmul.bf16.gmra.mxu0 %v3869
    %v4348 = vpop.f32.mrf.mxu0
    %v4349 = vadd.f32 %v4336, %v4348
    %v4350 = vpop.f32.mrf.mxu0
    %4351 = vdwg.mxu0
    %4352 = vmatpush.bf16.msra.mxu0 %v4196
    %4353 = vmatpush.bf16.msra.mxu0 %v4194
    %4354 = vmatpush.bf16.msra.mxu0 %v4192
    %4355 = vmatpush.bf16.msra.mxu0 %v4190
    %4356 = vmatpush.bf16.msra.mxu0 %v4188
    %4357 = vmatpush.bf16.msra.mxu0 %v4186
    %4358 = vmatpush.bf16.msra.mxu0 %v4184
    %4359 = vmatpush.bf16.msra.mxu0 %v4182
    %4360 = vmatmul.bf16.gmra.mxu0 %v3870
    %v4361 = vpop.f32.mrf.mxu0
    %v4362 = vadd.f32 %v4349, %v4361
    %v4363 = vpop.f32.mrf.mxu0
    %4364 = vdwg.mxu0
    %4365 = vst [vmem:[#allocation11] sm:$0xff] %v4310
    %4366 = vst [vmem:[#allocation11 + $0x8] sm:$0xff] %v4362
    %4367 = vst [vmem:[#allocation12] sm:$0xff] %v3548
    %4368 = vst [vmem:[#allocation14] sm:$0xff] %v3600
    // Predicated region
    $region70: #{vae_apply.1} parent=1 // pred_check
      _
    $region71: #{vae_apply.1} parent=1 // pred_check_branch
      %4370 = sbr.rel (0) target = $region73
    $region72: #{vae_apply.1} parent=1 // pred_region
      %4372 = vsyncadd [#allocation4], 0
      %s4374 = sshll.u32 [#allocation11], 4
      %s4375 = int_to_ptr.vmem [resolvable:$true] %s4374
      %s4376 = sshll.u32 %s12, 4
      %s4377 = int_to_ptr.hbm [resolvable:$true] %s4376
      %4379 = dma.vmem_to_hbm [thread:$0]  %s4375, 256, %s4377, [#allocation4]
    $region73: #{vae_apply.1} parent=1 // pred_fallthru
      _
    // Predicated region
    $region74: #{vae_apply.1} parent=1 // pred_check
      _
    $region75: #{vae_apply.1} parent=1 // pred_check_branch
      %4381 = sbr.rel (0) target = $region77
    $region76: #{vae_apply.1} parent=1 // pred_region
      %4383 = vsyncadd [#allocation13], 0
      %s4385 = sshll.u32 [#allocation12], 4
      %s4386 = int_to_ptr.vmem [resolvable:$true] %s4385
      %s4387 = sshll.u32 %s13, 4
      %s4388 = int_to_ptr.hbm [resolvable:$true] %s4387
      %4390 = dma.vmem_to_hbm [thread:$0]  %s4386, 128, %s4388, [#allocation13]
    $region77: #{vae_apply.1} parent=1 // pred_fallthru
      _
    // Predicated region
    $region78: #{vae_apply.1} parent=1 // pred_check
      _
    $region79: #{vae_apply.1} parent=1 // pred_check_branch
      %4392 = sbr.rel (0) target = $region81
    $region80: #{vae_apply.1} parent=1 // pred_region
      %4394 = vsyncadd [#allocation13], 0
      %s4396 = sshll.u32 [#allocation14], 4
      %s4397 = int_to_ptr.vmem [resolvable:$true] %s4396
      %s4398 = sshll.u32 %s14, 4
      %s4399 = int_to_ptr.hbm [resolvable:$true] %s4398
      %4401 = dma.vmem_to_hbm [thread:$0]  %s4397, 128, %s4399, [#allocation13]
    $region81: #{vae_apply.1} parent=1 // pred_fallthru
      _
    // Predicated region
    $region82: #{vae_apply.1} parent=1 // pred_check
      _
    $region83: #{vae_apply.1} parent=1 // pred_check_branch
      %4403 = sbr.rel (0) target = $region85
    $region84: #{vae_apply.1} parent=1 // pred_region
      %4405 = dma.done [#allocation4], 256
    $region85: #{vae_apply.1} parent=1 // pred_fallthru
      _
    // Predicated region
    $region86: #{vae_apply.1} parent=1 // pred_check
      _
    $region87: #{vae_apply.1} parent=1 // pred_check_branch
      %4407 = sbr.rel (0) target = $region89
    $region88: #{vae_apply.1} parent=1 // pred_region
      %4409 = dma.done [#allocation13], 128
    $region89: #{vae_apply.1} parent=1 // pred_fallthru
      _
    // Predicated region
    $region90: #{vae_apply.1} parent=1 // pred_check
      _
    $region91: #{vae_apply.1} parent=1 // pred_check_branch
      %4411 = sbr.rel (0) target = $region93
    $region92: #{vae_apply.1} parent=1 // pred_region
      %4413 = dma.done [#allocation13], 128
    $region93: #{vae_apply.1} parent=1 // pred_fallthru
      _
    %4414 = vsyncpa [#allocation3], 1
    %4415 = vsyncpa [#allocation6], 1
    %4416 = vsyncpa [#allocation9], 1
    %4417 = vsyncpa [#allocation4], 1
    %4418 = vsyncpa [#allocation13], 1

</llo_original>
